<compile_context>
chip_gen: v7x
topology: tpu7x:2x2x1
jax: 0.10.0
libtpu: 0.0.40
codegen_flags: <defaults>
</compile_context>

<pallas_src>
import functools

import jax
import jax.numpy as jnp
from jax.experimental import pallas as pl
from jax.experimental.pallas import tpu as pltpu


# ----------------------------------------------------------------------------
# Fused kernel: 3-layer LSTM over the whole sequence + final Linear, one call.
# ----------------------------------------------------------------------------
def fused_rnn_kernel(*refs, T, L):
    """Ref layout (all VMEM, whole arrays):
       refs[0]                  : x_flat    (T*B, F)   time-major, row = t*B + b
       refs[1], refs[2]         : w_ih0_t (F, 4H), b0 (1, 4H)        (layer 0)
       refs[3+2l], refs[4+2l]   : w_cat_l (H, 8H), b_{l+1} (1, 4H)   l = 0..L-2
       refs[2L+1]               : w_hh_last (H, 4H)                  (top layer)
       refs[2L+2], refs[2L+3]   : w_cls_t (H, C), b_cls (1, C)
       refs[2L+4]               : gate_scale (1, 4H) = [.5,.5,1,.5] per gate block
       refs[2L+5]               : out (B, C)           -- output
       refs[2L+6]               : gx_sc (T*B, 4H)      -- scratch, reused in place
    """
    x_ref = refs[0]
    w_ih0_ref, b0_ref = refs[1], refs[2]
    cat_refs = [(refs[3 + 2 * l], refs[4 + 2 * l]) for l in range(L - 1)]
    w_hh_last_ref = refs[2 * L + 1]
    w_cls_ref = refs[2 * L + 2]
    b_cls_ref = refs[2 * L + 3]
    scale_ref = refs[2 * L + 4]
    out_ref = refs[2 * L + 5]
    gx_sc = refs[2 * L + 6]

    TB = x_ref.shape[0]
    B = TB // T
    H = w_hh_last_ref.shape[0]          # w_hh_last is (H, 4H)
    G = 4 * H

    # Layer-0 input projection for ALL time steps: one big MXU pass (+ bias).
    gx_sc[...] = (jnp.dot(x_ref[...], w_ih0_ref[...],
                          preferred_element_type=jnp.float32) + b0_ref[...])

    # Per-gate pre-scale so a single tanh pass gives sigmoid(i,f,o) and tanh(g):
    #   sigmoid(x) = 0.5 * tanh(0.5 * x) + 0.5            (hoisted broadcast)
    scale = jnp.broadcast_to(scale_ref[...], (B, G))

    h = None
    for layer in range(L):
        is_last = layer == L - 1
        if not is_last:
            w_cat = cat_refs[layer][0][...]                            # (H, 8H)
            b_next = jnp.broadcast_to(cat_refs[layer][1][...], (B, G))
        else:
            w_hh = w_hh_last_ref[...]                                  # (H, 4H)

        h = jnp.zeros((B, H), jnp.float32)
        c = jnp.zeros((B, H), jnp.float32)
        hgate = jnp.zeros((B, G), jnp.float32)     # h_{-1} @ W_hh^T == 0

        # T is small & static -> full unroll.  (For T >~ 32 switch to
        # lax.fori_loop(..., unroll=4..8) indexing gx via pl.ds.)
        for t in range(T):
            row = t * B
            gates = gx_sc[row:row + B, :] + hgate                      # (B, 4H)
            tg = jnp.tanh(gates * scale)       # one 128-lane EUP pass
            sg = 0.5 * tg + 0.5                # = sigmoid of the i, f, o blocks
            i_g = sg[:, 0 * H:1 * H]
            f_g = sg[:, 1 * H:2 * H]
            g_g = tg[:, 2 * H:3 * H]
            o_g = sg[:, 3 * H:4 * H]
            c = f_g * c + i_g * g_g
            h = o_g * jnp.tanh(c)

            if not is_last:
                # One 256-lane MXU pass: this layer's next-step hidden gates AND
                # the next layer's x-gate projection at time t.
                big = jnp.dot(h, w_cat, preferred_element_type=jnp.float32)  # (B, 8H)
                hgate = big[:, :G]
                gx_sc[row:row + B, :] = big[:, G:] + b_next   # aligned (B,128) store
            elif t < T - 1:
                hgate = jnp.dot(h, w_hh, preferred_element_type=jnp.float32)

    # Classifier on hidden[-1] (final hidden state of the top layer).
    out_ref[...] = (jnp.dot(h, w_cls_ref[...],
                            preferred_element_type=jnp.float32) + b_cls_ref[...])


# ----------------------------------------------------------------------------
# Parameter init (deterministic, mimics torch uniform(-1/sqrt(H), 1/sqrt(H))).
# ----------------------------------------------------------------------------
def init_params(key, num_feature, num_classes, num_hidden, num_layers):
    k = 1.0 / jnp.sqrt(jnp.float32(num_hidden))
    params = {"lstm": []}
    for layer in range(num_layers):
        din = num_feature if layer == 0 else num_hidden
        key, k1, k2, k3, k4 = jax.random.split(key, 5)
        # PyTorch stores (4H, Din)/(4H, H); keep transposed for x @ W.
        w_ih_t = jax.random.uniform(k1, (din, 4 * num_hidden), jnp.float32, -k, k)
        w_hh_t = jax.random.uniform(k2, (num_hidden, 4 * num_hidden), jnp.float32, -k, k)
        b_ih = jax.random.uniform(k3, (4 * num_hidden,), jnp.float32, -k, k)
        b_hh = jax.random.uniform(k4, (4 * num_hidden,), jnp.float32, -k, k)
        b = (b_ih + b_hh).reshape(1, 4 * num_hidden)
        params["lstm"].append((w_ih_t, w_hh_t, b))
    key, k5, k6 = jax.random.split(key, 3)
    kc = 1.0 / jnp.sqrt(jnp.float32(num_hidden))
    params["w_cls_t"] = jax.random.uniform(
        k5, (num_hidden, num_classes), jnp.float32, -kc, kc)
    params["b_cls"] = jax.random.uniform(
        k6, (1, num_classes), jnp.float32, -kc, kc)
    return params


def _padded_f32_bytes(shape):
    """f32 bytes with TPU (8, 128) tile padding on the last two dims."""
    s = (1,) + tuple(shape) if len(shape) == 1 else tuple(shape)
    lead = 1
    for d in s[:-2]:
        lead *= int(d)
    sub = -(-int(s[-2]) // 8) * 8
    lane = -(-int(s[-1]) // 128) * 128
    return 4 * lead * sub * lane


# ----------------------------------------------------------------------------
# Full forward pass (= RNNnet.forward), one pallas_call.
# ----------------------------------------------------------------------------
def rnnnet_forward(params, x):
    # x: (B, T, F) batch_first, as in PyTorch.
    B, T, F = x.shape
    lstm = params["lstm"]
    L = len(lstm)
    H = lstm[0][1].shape[0]
    C = params["w_cls_t"].shape[1]
    G = 4 * H

    # Pad batch to a multiple of 8 sublanes (aligned f32 vreg tiles).
    B_pad = max(8, ((B + 7) // 8) * 8)
    x_tm = jnp.transpose(x, (1, 0, 2))                      # (T, B, F) time-major
    if B_pad != B:
        x_tm = jnp.pad(x_tm, ((0, 0), (0, B_pad - B), (0, 0)))
    x_flat = x_tm.reshape(T * B_pad, F)                     # row = t*B_pad + b

    # Fused recurrent RHS: for layers l < L-1, [W_hh_l^T | W_ih_{l+1}^T] (H, 8H).
    flat_args = [x_flat, lstm[0][0], lstm[0][2]]
    for l in range(L - 1):
        w_cat = jnp.concatenate([lstm[l][1], lstm[l + 1][0]], axis=1)
        flat_args += [w_cat, lstm[l + 1][2]]
    flat_args += [lstm[L - 1][1], params["w_cls_t"], params["b_cls"]]

    # Per-gate-block pre-scale: 0.5 for i/f/o (sigmoid-via-tanh), 1.0 for g.
    gate_scale = jnp.concatenate([
        jnp.full((1, H), 0.5, jnp.float32),
        jnp.full((1, H), 0.5, jnp.float32),
        jnp.full((1, H), 1.0, jnp.float32),
        jnp.full((1, H), 0.5, jnp.float32)], axis=1)
    flat_args.append(gate_scale)

    out_shape = jax.ShapeDtypeStruct((B_pad, C), jnp.float32)
    scratch = [pltpu.VMEM((T * B_pad, G), jnp.float32)]     # gx, reused across layers

    # Explicit VMEM budget (everything resident; no grid -> no double buffering).
    footprint = sum(_padded_f32_bytes(a.shape) for a in flat_args)
    footprint += _padded_f32_bytes(out_shape.shape) + _padded_f32_bytes((T * B_pad, G))
    vmem_limit = min(max(4 * footprint, 4 * 1024 * 1024), 32 * 1024 * 1024)

    vmem = pl.BlockSpec(memory_space=pltpu.MemorySpace.VMEM)
    out = pl.pallas_call(
        functools.partial(fused_rnn_kernel, T=T, L=L),
        out_shape=out_shape,
        in_specs=[vmem] * len(flat_args),
        out_specs=vmem,
        scratch_shapes=scratch,
        compiler_params=pltpu.CompilerParams(vmem_limit_bytes=vmem_limit),
    )(*flat_args)
    # TODO(synk): for B_pad >= 16 add a batch grid axis with
    # dimension_semantics=("parallel",) to use the second TensorCore on v7x.
    return out[:B]


if __name__ == "__main__":
    B, T, F = 2, 8, 16          # batch, seq length, num_feature
    H, L, C = 32, 3, 8          # num_hidden, num_layers, num_classes

    key = jax.random.PRNGKey(0)
    key, pkey, xkey = jax.random.split(key, 3)
    params = init_params(pkey, num_feature=F, num_classes=C,
                         num_hidden=H, num_layers=L)
    x = jax.random.normal(xkey, (B, T, F), dtype=jnp.float32)

    out = rnnnet_forward(params, x)
    out = jax.block_until_ready(out)
    assert out.shape == (B, C) and out.dtype == jnp.float32
    print("KERNEL_OK")
</pallas_src>

<mosaic_0001>
module attributes {stable_mosaic.version = 11 : i64} {
  func.func @fused_rnn_kernel(%arg0: memref<64x16xf32, #tpu.memory_space<vmem>>, %arg1: memref<16x128xf32, #tpu.memory_space<vmem>>, %arg2: memref<1x128xf32, #tpu.memory_space<vmem>>, %arg3: memref<32x256xf32, #tpu.memory_space<vmem>>, %arg4: memref<1x128xf32, #tpu.memory_space<vmem>>, %arg5: memref<32x256xf32, #tpu.memory_space<vmem>>, %arg6: memref<1x128xf32, #tpu.memory_space<vmem>>, %arg7: memref<32x128xf32, #tpu.memory_space<vmem>>, %arg8: memref<32x8xf32, #tpu.memory_space<vmem>>, %arg9: memref<1x8xf32, #tpu.memory_space<vmem>>, %arg10: memref<1x128xf32, #tpu.memory_space<vmem>>, %arg11: memref<8x8xf32, #tpu.memory_space<vmem>>, %arg12: memref<64x128xf32, #tpu.memory_space<vmem>>) attributes {dimension_semantics = [], scalar_prefetch = 0 : i64, scratch_operands = 1 : i64, tpu.core_type = #tpu.core_type<tc>} {
    %c0 = arith.constant 0 : index
    %c0_0 = arith.constant 0 : index
    %0 = vector.load %arg0[%c0, %c0_0] : memref<64x16xf32, #tpu.memory_space<vmem>>, vector<64x16xf32>
    %c0_1 = arith.constant 0 : index
    %c0_2 = arith.constant 0 : index
    %1 = vector.load %arg1[%c0_1, %c0_2] : memref<16x128xf32, #tpu.memory_space<vmem>>, vector<16x128xf32>
    %cst = arith.constant dense<0.000000e+00> : vector<64x128xf32>
    %2 = tpu.matmul %0, %1, %cst {dimension_numbers = #tpu.dot_dimension_numbers<[1], [0], [0], [1], [0, 0, 1, 1], [], []>} : vector<64x16xf32>, vector<16x128xf32>, vector<64x128xf32> -> vector<64x128xf32>
    %c0_3 = arith.constant 0 : index
    %c0_4 = arith.constant 0 : index
    %3 = vector.load %arg2[%c0_3, %c0_4] : memref<1x128xf32, #tpu.memory_space<vmem>>, vector<1x128xf32>
    %4 = vector.broadcast %3 : vector<1x128xf32> to vector<64x128xf32>
    %5 = arith.addf %2, %4 : vector<64x128xf32>
    %c0_5 = arith.constant 0 : index
    %c0_6 = arith.constant 0 : index
    %6 = vector.load %arg12[%c0_5, %c0_6] : memref<64x128xf32, #tpu.memory_space<vmem>>, vector<64x128xf32>
    tpu.vector_store %arg12[%c0_5, %c0_6], %5 {strides = array<i32>} : memref<64x128xf32, #tpu.memory_space<vmem>>, vector<64x128xf32>,
    %c0_7 = arith.constant 0 : index
    %c0_8 = arith.constant 0 : index
    %7 = vector.load %arg10[%c0_7, %c0_8] : memref<1x128xf32, #tpu.memory_space<vmem>>, vector<1x128xf32>
    %8 = vector.shape_cast %7 : vector<1x128xf32> to vector<1x128xf32>
    %9 = vector.broadcast %8 : vector<1x128xf32> to vector<8x128xf32>
    %c0_9 = arith.constant 0 : index
    %c0_10 = arith.constant 0 : index
    %10 = vector.load %arg3[%c0_9, %c0_10] : memref<32x256xf32, #tpu.memory_space<vmem>>, vector<32x256xf32>
    %c0_11 = arith.constant 0 : index
    %c0_12 = arith.constant 0 : index
    %11 = vector.load %arg4[%c0_11, %c0_12] : memref<1x128xf32, #tpu.memory_space<vmem>>, vector<1x128xf32>
    %12 = vector.shape_cast %11 : vector<1x128xf32> to vector<1x128xf32>
    %13 = vector.broadcast %12 : vector<1x128xf32> to vector<8x128xf32>
    %cst_13 = arith.constant 0.000000e+00 : f32
    %14 = vector.broadcast %cst_13 : f32 to vector<8x32xf32>
    %cst_14 = arith.constant 0.000000e+00 : f32
    %15 = vector.broadcast %cst_14 : f32 to vector<8x128xf32>
    %c0_15 = arith.constant 0 : index
    %c0_16 = arith.constant 0 : index
    %16 = vector.load %arg12[%c0_15, %c0_16] : memref<64x128xf32, #tpu.memory_space<vmem>>, vector<8x128xf32>
    %17 = arith.addf %16, %15 : vector<8x128xf32>
    %18 = arith.mulf %17, %9 : vector<8x128xf32>
    %19 = math.tanh %18 : vector<8x128xf32>
    %cst_17 = arith.constant 5.000000e-01 : f32
    %20 = vector.broadcast %cst_17 : f32 to vector<8x128xf32>
    %21 = arith.mulf %20, %19 : vector<8x128xf32>
    %cst_18 = arith.constant 5.000000e-01 : f32
    %22 = vector.broadcast %cst_18 : f32 to vector<8x128xf32>
    %23 = arith.addf %21, %22 : vector<8x128xf32>
    %24 = vector.extract_strided_slice %23 {offsets = [0, 0], sizes = [8, 32], strides = [1, 1]} : vector<8x128xf32> to vector<8x32xf32>
    %25 = vector.extract_strided_slice %23 {offsets = [0, 32], sizes = [8, 32], strides = [1, 1]} : vector<8x128xf32> to vector<8x32xf32>
    %26 = vector.extract_strided_slice %19 {offsets = [0, 64], sizes = [8, 32], strides = [1, 1]} : vector<8x128xf32> to vector<8x32xf32>
    %27 = vector.extract_strided_slice %23 {offsets = [0, 96], sizes = [8, 32], strides = [1, 1]} : vector<8x128xf32> to vector<8x32xf32>
    %28 = arith.mulf %25, %14 : vector<8x32xf32>
    %29 = arith.mulf %24, %26 : vector<8x32xf32>
    %30 = arith.addf %28, %29 : vector<8x32xf32>
    %31 = math.tanh %30 : vector<8x32xf32>
    %32 = arith.mulf %27, %31 : vector<8x32xf32>
    %cst_19 = arith.constant dense<0.000000e+00> : vector<8x256xf32>
    %33 = tpu.matmul %32, %10, %cst_19 {dimension_numbers = #tpu.dot_dimension_numbers<[1], [0], [0], [1], [0, 0, 1, 1], [], []>} : vector<8x32xf32>, vector<32x256xf32>, vector<8x256xf32> -> vector<8x256xf32>
    %34 = vector.extract_strided_slice %33 {offsets = [0, 0], sizes = [8, 128], strides = [1, 1]} : vector<8x256xf32> to vector<8x128xf32>
    %35 = vector.extract_strided_slice %33 {offsets = [0, 128], sizes = [8, 128], strides = [1, 1]} : vector<8x256xf32> to vector<8x128xf32>
    %36 = arith.addf %35, %13 : vector<8x128xf32>
    %c0_20 = arith.constant 0 : index
    %c0_21 = arith.constant 0 : index
    %37 = vector.load %arg12[%c0_20, %c0_21] : memref<64x128xf32, #tpu.memory_space<vmem>>, vector<8x128xf32>
    tpu.vector_store %arg12[%c0_20, %c0_21], %36 {strides = array<i32>} : memref<64x128xf32, #tpu.memory_space<vmem>>, vector<8x128xf32>,
    %c8 = arith.constant 8 : index
    %c0_22 = arith.constant 0 : index
    %38 = vector.load %arg12[%c8, %c0_22] : memref<64x128xf32, #tpu.memory_space<vmem>>, vector<8x128xf32>
    %39 = arith.addf %38, %34 : vector<8x128xf32>
    %40 = arith.mulf %39, %9 : vector<8x128xf32>
    %41 = math.tanh %40 : vector<8x128xf32>
    %cst_23 = arith.constant 5.000000e-01 : f32
    %42 = vector.broadcast %cst_23 : f32 to vector<8x128xf32>
    %43 = arith.mulf %42, %41 : vector<8x128xf32>
    %cst_24 = arith.constant 5.000000e-01 : f32
    %44 = vector.broadcast %cst_24 : f32 to vector<8x128xf32>
    %45 = arith.addf %43, %44 : vector<8x128xf32>
    %46 = vector.extract_strided_slice %45 {offsets = [0, 0], sizes = [8, 32], strides = [1, 1]} : vector<8x128xf32> to vector<8x32xf32>
    %47 = vector.extract_strided_slice %45 {offsets = [0, 32], sizes = [8, 32], strides = [1, 1]} : vector<8x128xf32> to vector<8x32xf32>
    %48 = vector.extract_strided_slice %41 {offsets = [0, 64], sizes = [8, 32], strides = [1, 1]} : vector<8x128xf32> to vector<8x32xf32>
    %49 = vector.extract_strided_slice %45 {offsets = [0, 96], sizes = [8, 32], strides = [1, 1]} : vector<8x128xf32> to vector<8x32xf32>
    %50 = arith.mulf %47, %30 : vector<8x32xf32>
    %51 = arith.mulf %46, %48 : vector<8x32xf32>
    %52 = arith.addf %50, %51 : vector<8x32xf32>
    %53 = math.tanh %52 : vector<8x32xf32>
    %54 = arith.mulf %49, %53 : vector<8x32xf32>
    %cst_25 = arith.constant dense<0.000000e+00> : vector<8x256xf32>
    %55 = tpu.matmul %54, %10, %cst_25 {dimension_numbers = #tpu.dot_dimension_numbers<[1], [0], [0], [1], [0, 0, 1, 1], [], []>} : vector<8x32xf32>, vector<32x256xf32>, vector<8x256xf32> -> vector<8x256xf32>
    %56 = vector.extract_strided_slice %55 {offsets = [0, 0], sizes = [8, 128], strides = [1, 1]} : vector<8x256xf32> to vector<8x128xf32>
    %57 = vector.extract_strided_slice %55 {offsets = [0, 128], sizes = [8, 128], strides = [1, 1]} : vector<8x256xf32> to vector<8x128xf32>
    %58 = arith.addf %57, %13 : vector<8x128xf32>
    %c8_26 = arith.constant 8 : index
    %c0_27 = arith.constant 0 : index
    %59 = vector.load %arg12[%c8_26, %c0_27] : memref<64x128xf32, #tpu.memory_space<vmem>>, vector<8x128xf32>
    tpu.vector_store %arg12[%c8_26, %c0_27], %58 {strides = array<i32>} : memref<64x128xf32, #tpu.memory_space<vmem>>, vector<8x128xf32>,
    %c16 = arith.constant 16 : index
    %c0_28 = arith.constant 0 : index
    %60 = vector.load %arg12[%c16, %c0_28] : memref<64x128xf32, #tpu.memory_space<vmem>>, vector<8x128xf32>
    %61 = arith.addf %60, %56 : vector<8x128xf32>
    %62 = arith.mulf %61, %9 : vector<8x128xf32>
    %63 = math.tanh %62 : vector<8x128xf32>
    %cst_29 = arith.constant 5.000000e-01 : f32
    %64 = vector.broadcast %cst_29 : f32 to vector<8x128xf32>
    %65 = arith.mulf %64, %63 : vector<8x128xf32>
    %cst_30 = arith.constant 5.000000e-01 : f32
    %66 = vector.broadcast %cst_30 : f32 to vector<8x128xf32>
    %67 = arith.addf %65, %66 : vector<8x128xf32>
    %68 = vector.extract_strided_slice %67 {offsets = [0, 0], sizes = [8, 32], strides = [1, 1]} : vector<8x128xf32> to vector<8x32xf32>
    %69 = vector.extract_strided_slice %67 {offsets = [0, 32], sizes = [8, 32], strides = [1, 1]} : vector<8x128xf32> to vector<8x32xf32>
    %70 = vector.extract_strided_slice %63 {offsets = [0, 64], sizes = [8, 32], strides = [1, 1]} : vector<8x128xf32> to vector<8x32xf32>
    %71 = vector.extract_strided_slice %67 {offsets = [0, 96], sizes = [8, 32], strides = [1, 1]} : vector<8x128xf32> to vector<8x32xf32>
    %72 = arith.mulf %69, %52 : vector<8x32xf32>
    %73 = arith.mulf %68, %70 : vector<8x32xf32>
    %74 = arith.addf %72, %73 : vector<8x32xf32>
    %75 = math.tanh %74 : vector<8x32xf32>
    %76 = arith.mulf %71, %75 : vector<8x32xf32>
    %cst_31 = arith.constant dense<0.000000e+00> : vector<8x256xf32>
    %77 = tpu.matmul %76, %10, %cst_31 {dimension_numbers = #tpu.dot_dimension_numbers<[1], [0], [0], [1], [0, 0, 1, 1], [], []>} : vector<8x32xf32>, vector<32x256xf32>, vector<8x256xf32> -> vector<8x256xf32>
    %78 = vector.extract_strided_slice %77 {offsets = [0, 0], sizes = [8, 128], strides = [1, 1]} : vector<8x256xf32> to vector<8x128xf32>
    %79 = vector.extract_strided_slice %77 {offsets = [0, 128], sizes = [8, 128], strides = [1, 1]} : vector<8x256xf32> to vector<8x128xf32>
    %80 = arith.addf %79, %13 : vector<8x128xf32>
    %c16_32 = arith.constant 16 : index
    %c0_33 = arith.constant 0 : index
    %81 = vector.load %arg12[%c16_32, %c0_33] : memref<64x128xf32, #tpu.memory_space<vmem>>, vector<8x128xf32>
    tpu.vector_store %arg12[%c16_32, %c0_33], %80 {strides = array<i32>} : memref<64x128xf32, #tpu.memory_space<vmem>>, vector<8x128xf32>,
    %c24 = arith.constant 24 : index
    %c0_34 = arith.constant 0 : index
    %82 = vector.load %arg12[%c24, %c0_34] : memref<64x128xf32, #tpu.memory_space<vmem>>, vector<8x128xf32>
    %83 = arith.addf %82, %78 : vector<8x128xf32>
    %84 = arith.mulf %83, %9 : vector<8x128xf32>
    %85 = math.tanh %84 : vector<8x128xf32>
    %cst_35 = arith.constant 5.000000e-01 : f32
    %86 = vector.broadcast %cst_35 : f32 to vector<8x128xf32>
    %87 = arith.mulf %86, %85 : vector<8x128xf32>
    %cst_36 = arith.constant 5.000000e-01 : f32
    %88 = vector.broadcast %cst_36 : f32 to vector<8x128xf32>
    %89 = arith.addf %87, %88 : vector<8x128xf32>
    %90 = vector.extract_strided_slice %89 {offsets = [0, 0], sizes = [8, 32], strides = [1, 1]} : vector<8x128xf32> to vector<8x32xf32>
    %91 = vector.extract_strided_slice %89 {offsets = [0, 32], sizes = [8, 32], strides = [1, 1]} : vector<8x128xf32> to vector<8x32xf32>
    %92 = vector.extract_strided_slice %85 {offsets = [0, 64], sizes = [8, 32], strides = [1, 1]} : vector<8x128xf32> to vector<8x32xf32>
    %93 = vector.extract_strided_slice %89 {offsets = [0, 96], sizes = [8, 32], strides = [1, 1]} : vector<8x128xf32> to vector<8x32xf32>
    %94 = arith.mulf %91, %74 : vector<8x32xf32>
    %95 = arith.mulf %90, %92 : vector<8x32xf32>
    %96 = arith.addf %94, %95 : vector<8x32xf32>
    %97 = math.tanh %96 : vector<8x32xf32>
    %98 = arith.mulf %93, %97 : vector<8x32xf32>
    %cst_37 = arith.constant dense<0.000000e+00> : vector<8x256xf32>
    %99 = tpu.matmul %98, %10, %cst_37 {dimension_numbers = #tpu.dot_dimension_numbers<[1], [0], [0], [1], [0, 0, 1, 1], [], []>} : vector<8x32xf32>, vector<32x256xf32>, vector<8x256xf32> -> vector<8x256xf32>
    %100 = vector.extract_strided_slice %99 {offsets = [0, 0], sizes = [8, 128], strides = [1, 1]} : vector<8x256xf32> to vector<8x128xf32>
    %101 = vector.extract_strided_slice %99 {offsets = [0, 128], sizes = [8, 128], strides = [1, 1]} : vector<8x256xf32> to vector<8x128xf32>
    %102 = arith.addf %101, %13 : vector<8x128xf32>
    %c24_38 = arith.constant 24 : index
    %c0_39 = arith.constant 0 : index
    %103 = vector.load %arg12[%c24_38, %c0_39] : memref<64x128xf32, #tpu.memory_space<vmem>>, vector<8x128xf32>
    tpu.vector_store %arg12[%c24_38, %c0_39], %102 {strides = array<i32>} : memref<64x128xf32, #tpu.memory_space<vmem>>, vector<8x128xf32>,
    %c32 = arith.constant 32 : index
    %c0_40 = arith.constant 0 : index
    %104 = vector.load %arg12[%c32, %c0_40] : memref<64x128xf32, #tpu.memory_space<vmem>>, vector<8x128xf32>
    %105 = arith.addf %104, %100 : vector<8x128xf32>
    %106 = arith.mulf %105, %9 : vector<8x128xf32>
    %107 = math.tanh %106 : vector<8x128xf32>
    %cst_41 = arith.constant 5.000000e-01 : f32
    %108 = vector.broadcast %cst_41 : f32 to vector<8x128xf32>
    %109 = arith.mulf %108, %107 : vector<8x128xf32>
    %cst_42 = arith.constant 5.000000e-01 : f32
    %110 = vector.broadcast %cst_42 : f32 to vector<8x128xf32>
    %111 = arith.addf %109, %110 : vector<8x128xf32>
    %112 = vector.extract_strided_slice %111 {offsets = [0, 0], sizes = [8, 32], strides = [1, 1]} : vector<8x128xf32> to vector<8x32xf32>
    %113 = vector.extract_strided_slice %111 {offsets = [0, 32], sizes = [8, 32], strides = [1, 1]} : vector<8x128xf32> to vector<8x32xf32>
    %114 = vector.extract_strided_slice %107 {offsets = [0, 64], sizes = [8, 32], strides = [1, 1]} : vector<8x128xf32> to vector<8x32xf32>
    %115 = vector.extract_strided_slice %111 {offsets = [0, 96], sizes = [8, 32], strides = [1, 1]} : vector<8x128xf32> to vector<8x32xf32>
    %116 = arith.mulf %113, %96 : vector<8x32xf32>
    %117 = arith.mulf %112, %114 : vector<8x32xf32>
    %118 = arith.addf %116, %117 : vector<8x32xf32>
    %119 = math.tanh %118 : vector<8x32xf32>
    %120 = arith.mulf %115, %119 : vector<8x32xf32>
    %cst_43 = arith.constant dense<0.000000e+00> : vector<8x256xf32>
    %121 = tpu.matmul %120, %10, %cst_43 {dimension_numbers = #tpu.dot_dimension_numbers<[1], [0], [0], [1], [0, 0, 1, 1], [], []>} : vector<8x32xf32>, vector<32x256xf32>, vector<8x256xf32> -> vector<8x256xf32>
    %122 = vector.extract_strided_slice %121 {offsets = [0, 0], sizes = [8, 128], strides = [1, 1]} : vector<8x256xf32> to vector<8x128xf32>
    %123 = vector.extract_strided_slice %121 {offsets = [0, 128], sizes = [8, 128], strides = [1, 1]} : vector<8x256xf32> to vector<8x128xf32>
    %124 = arith.addf %123, %13 : vector<8x128xf32>
    %c32_44 = arith.constant 32 : index
    %c0_45 = arith.constant 0 : index
    %125 = vector.load %arg12[%c32_44, %c0_45] : memref<64x128xf32, #tpu.memory_space<vmem>>, vector<8x128xf32>
    tpu.vector_store %arg12[%c32_44, %c0_45], %124 {strides = array<i32>} : memref<64x128xf32, #tpu.memory_space<vmem>>, vector<8x128xf32>,
    %c40 = arith.constant 40 : index
    %c0_46 = arith.constant 0 : index
    %126 = vector.load %arg12[%c40, %c0_46] : memref<64x128xf32, #tpu.memory_space<vmem>>, vector<8x128xf32>
    %127 = arith.addf %126, %122 : vector<8x128xf32>
    %128 = arith.mulf %127, %9 : vector<8x128xf32>
    %129 = math.tanh %128 : vector<8x128xf32>
    %cst_47 = arith.constant 5.000000e-01 : f32
    %130 = vector.broadcast %cst_47 : f32 to vector<8x128xf32>
    %131 = arith.mulf %130, %129 : vector<8x128xf32>
    %cst_48 = arith.constant 5.000000e-01 : f32
    %132 = vector.broadcast %cst_48 : f32 to vector<8x128xf32>
    %133 = arith.addf %131, %132 : vector<8x128xf32>
    %134 = vector.extract_strided_slice %133 {offsets = [0, 0], sizes = [8, 32], strides = [1, 1]} : vector<8x128xf32> to vector<8x32xf32>
    %135 = vector.extract_strided_slice %133 {offsets = [0, 32], sizes = [8, 32], strides = [1, 1]} : vector<8x128xf32> to vector<8x32xf32>
    %136 = vector.extract_strided_slice %129 {offsets = [0, 64], sizes = [8, 32], strides = [1, 1]} : vector<8x128xf32> to vector<8x32xf32>
    %137 = vector.extract_strided_slice %133 {offsets = [0, 96], sizes = [8, 32], strides = [1, 1]} : vector<8x128xf32> to vector<8x32xf32>
    %138 = arith.mulf %135, %118 : vector<8x32xf32>
    %139 = arith.mulf %134, %136 : vector<8x32xf32>
    %140 = arith.addf %138, %139 : vector<8x32xf32>
    %141 = math.tanh %140 : vector<8x32xf32>
    %142 = arith.mulf %137, %141 : vector<8x32xf32>
    %cst_49 = arith.constant dense<0.000000e+00> : vector<8x256xf32>
    %143 = tpu.matmul %142, %10, %cst_49 {dimension_numbers = #tpu.dot_dimension_numbers<[1], [0], [0], [1], [0, 0, 1, 1], [], []>} : vector<8x32xf32>, vector<32x256xf32>, vector<8x256xf32> -> vector<8x256xf32>
    %144 = vector.extract_strided_slice %143 {offsets = [0, 0], sizes = [8, 128], strides = [1, 1]} : vector<8x256xf32> to vector<8x128xf32>
    %145 = vector.extract_strided_slice %143 {offsets = [0, 128], sizes = [8, 128], strides = [1, 1]} : vector<8x256xf32> to vector<8x128xf32>
    %146 = arith.addf %145, %13 : vector<8x128xf32>
    %c40_50 = arith.constant 40 : index
    %c0_51 = arith.constant 0 : index
    %147 = vector.load %arg12[%c40_50, %c0_51] : memref<64x128xf32, #tpu.memory_space<vmem>>, vector<8x128xf32>
    tpu.vector_store %arg12[%c40_50, %c0_51], %146 {strides = array<i32>} : memref<64x128xf32, #tpu.memory_space<vmem>>, vector<8x128xf32>,
    %c48 = arith.constant 48 : index
    %c0_52 = arith.constant 0 : index
    %148 = vector.load %arg12[%c48, %c0_52] : memref<64x128xf32, #tpu.memory_space<vmem>>, vector<8x128xf32>
    %149 = arith.addf %148, %144 : vector<8x128xf32>
    %150 = arith.mulf %149, %9 : vector<8x128xf32>
    %151 = math.tanh %150 : vector<8x128xf32>
    %cst_53 = arith.constant 5.000000e-01 : f32
    %152 = vector.broadcast %cst_53 : f32 to vector<8x128xf32>
    %153 = arith.mulf %152, %151 : vector<8x128xf32>
    %cst_54 = arith.constant 5.000000e-01 : f32
    %154 = vector.broadcast %cst_54 : f32 to vector<8x128xf32>
    %155 = arith.addf %153, %154 : vector<8x128xf32>
    %156 = vector.extract_strided_slice %155 {offsets = [0, 0], sizes = [8, 32], strides = [1, 1]} : vector<8x128xf32> to vector<8x32xf32>
    %157 = vector.extract_strided_slice %155 {offsets = [0, 32], sizes = [8, 32], strides = [1, 1]} : vector<8x128xf32> to vector<8x32xf32>
    %158 = vector.extract_strided_slice %151 {offsets = [0, 64], sizes = [8, 32], strides = [1, 1]} : vector<8x128xf32> to vector<8x32xf32>
    %159 = vector.extract_strided_slice %155 {offsets = [0, 96], sizes = [8, 32], strides = [1, 1]} : vector<8x128xf32> to vector<8x32xf32>
    %160 = arith.mulf %157, %140 : vector<8x32xf32>
    %161 = arith.mulf %156, %158 : vector<8x32xf32>
    %162 = arith.addf %160, %161 : vector<8x32xf32>
    %163 = math.tanh %162 : vector<8x32xf32>
    %164 = arith.mulf %159, %163 : vector<8x32xf32>
    %cst_55 = arith.constant dense<0.000000e+00> : vector<8x256xf32>
    %165 = tpu.matmul %164, %10, %cst_55 {dimension_numbers = #tpu.dot_dimension_numbers<[1], [0], [0], [1], [0, 0, 1, 1], [], []>} : vector<8x32xf32>, vector<32x256xf32>, vector<8x256xf32> -> vector<8x256xf32>
    %166 = vector.extract_strided_slice %165 {offsets = [0, 0], sizes = [8, 128], strides = [1, 1]} : vector<8x256xf32> to vector<8x128xf32>
    %167 = vector.extract_strided_slice %165 {offsets = [0, 128], sizes = [8, 128], strides = [1, 1]} : vector<8x256xf32> to vector<8x128xf32>
    %168 = arith.addf %167, %13 : vector<8x128xf32>
    %c48_56 = arith.constant 48 : index
    %c0_57 = arith.constant 0 : index
    %169 = vector.load %arg12[%c48_56, %c0_57] : memref<64x128xf32, #tpu.memory_space<vmem>>, vector<8x128xf32>
    tpu.vector_store %arg12[%c48_56, %c0_57], %168 {strides = array<i32>} : memref<64x128xf32, #tpu.memory_space<vmem>>, vector<8x128xf32>,
    %c56 = arith.constant 56 : index
    %c0_58 = arith.constant 0 : index
    %170 = vector.load %arg12[%c56, %c0_58] : memref<64x128xf32, #tpu.memory_space<vmem>>, vector<8x128xf32>
    %171 = arith.addf %170, %166 : vector<8x128xf32>
    %172 = arith.mulf %171, %9 : vector<8x128xf32>
    %173 = math.tanh %172 : vector<8x128xf32>
    %cst_59 = arith.constant 5.000000e-01 : f32
    %174 = vector.broadcast %cst_59 : f32 to vector<8x128xf32>
    %175 = arith.mulf %174, %173 : vector<8x128xf32>
    %cst_60 = arith.constant 5.000000e-01 : f32
    %176 = vector.broadcast %cst_60 : f32 to vector<8x128xf32>
    %177 = arith.addf %175, %176 : vector<8x128xf32>
    %178 = vector.extract_strided_slice %177 {offsets = [0, 0], sizes = [8, 32], strides = [1, 1]} : vector<8x128xf32> to vector<8x32xf32>
    %179 = vector.extract_strided_slice %177 {offsets = [0, 32], sizes = [8, 32], strides = [1, 1]} : vector<8x128xf32> to vector<8x32xf32>
    %180 = vector.extract_strided_slice %173 {offsets = [0, 64], sizes = [8, 32], strides = [1, 1]} : vector<8x128xf32> to vector<8x32xf32>
    %181 = vector.extract_strided_slice %177 {offsets = [0, 96], sizes = [8, 32], strides = [1, 1]} : vector<8x128xf32> to vector<8x32xf32>
    %182 = arith.mulf %179, %162 : vector<8x32xf32>
    %183 = arith.mulf %178, %180 : vector<8x32xf32>
    %184 = arith.addf %182, %183 : vector<8x32xf32>
    %185 = math.tanh %184 : vector<8x32xf32>
    %186 = arith.mulf %181, %185 : vector<8x32xf32>
    %cst_61 = arith.constant dense<0.000000e+00> : vector<8x256xf32>
    %187 = tpu.matmul %186, %10, %cst_61 {dimension_numbers = #tpu.dot_dimension_numbers<[1], [0], [0], [1], [0, 0, 1, 1], [], []>} : vector<8x32xf32>, vector<32x256xf32>, vector<8x256xf32> -> vector<8x256xf32>
    %188 = vector.extract_strided_slice %187 {offsets = [0, 128], sizes = [8, 128], strides = [1, 1]} : vector<8x256xf32> to vector<8x128xf32>
    %189 = arith.addf %188, %13 : vector<8x128xf32>
    %c56_62 = arith.constant 56 : index
    %c0_63 = arith.constant 0 : index
    %190 = vector.load %arg12[%c56_62, %c0_63] : memref<64x128xf32, #tpu.memory_space<vmem>>, vector<8x128xf32>
    tpu.vector_store %arg12[%c56_62, %c0_63], %189 {strides = array<i32>} : memref<64x128xf32, #tpu.memory_space<vmem>>, vector<8x128xf32>,
    %c0_64 = arith.constant 0 : index
    %c0_65 = arith.constant 0 : index
    %191 = vector.load %arg5[%c0_64, %c0_65] : memref<32x256xf32, #tpu.memory_space<vmem>>, vector<32x256xf32>
    %c0_66 = arith.constant 0 : index
    %c0_67 = arith.constant 0 : index
    %192 = vector.load %arg6[%c0_66, %c0_67] : memref<1x128xf32, #tpu.memory_space<vmem>>, vector<1x128xf32>
    %193 = vector.shape_cast %192 : vector<1x128xf32> to vector<1x128xf32>
    %194 = vector.broadcast %193 : vector<1x128xf32> to vector<8x128xf32>
    %cst_68 = arith.constant 0.000000e+00 : f32
    %195 = vector.broadcast %cst_68 : f32 to vector<8x32xf32>
    %cst_69 = arith.constant 0.000000e+00 : f32
    %196 = vector.broadcast %cst_69 : f32 to vector<8x128xf32>
    %c0_70 = arith.constant 0 : index
    %c0_71 = arith.constant 0 : index
    %197 = vector.load %arg12[%c0_70, %c0_71] : memref<64x128xf32, #tpu.memory_space<vmem>>, vector<8x128xf32>
    %198 = arith.addf %197, %196 : vector<8x128xf32>
    %199 = arith.mulf %198, %9 : vector<8x128xf32>
    %200 = math.tanh %199 : vector<8x128xf32>
    %cst_72 = arith.constant 5.000000e-01 : f32
    %201 = vector.broadcast %cst_72 : f32 to vector<8x128xf32>
    %202 = arith.mulf %201, %200 : vector<8x128xf32>
    %cst_73 = arith.constant 5.000000e-01 : f32
    %203 = vector.broadcast %cst_73 : f32 to vector<8x128xf32>
    %204 = arith.addf %202, %203 : vector<8x128xf32>
    %205 = vector.extract_strided_slice %204 {offsets = [0, 0], sizes = [8, 32], strides = [1, 1]} : vector<8x128xf32> to vector<8x32xf32>
    %206 = vector.extract_strided_slice %204 {offsets = [0, 32], sizes = [8, 32], strides = [1, 1]} : vector<8x128xf32> to vector<8x32xf32>
    %207 = vector.extract_strided_slice %200 {offsets = [0, 64], sizes = [8, 32], strides = [1, 1]} : vector<8x128xf32> to vector<8x32xf32>
    %208 = vector.extract_strided_slice %204 {offsets = [0, 96], sizes = [8, 32], strides = [1, 1]} : vector<8x128xf32> to vector<8x32xf32>
    %209 = arith.mulf %206, %195 : vector<8x32xf32>
    %210 = arith.mulf %205, %207 : vector<8x32xf32>
    %211 = arith.addf %209, %210 : vector<8x32xf32>
    %212 = math.tanh %211 : vector<8x32xf32>
    %213 = arith.mulf %208, %212 : vector<8x32xf32>
    %cst_74 = arith.constant dense<0.000000e+00> : vector<8x256xf32>
    %214 = tpu.matmul %213, %191, %cst_74 {dimension_numbers = #tpu.dot_dimension_numbers<[1], [0], [0], [1], [0, 0, 1, 1], [], []>} : vector<8x32xf32>, vector<32x256xf32>, vector<8x256xf32> -> vector<8x256xf32>
    %215 = vector.extract_strided_slice %214 {offsets = [0, 0], sizes = [8, 128], strides = [1, 1]} : vector<8x256xf32> to vector<8x128xf32>
    %216 = vector.extract_strided_slice %214 {offsets = [0, 128], sizes = [8, 128], strides = [1, 1]} : vector<8x256xf32> to vector<8x128xf32>
    %217 = arith.addf %216, %194 : vector<8x128xf32>
    %c0_75 = arith.constant 0 : index
    %c0_76 = arith.constant 0 : index
    %218 = vector.load %arg12[%c0_75, %c0_76] : memref<64x128xf32, #tpu.memory_space<vmem>>, vector<8x128xf32>
    tpu.vector_store %arg12[%c0_75, %c0_76], %217 {strides = array<i32>} : memref<64x128xf32, #tpu.memory_space<vmem>>, vector<8x128xf32>,
    %c8_77 = arith.constant 8 : index
    %c0_78 = arith.constant 0 : index
    %219 = vector.load %arg12[%c8_77, %c0_78] : memref<64x128xf32, #tpu.memory_space<vmem>>, vector<8x128xf32>
    %220 = arith.addf %219, %215 : vector<8x128xf32>
    %221 = arith.mulf %220, %9 : vector<8x128xf32>
    %222 = math.tanh %221 : vector<8x128xf32>
    %cst_79 = arith.constant 5.000000e-01 : f32
    %223 = vector.broadcast %cst_79 : f32 to vector<8x128xf32>
    %224 = arith.mulf %223, %222 : vector<8x128xf32>
    %cst_80 = arith.constant 5.000000e-01 : f32
    %225 = vector.broadcast %cst_80 : f32 to vector<8x128xf32>
    %226 = arith.addf %224, %225 : vector<8x128xf32>
    %227 = vector.extract_strided_slice %226 {offsets = [0, 0], sizes = [8, 32], strides = [1, 1]} : vector<8x128xf32> to vector<8x32xf32>
    %228 = vector.extract_strided_slice %226 {offsets = [0, 32], sizes = [8, 32], strides = [1, 1]} : vector<8x128xf32> to vector<8x32xf32>
    %229 = vector.extract_strided_slice %222 {offsets = [0, 64], sizes = [8, 32], strides = [1, 1]} : vector<8x128xf32> to vector<8x32xf32>
    %230 = vector.extract_strided_slice %226 {offsets = [0, 96], sizes = [8, 32], strides = [1, 1]} : vector<8x128xf32> to vector<8x32xf32>
    %231 = arith.mulf %228, %211 : vector<8x32xf32>
    %232 = arith.mulf %227, %229 : vector<8x32xf32>
    %233 = arith.addf %231, %232 : vector<8x32xf32>
    %234 = math.tanh %233 : vector<8x32xf32>
    %235 = arith.mulf %230, %234 : vector<8x32xf32>
    %cst_81 = arith.constant dense<0.000000e+00> : vector<8x256xf32>
    %236 = tpu.matmul %235, %191, %cst_81 {dimension_numbers = #tpu.dot_dimension_numbers<[1], [0], [0], [1], [0, 0, 1, 1], [], []>} : vector<8x32xf32>, vector<32x256xf32>, vector<8x256xf32> -> vector<8x256xf32>
    %237 = vector.extract_strided_slice %236 {offsets = [0, 0], sizes = [8, 128], strides = [1, 1]} : vector<8x256xf32> to vector<8x128xf32>
    %238 = vector.extract_strided_slice %236 {offsets = [0, 128], sizes = [8, 128], strides = [1, 1]} : vector<8x256xf32> to vector<8x128xf32>
    %239 = arith.addf %238, %194 : vector<8x128xf32>
    %c8_82 = arith.constant 8 : index
    %c0_83 = arith.constant 0 : index
    %240 = vector.load %arg12[%c8_82, %c0_83] : memref<64x128xf32, #tpu.memory_space<vmem>>, vector<8x128xf32>
    tpu.vector_store %arg12[%c8_82, %c0_83], %239 {strides = array<i32>} : memref<64x128xf32, #tpu.memory_space<vmem>>, vector<8x128xf32>,
    %c16_84 = arith.constant 16 : index
    %c0_85 = arith.constant 0 : index
    %241 = vector.load %arg12[%c16_84, %c0_85] : memref<64x128xf32, #tpu.memory_space<vmem>>, vector<8x128xf32>
    %242 = arith.addf %241, %237 : vector<8x128xf32>
    %243 = arith.mulf %242, %9 : vector<8x128xf32>
    %244 = math.tanh %243 : vector<8x128xf32>
    %cst_86 = arith.constant 5.000000e-01 : f32
    %245 = vector.broadcast %cst_86 : f32 to vector<8x128xf32>
    %246 = arith.mulf %245, %244 : vector<8x128xf32>
    %cst_87 = arith.constant 5.000000e-01 : f32
    %247 = vector.broadcast %cst_87 : f32 to vector<8x128xf32>
    %248 = arith.addf %246, %247 : vector<8x128xf32>
    %249 = vector.extract_strided_slice %248 {offsets = [0, 0], sizes = [8, 32], strides = [1, 1]} : vector<8x128xf32> to vector<8x32xf32>
    %250 = vector.extract_strided_slice %248 {offsets = [0, 32], sizes = [8, 32], strides = [1, 1]} : vector<8x128xf32> to vector<8x32xf32>
    %251 = vector.extract_strided_slice %244 {offsets = [0, 64], sizes = [8, 32], strides = [1, 1]} : vector<8x128xf32> to vector<8x32xf32>
    %252 = vector.extract_strided_slice %248 {offsets = [0, 96], sizes = [8, 32], strides = [1, 1]} : vector<8x128xf32> to vector<8x32xf32>
    %253 = arith.mulf %250, %233 : vector<8x32xf32>
    %254 = arith.mulf %249, %251 : vector<8x32xf32>
    %255 = arith.addf %253, %254 : vector<8x32xf32>
    %256 = math.tanh %255 : vector<8x32xf32>
    %257 = arith.mulf %252, %256 : vector<8x32xf32>
    %cst_88 = arith.constant dense<0.000000e+00> : vector<8x256xf32>
    %258 = tpu.matmul %257, %191, %cst_88 {dimension_numbers = #tpu.dot_dimension_numbers<[1], [0], [0], [1], [0, 0, 1, 1], [], []>} : vector<8x32xf32>, vector<32x256xf32>, vector<8x256xf32> -> vector<8x256xf32>
    %259 = vector.extract_strided_slice %258 {offsets = [0, 0], sizes = [8, 128], strides = [1, 1]} : vector<8x256xf32> to vector<8x128xf32>
    %260 = vector.extract_strided_slice %258 {offsets = [0, 128], sizes = [8, 128], strides = [1, 1]} : vector<8x256xf32> to vector<8x128xf32>
    %261 = arith.addf %260, %194 : vector<8x128xf32>
    %c16_89 = arith.constant 16 : index
    %c0_90 = arith.constant 0 : index
    %262 = vector.load %arg12[%c16_89, %c0_90] : memref<64x128xf32, #tpu.memory_space<vmem>>, vector<8x128xf32>
    tpu.vector_store %arg12[%c16_89, %c0_90], %261 {strides = array<i32>} : memref<64x128xf32, #tpu.memory_space<vmem>>, vector<8x128xf32>,
    %c24_91 = arith.constant 24 : index
    %c0_92 = arith.constant 0 : index
    %263 = vector.load %arg12[%c24_91, %c0_92] : memref<64x128xf32, #tpu.memory_space<vmem>>, vector<8x128xf32>
    %264 = arith.addf %263, %259 : vector<8x128xf32>
    %265 = arith.mulf %264, %9 : vector<8x128xf32>
    %266 = math.tanh %265 : vector<8x128xf32>
    %cst_93 = arith.constant 5.000000e-01 : f32
    %267 = vector.broadcast %cst_93 : f32 to vector<8x128xf32>
    %268 = arith.mulf %267, %266 : vector<8x128xf32>
    %cst_94 = arith.constant 5.000000e-01 : f32
    %269 = vector.broadcast %cst_94 : f32 to vector<8x128xf32>
    %270 = arith.addf %268, %269 : vector<8x128xf32>
    %271 = vector.extract_strided_slice %270 {offsets = [0, 0], sizes = [8, 32], strides = [1, 1]} : vector<8x128xf32> to vector<8x32xf32>
    %272 = vector.extract_strided_slice %270 {offsets = [0, 32], sizes = [8, 32], strides = [1, 1]} : vector<8x128xf32> to vector<8x32xf32>
    %273 = vector.extract_strided_slice %266 {offsets = [0, 64], sizes = [8, 32], strides = [1, 1]} : vector<8x128xf32> to vector<8x32xf32>
    %274 = vector.extract_strided_slice %270 {offsets = [0, 96], sizes = [8, 32], strides = [1, 1]} : vector<8x128xf32> to vector<8x32xf32>
    %275 = arith.mulf %272, %255 : vector<8x32xf32>
    %276 = arith.mulf %271, %273 : vector<8x32xf32>
    %277 = arith.addf %275, %276 : vector<8x32xf32>
    %278 = math.tanh %277 : vector<8x32xf32>
    %279 = arith.mulf %274, %278 : vector<8x32xf32>
    %cst_95 = arith.constant dense<0.000000e+00> : vector<8x256xf32>
    %280 = tpu.matmul %279, %191, %cst_95 {dimension_numbers = #tpu.dot_dimension_numbers<[1], [0], [0], [1], [0, 0, 1, 1], [], []>} : vector<8x32xf32>, vector<32x256xf32>, vector<8x256xf32> -> vector<8x256xf32>
    %281 = vector.extract_strided_slice %280 {offsets = [0, 0], sizes = [8, 128], strides = [1, 1]} : vector<8x256xf32> to vector<8x128xf32>
    %282 = vector.extract_strided_slice %280 {offsets = [0, 128], sizes = [8, 128], strides = [1, 1]} : vector<8x256xf32> to vector<8x128xf32>
    %283 = arith.addf %282, %194 : vector<8x128xf32>
    %c24_96 = arith.constant 24 : index
    %c0_97 = arith.constant 0 : index
    %284 = vector.load %arg12[%c24_96, %c0_97] : memref<64x128xf32, #tpu.memory_space<vmem>>, vector<8x128xf32>
    tpu.vector_store %arg12[%c24_96, %c0_97], %283 {strides = array<i32>} : memref<64x128xf32, #tpu.memory_space<vmem>>, vector<8x128xf32>,
    %c32_98 = arith.constant 32 : index
    %c0_99 = arith.constant 0 : index
    %285 = vector.load %arg12[%c32_98, %c0_99] : memref<64x128xf32, #tpu.memory_space<vmem>>, vector<8x128xf32>
    %286 = arith.addf %285, %281 : vector<8x128xf32>
    %287 = arith.mulf %286, %9 : vector<8x128xf32>
    %288 = math.tanh %287 : vector<8x128xf32>
    %cst_100 = arith.constant 5.000000e-01 : f32
    %289 = vector.broadcast %cst_100 : f32 to vector<8x128xf32>
    %290 = arith.mulf %289, %288 : vector<8x128xf32>
    %cst_101 = arith.constant 5.000000e-01 : f32
    %291 = vector.broadcast %cst_101 : f32 to vector<8x128xf32>
    %292 = arith.addf %290, %291 : vector<8x128xf32>
    %293 = vector.extract_strided_slice %292 {offsets = [0, 0], sizes = [8, 32], strides = [1, 1]} : vector<8x128xf32> to vector<8x32xf32>
    %294 = vector.extract_strided_slice %292 {offsets = [0, 32], sizes = [8, 32], strides = [1, 1]} : vector<8x128xf32> to vector<8x32xf32>
    %295 = vector.extract_strided_slice %288 {offsets = [0, 64], sizes = [8, 32], strides = [1, 1]} : vector<8x128xf32> to vector<8x32xf32>
    %296 = vector.extract_strided_slice %292 {offsets = [0, 96], sizes = [8, 32], strides = [1, 1]} : vector<8x128xf32> to vector<8x32xf32>
    %297 = arith.mulf %294, %277 : vector<8x32xf32>
    %298 = arith.mulf %293, %295 : vector<8x32xf32>
    %299 = arith.addf %297, %298 : vector<8x32xf32>
    %300 = math.tanh %299 : vector<8x32xf32>
    %301 = arith.mulf %296, %300 : vector<8x32xf32>
    %cst_102 = arith.constant dense<0.000000e+00> : vector<8x256xf32>
    %302 = tpu.matmul %301, %191, %cst_102 {dimension_numbers = #tpu.dot_dimension_numbers<[1], [0], [0], [1], [0, 0, 1, 1], [], []>} : vector<8x32xf32>, vector<32x256xf32>, vector<8x256xf32> -> vector<8x256xf32>
    %303 = vector.extract_strided_slice %302 {offsets = [0, 0], sizes = [8, 128], strides = [1, 1]} : vector<8x256xf32> to vector<8x128xf32>
    %304 = vector.extract_strided_slice %302 {offsets = [0, 128], sizes = [8, 128], strides = [1, 1]} : vector<8x256xf32> to vector<8x128xf32>
    %305 = arith.addf %304, %194 : vector<8x128xf32>
    %c32_103 = arith.constant 32 : index
    %c0_104 = arith.constant 0 : index
    %306 = vector.load %arg12[%c32_103, %c0_104] : memref<64x128xf32, #tpu.memory_space<vmem>>, vector<8x128xf32>
    tpu.vector_store %arg12[%c32_103, %c0_104], %305 {strides = array<i32>} : memref<64x128xf32, #tpu.memory_space<vmem>>, vector<8x128xf32>,
    %c40_105 = arith.constant 40 : index
    %c0_106 = arith.constant 0 : index
    %307 = vector.load %arg12[%c40_105, %c0_106] : memref<64x128xf32, #tpu.memory_space<vmem>>, vector<8x128xf32>
    %308 = arith.addf %307, %303 : vector<8x128xf32>
    %309 = arith.mulf %308, %9 : vector<8x128xf32>
    %310 = math.tanh %309 : vector<8x128xf32>
    %cst_107 = arith.constant 5.000000e-01 : f32
    %311 = vector.broadcast %cst_107 : f32 to vector<8x128xf32>
    %312 = arith.mulf %311, %310 : vector<8x128xf32>
    %cst_108 = arith.constant 5.000000e-01 : f32
    %313 = vector.broadcast %cst_108 : f32 to vector<8x128xf32>
    %314 = arith.addf %312, %313 : vector<8x128xf32>
    %315 = vector.extract_strided_slice %314 {offsets = [0, 0], sizes = [8, 32], strides = [1, 1]} : vector<8x128xf32> to vector<8x32xf32>
    %316 = vector.extract_strided_slice %314 {offsets = [0, 32], sizes = [8, 32], strides = [1, 1]} : vector<8x128xf32> to vector<8x32xf32>
    %317 = vector.extract_strided_slice %310 {offsets = [0, 64], sizes = [8, 32], strides = [1, 1]} : vector<8x128xf32> to vector<8x32xf32>
    %318 = vector.extract_strided_slice %314 {offsets = [0, 96], sizes = [8, 32], strides = [1, 1]} : vector<8x128xf32> to vector<8x32xf32>
    %319 = arith.mulf %316, %299 : vector<8x32xf32>
    %320 = arith.mulf %315, %317 : vector<8x32xf32>
    %321 = arith.addf %319, %320 : vector<8x32xf32>
    %322 = math.tanh %321 : vector<8x32xf32>
    %323 = arith.mulf %318, %322 : vector<8x32xf32>
    %cst_109 = arith.constant dense<0.000000e+00> : vector<8x256xf32>
    %324 = tpu.matmul %323, %191, %cst_109 {dimension_numbers = #tpu.dot_dimension_numbers<[1], [0], [0], [1], [0, 0, 1, 1], [], []>} : vector<8x32xf32>, vector<32x256xf32>, vector<8x256xf32> -> vector<8x256xf32>
    %325 = vector.extract_strided_slice %324 {offsets = [0, 0], sizes = [8, 128], strides = [1, 1]} : vector<8x256xf32> to vector<8x128xf32>
    %326 = vector.extract_strided_slice %324 {offsets = [0, 128], sizes = [8, 128], strides = [1, 1]} : vector<8x256xf32> to vector<8x128xf32>
    %327 = arith.addf %326, %194 : vector<8x128xf32>
    %c40_110 = arith.constant 40 : index
    %c0_111 = arith.constant 0 : index
    %328 = vector.load %arg12[%c40_110, %c0_111] : memref<64x128xf32, #tpu.memory_space<vmem>>, vector<8x128xf32>
    tpu.vector_store %arg12[%c40_110, %c0_111], %327 {strides = array<i32>} : memref<64x128xf32, #tpu.memory_space<vmem>>, vector<8x128xf32>,
    %c48_112 = arith.constant 48 : index
    %c0_113 = arith.constant 0 : index
    %329 = vector.load %arg12[%c48_112, %c0_113] : memref<64x128xf32, #tpu.memory_space<vmem>>, vector<8x128xf32>
    %330 = arith.addf %329, %325 : vector<8x128xf32>
    %331 = arith.mulf %330, %9 : vector<8x128xf32>
    %332 = math.tanh %331 : vector<8x128xf32>
    %cst_114 = arith.constant 5.000000e-01 : f32
    %333 = vector.broadcast %cst_114 : f32 to vector<8x128xf32>
    %334 = arith.mulf %333, %332 : vector<8x128xf32>
    %cst_115 = arith.constant 5.000000e-01 : f32
    %335 = vector.broadcast %cst_115 : f32 to vector<8x128xf32>
    %336 = arith.addf %334, %335 : vector<8x128xf32>
    %337 = vector.extract_strided_slice %336 {offsets = [0, 0], sizes = [8, 32], strides = [1, 1]} : vector<8x128xf32> to vector<8x32xf32>
    %338 = vector.extract_strided_slice %336 {offsets = [0, 32], sizes = [8, 32], strides = [1, 1]} : vector<8x128xf32> to vector<8x32xf32>
    %339 = vector.extract_strided_slice %332 {offsets = [0, 64], sizes = [8, 32], strides = [1, 1]} : vector<8x128xf32> to vector<8x32xf32>
    %340 = vector.extract_strided_slice %336 {offsets = [0, 96], sizes = [8, 32], strides = [1, 1]} : vector<8x128xf32> to vector<8x32xf32>
    %341 = arith.mulf %338, %321 : vector<8x32xf32>
    %342 = arith.mulf %337, %339 : vector<8x32xf32>
    %343 = arith.addf %341, %342 : vector<8x32xf32>
    %344 = math.tanh %343 : vector<8x32xf32>
    %345 = arith.mulf %340, %344 : vector<8x32xf32>
    %cst_116 = arith.constant dense<0.000000e+00> : vector<8x256xf32>
    %346 = tpu.matmul %345, %191, %cst_116 {dimension_numbers = #tpu.dot_dimension_numbers<[1], [0], [0], [1], [0, 0, 1, 1], [], []>} : vector<8x32xf32>, vector<32x256xf32>, vector<8x256xf32> -> vector<8x256xf32>
    %347 = vector.extract_strided_slice %346 {offsets = [0, 0], sizes = [8, 128], strides = [1, 1]} : vector<8x256xf32> to vector<8x128xf32>
    %348 = vector.extract_strided_slice %346 {offsets = [0, 128], sizes = [8, 128], strides = [1, 1]} : vector<8x256xf32> to vector<8x128xf32>
    %349 = arith.addf %348, %194 : vector<8x128xf32>
    %c48_117 = arith.constant 48 : index
    %c0_118 = arith.constant 0 : index
    %350 = vector.load %arg12[%c48_117, %c0_118] : memref<64x128xf32, #tpu.memory_space<vmem>>, vector<8x128xf32>
    tpu.vector_store %arg12[%c48_117, %c0_118], %349 {strides = array<i32>} : memref<64x128xf32, #tpu.memory_space<vmem>>, vector<8x128xf32>,
    %c56_119 = arith.constant 56 : index
    %c0_120 = arith.constant 0 : index
    %351 = vector.load %arg12[%c56_119, %c0_120] : memref<64x128xf32, #tpu.memory_space<vmem>>, vector<8x128xf32>
    %352 = arith.addf %351, %347 : vector<8x128xf32>
    %353 = arith.mulf %352, %9 : vector<8x128xf32>
    %354 = math.tanh %353 : vector<8x128xf32>
    %cst_121 = arith.constant 5.000000e-01 : f32
    %355 = vector.broadcast %cst_121 : f32 to vector<8x128xf32>
    %356 = arith.mulf %355, %354 : vector<8x128xf32>
    %cst_122 = arith.constant 5.000000e-01 : f32
    %357 = vector.broadcast %cst_122 : f32 to vector<8x128xf32>
    %358 = arith.addf %356, %357 : vector<8x128xf32>
    %359 = vector.extract_strided_slice %358 {offsets = [0, 0], sizes = [8, 32], strides = [1, 1]} : vector<8x128xf32> to vector<8x32xf32>
    %360 = vector.extract_strided_slice %358 {offsets = [0, 32], sizes = [8, 32], strides = [1, 1]} : vector<8x128xf32> to vector<8x32xf32>
    %361 = vector.extract_strided_slice %354 {offsets = [0, 64], sizes = [8, 32], strides = [1, 1]} : vector<8x128xf32> to vector<8x32xf32>
    %362 = vector.extract_strided_slice %358 {offsets = [0, 96], sizes = [8, 32], strides = [1, 1]} : vector<8x128xf32> to vector<8x32xf32>
    %363 = arith.mulf %360, %343 : vector<8x32xf32>
    %364 = arith.mulf %359, %361 : vector<8x32xf32>
    %365 = arith.addf %363, %364 : vector<8x32xf32>
    %366 = math.tanh %365 : vector<8x32xf32>
    %367 = arith.mulf %362, %366 : vector<8x32xf32>
    %cst_123 = arith.constant dense<0.000000e+00> : vector<8x256xf32>
    %368 = tpu.matmul %367, %191, %cst_123 {dimension_numbers = #tpu.dot_dimension_numbers<[1], [0], [0], [1], [0, 0, 1, 1], [], []>} : vector<8x32xf32>, vector<32x256xf32>, vector<8x256xf32> -> vector<8x256xf32>
    %369 = vector.extract_strided_slice %368 {offsets = [0, 128], sizes = [8, 128], strides = [1, 1]} : vector<8x256xf32> to vector<8x128xf32>
    %370 = arith.addf %369, %194 : vector<8x128xf32>
    %c56_124 = arith.constant 56 : index
    %c0_125 = arith.constant 0 : index
    %371 = vector.load %arg12[%c56_124, %c0_125] : memref<64x128xf32, #tpu.memory_space<vmem>>, vector<8x128xf32>
    tpu.vector_store %arg12[%c56_124, %c0_125], %370 {strides = array<i32>} : memref<64x128xf32, #tpu.memory_space<vmem>>, vector<8x128xf32>,
    %c0_126 = arith.constant 0 : index
    %c0_127 = arith.constant 0 : index
    %372 = vector.load %arg7[%c0_126, %c0_127] : memref<32x128xf32, #tpu.memory_space<vmem>>, vector<32x128xf32>
    %cst_128 = arith.constant 0.000000e+00 : f32
    %373 = vector.broadcast %cst_128 : f32 to vector<8x32xf32>
    %cst_129 = arith.constant 0.000000e+00 : f32
    %374 = vector.broadcast %cst_129 : f32 to vector<8x128xf32>
    %c0_130 = arith.constant 0 : index
    %c0_131 = arith.constant 0 : index
    %375 = vector.load %arg12[%c0_130, %c0_131] : memref<64x128xf32, #tpu.memory_space<vmem>>, vector<8x128xf32>
    %376 = arith.addf %375, %374 : vector<8x128xf32>
    %377 = arith.mulf %376, %9 : vector<8x128xf32>
    %378 = math.tanh %377 : vector<8x128xf32>
    %cst_132 = arith.constant 5.000000e-01 : f32
    %379 = vector.broadcast %cst_132 : f32 to vector<8x128xf32>
    %380 = arith.mulf %379, %378 : vector<8x128xf32>
    %cst_133 = arith.constant 5.000000e-01 : f32
    %381 = vector.broadcast %cst_133 : f32 to vector<8x128xf32>
    %382 = arith.addf %380, %381 : vector<8x128xf32>
    %383 = vector.extract_strided_slice %382 {offsets = [0, 0], sizes = [8, 32], strides = [1, 1]} : vector<8x128xf32> to vector<8x32xf32>
    %384 = vector.extract_strided_slice %382 {offsets = [0, 32], sizes = [8, 32], strides = [1, 1]} : vector<8x128xf32> to vector<8x32xf32>
    %385 = vector.extract_strided_slice %378 {offsets = [0, 64], sizes = [8, 32], strides = [1, 1]} : vector<8x128xf32> to vector<8x32xf32>
    %386 = vector.extract_strided_slice %382 {offsets = [0, 96], sizes = [8, 32], strides = [1, 1]} : vector<8x128xf32> to vector<8x32xf32>
    %387 = arith.mulf %384, %373 : vector<8x32xf32>
    %388 = arith.mulf %383, %385 : vector<8x32xf32>
    %389 = arith.addf %387, %388 : vector<8x32xf32>
    %390 = math.tanh %389 : vector<8x32xf32>
    %391 = arith.mulf %386, %390 : vector<8x32xf32>
    %cst_134 = arith.constant dense<0.000000e+00> : vector<8x128xf32>
    %392 = tpu.matmul %391, %372, %cst_134 {dimension_numbers = #tpu.dot_dimension_numbers<[1], [0], [0], [1], [0, 0, 1, 1], [], []>} : vector<8x32xf32>, vector<32x128xf32>, vector<8x128xf32> -> vector<8x128xf32>
    %c8_135 = arith.constant 8 : index
    %c0_136 = arith.constant 0 : index
    %393 = vector.load %arg12[%c8_135, %c0_136] : memref<64x128xf32, #tpu.memory_space<vmem>>, vector<8x128xf32>
    %394 = arith.addf %393, %392 : vector<8x128xf32>
    %395 = arith.mulf %394, %9 : vector<8x128xf32>
    %396 = math.tanh %395 : vector<8x128xf32>
    %cst_137 = arith.constant 5.000000e-01 : f32
    %397 = vector.broadcast %cst_137 : f32 to vector<8x128xf32>
    %398 = arith.mulf %397, %396 : vector<8x128xf32>
    %cst_138 = arith.constant 5.000000e-01 : f32
    %399 = vector.broadcast %cst_138 : f32 to vector<8x128xf32>
    %400 = arith.addf %398, %399 : vector<8x128xf32>
    %401 = vector.extract_strided_slice %400 {offsets = [0, 0], sizes = [8, 32], strides = [1, 1]} : vector<8x128xf32> to vector<8x32xf32>
    %402 = vector.extract_strided_slice %400 {offsets = [0, 32], sizes = [8, 32], strides = [1, 1]} : vector<8x128xf32> to vector<8x32xf32>
    %403 = vector.extract_strided_slice %396 {offsets = [0, 64], sizes = [8, 32], strides = [1, 1]} : vector<8x128xf32> to vector<8x32xf32>
    %404 = vector.extract_strided_slice %400 {offsets = [0, 96], sizes = [8, 32], strides = [1, 1]} : vector<8x128xf32> to vector<8x32xf32>
    %405 = arith.mulf %402, %389 : vector<8x32xf32>
    %406 = arith.mulf %401, %403 : vector<8x32xf32>
    %407 = arith.addf %405, %406 : vector<8x32xf32>
    %408 = math.tanh %407 : vector<8x32xf32>
    %409 = arith.mulf %404, %408 : vector<8x32xf32>
    %cst_139 = arith.constant dense<0.000000e+00> : vector<8x128xf32>
    %410 = tpu.matmul %409, %372, %cst_139 {dimension_numbers = #tpu.dot_dimension_numbers<[1], [0], [0], [1], [0, 0, 1, 1], [], []>} : vector<8x32xf32>, vector<32x128xf32>, vector<8x128xf32> -> vector<8x128xf32>
    %c16_140 = arith.constant 16 : index
    %c0_141 = arith.constant 0 : index
    %411 = vector.load %arg12[%c16_140, %c0_141] : memref<64x128xf32, #tpu.memory_space<vmem>>, vector<8x128xf32>
    %412 = arith.addf %411, %410 : vector<8x128xf32>
    %413 = arith.mulf %412, %9 : vector<8x128xf32>
    %414 = math.tanh %413 : vector<8x128xf32>
    %cst_142 = arith.constant 5.000000e-01 : f32
    %415 = vector.broadcast %cst_142 : f32 to vector<8x128xf32>
    %416 = arith.mulf %415, %414 : vector<8x128xf32>
    %cst_143 = arith.constant 5.000000e-01 : f32
    %417 = vector.broadcast %cst_143 : f32 to vector<8x128xf32>
    %418 = arith.addf %416, %417 : vector<8x128xf32>
    %419 = vector.extract_strided_slice %418 {offsets = [0, 0], sizes = [8, 32], strides = [1, 1]} : vector<8x128xf32> to vector<8x32xf32>
    %420 = vector.extract_strided_slice %418 {offsets = [0, 32], sizes = [8, 32], strides = [1, 1]} : vector<8x128xf32> to vector<8x32xf32>
    %421 = vector.extract_strided_slice %414 {offsets = [0, 64], sizes = [8, 32], strides = [1, 1]} : vector<8x128xf32> to vector<8x32xf32>
    %422 = vector.extract_strided_slice %418 {offsets = [0, 96], sizes = [8, 32], strides = [1, 1]} : vector<8x128xf32> to vector<8x32xf32>
    %423 = arith.mulf %420, %407 : vector<8x32xf32>
    %424 = arith.mulf %419, %421 : vector<8x32xf32>
    %425 = arith.addf %423, %424 : vector<8x32xf32>
    %426 = math.tanh %425 : vector<8x32xf32>
    %427 = arith.mulf %422, %426 : vector<8x32xf32>
    %cst_144 = arith.constant dense<0.000000e+00> : vector<8x128xf32>
    %428 = tpu.matmul %427, %372, %cst_144 {dimension_numbers = #tpu.dot_dimension_numbers<[1], [0], [0], [1], [0, 0, 1, 1], [], []>} : vector<8x32xf32>, vector<32x128xf32>, vector<8x128xf32> -> vector<8x128xf32>
    %c24_145 = arith.constant 24 : index
    %c0_146 = arith.constant 0 : index
    %429 = vector.load %arg12[%c24_145, %c0_146] : memref<64x128xf32, #tpu.memory_space<vmem>>, vector<8x128xf32>
    %430 = arith.addf %429, %428 : vector<8x128xf32>
    %431 = arith.mulf %430, %9 : vector<8x128xf32>
    %432 = math.tanh %431 : vector<8x128xf32>
    %cst_147 = arith.constant 5.000000e-01 : f32
    %433 = vector.broadcast %cst_147 : f32 to vector<8x128xf32>
    %434 = arith.mulf %433, %432 : vector<8x128xf32>
    %cst_148 = arith.constant 5.000000e-01 : f32
    %435 = vector.broadcast %cst_148 : f32 to vector<8x128xf32>
    %436 = arith.addf %434, %435 : vector<8x128xf32>
    %437 = vector.extract_strided_slice %436 {offsets = [0, 0], sizes = [8, 32], strides = [1, 1]} : vector<8x128xf32> to vector<8x32xf32>
    %438 = vector.extract_strided_slice %436 {offsets = [0, 32], sizes = [8, 32], strides = [1, 1]} : vector<8x128xf32> to vector<8x32xf32>
    %439 = vector.extract_strided_slice %432 {offsets = [0, 64], sizes = [8, 32], strides = [1, 1]} : vector<8x128xf32> to vector<8x32xf32>
    %440 = vector.extract_strided_slice %436 {offsets = [0, 96], sizes = [8, 32], strides = [1, 1]} : vector<8x128xf32> to vector<8x32xf32>
    %441 = arith.mulf %438, %425 : vector<8x32xf32>
    %442 = arith.mulf %437, %439 : vector<8x32xf32>
    %443 = arith.addf %441, %442 : vector<8x32xf32>
    %444 = math.tanh %443 : vector<8x32xf32>
    %445 = arith.mulf %440, %444 : vector<8x32xf32>
    %cst_149 = arith.constant dense<0.000000e+00> : vector<8x128xf32>
    %446 = tpu.matmul %445, %372, %cst_149 {dimension_numbers = #tpu.dot_dimension_numbers<[1], [0], [0], [1], [0, 0, 1, 1], [], []>} : vector<8x32xf32>, vector<32x128xf32>, vector<8x128xf32> -> vector<8x128xf32>
    %c32_150 = arith.constant 32 : index
    %c0_151 = arith.constant 0 : index
    %447 = vector.load %arg12[%c32_150, %c0_151] : memref<64x128xf32, #tpu.memory_space<vmem>>, vector<8x128xf32>
    %448 = arith.addf %447, %446 : vector<8x128xf32>
    %449 = arith.mulf %448, %9 : vector<8x128xf32>
    %450 = math.tanh %449 : vector<8x128xf32>
    %cst_152 = arith.constant 5.000000e-01 : f32
    %451 = vector.broadcast %cst_152 : f32 to vector<8x128xf32>
    %452 = arith.mulf %451, %450 : vector<8x128xf32>
    %cst_153 = arith.constant 5.000000e-01 : f32
    %453 = vector.broadcast %cst_153 : f32 to vector<8x128xf32>
    %454 = arith.addf %452, %453 : vector<8x128xf32>
    %455 = vector.extract_strided_slice %454 {offsets = [0, 0], sizes = [8, 32], strides = [1, 1]} : vector<8x128xf32> to vector<8x32xf32>
    %456 = vector.extract_strided_slice %454 {offsets = [0, 32], sizes = [8, 32], strides = [1, 1]} : vector<8x128xf32> to vector<8x32xf32>
    %457 = vector.extract_strided_slice %450 {offsets = [0, 64], sizes = [8, 32], strides = [1, 1]} : vector<8x128xf32> to vector<8x32xf32>
    %458 = vector.extract_strided_slice %454 {offsets = [0, 96], sizes = [8, 32], strides = [1, 1]} : vector<8x128xf32> to vector<8x32xf32>
    %459 = arith.mulf %456, %443 : vector<8x32xf32>
    %460 = arith.mulf %455, %457 : vector<8x32xf32>
    %461 = arith.addf %459, %460 : vector<8x32xf32>
    %462 = math.tanh %461 : vector<8x32xf32>
    %463 = arith.mulf %458, %462 : vector<8x32xf32>
    %cst_154 = arith.constant dense<0.000000e+00> : vector<8x128xf32>
    %464 = tpu.matmul %463, %372, %cst_154 {dimension_numbers = #tpu.dot_dimension_numbers<[1], [0], [0], [1], [0, 0, 1, 1], [], []>} : vector<8x32xf32>, vector<32x128xf32>, vector<8x128xf32> -> vector<8x128xf32>
    %c40_155 = arith.constant 40 : index
    %c0_156 = arith.constant 0 : index
    %465 = vector.load %arg12[%c40_155, %c0_156] : memref<64x128xf32, #tpu.memory_space<vmem>>, vector<8x128xf32>
    %466 = arith.addf %465, %464 : vector<8x128xf32>
    %467 = arith.mulf %466, %9 : vector<8x128xf32>
    %468 = math.tanh %467 : vector<8x128xf32>
    %cst_157 = arith.constant 5.000000e-01 : f32
    %469 = vector.broadcast %cst_157 : f32 to vector<8x128xf32>
    %470 = arith.mulf %469, %468 : vector<8x128xf32>
    %cst_158 = arith.constant 5.000000e-01 : f32
    %471 = vector.broadcast %cst_158 : f32 to vector<8x128xf32>
    %472 = arith.addf %470, %471 : vector<8x128xf32>
    %473 = vector.extract_strided_slice %472 {offsets = [0, 0], sizes = [8, 32], strides = [1, 1]} : vector<8x128xf32> to vector<8x32xf32>
    %474 = vector.extract_strided_slice %472 {offsets = [0, 32], sizes = [8, 32], strides = [1, 1]} : vector<8x128xf32> to vector<8x32xf32>
    %475 = vector.extract_strided_slice %468 {offsets = [0, 64], sizes = [8, 32], strides = [1, 1]} : vector<8x128xf32> to vector<8x32xf32>
    %476 = vector.extract_strided_slice %472 {offsets = [0, 96], sizes = [8, 32], strides = [1, 1]} : vector<8x128xf32> to vector<8x32xf32>
    %477 = arith.mulf %474, %461 : vector<8x32xf32>
    %478 = arith.mulf %473, %475 : vector<8x32xf32>
    %479 = arith.addf %477, %478 : vector<8x32xf32>
    %480 = math.tanh %479 : vector<8x32xf32>
    %481 = arith.mulf %476, %480 : vector<8x32xf32>
    %cst_159 = arith.constant dense<0.000000e+00> : vector<8x128xf32>
    %482 = tpu.matmul %481, %372, %cst_159 {dimension_numbers = #tpu.dot_dimension_numbers<[1], [0], [0], [1], [0, 0, 1, 1], [], []>} : vector<8x32xf32>, vector<32x128xf32>, vector<8x128xf32> -> vector<8x128xf32>
    %c48_160 = arith.constant 48 : index
    %c0_161 = arith.constant 0 : index
    %483 = vector.load %arg12[%c48_160, %c0_161] : memref<64x128xf32, #tpu.memory_space<vmem>>, vector<8x128xf32>
    %484 = arith.addf %483, %482 : vector<8x128xf32>
    %485 = arith.mulf %484, %9 : vector<8x128xf32>
    %486 = math.tanh %485 : vector<8x128xf32>
    %cst_162 = arith.constant 5.000000e-01 : f32
    %487 = vector.broadcast %cst_162 : f32 to vector<8x128xf32>
    %488 = arith.mulf %487, %486 : vector<8x128xf32>
    %cst_163 = arith.constant 5.000000e-01 : f32
    %489 = vector.broadcast %cst_163 : f32 to vector<8x128xf32>
    %490 = arith.addf %488, %489 : vector<8x128xf32>
    %491 = vector.extract_strided_slice %490 {offsets = [0, 0], sizes = [8, 32], strides = [1, 1]} : vector<8x128xf32> to vector<8x32xf32>
    %492 = vector.extract_strided_slice %490 {offsets = [0, 32], sizes = [8, 32], strides = [1, 1]} : vector<8x128xf32> to vector<8x32xf32>
    %493 = vector.extract_strided_slice %486 {offsets = [0, 64], sizes = [8, 32], strides = [1, 1]} : vector<8x128xf32> to vector<8x32xf32>
    %494 = vector.extract_strided_slice %490 {offsets = [0, 96], sizes = [8, 32], strides = [1, 1]} : vector<8x128xf32> to vector<8x32xf32>
    %495 = arith.mulf %492, %479 : vector<8x32xf32>
    %496 = arith.mulf %491, %493 : vector<8x32xf32>
    %497 = arith.addf %495, %496 : vector<8x32xf32>
    %498 = math.tanh %497 : vector<8x32xf32>
    %499 = arith.mulf %494, %498 : vector<8x32xf32>
    %cst_164 = arith.constant dense<0.000000e+00> : vector<8x128xf32>
    %500 = tpu.matmul %499, %372, %cst_164 {dimension_numbers = #tpu.dot_dimension_numbers<[1], [0], [0], [1], [0, 0, 1, 1], [], []>} : vector<8x32xf32>, vector<32x128xf32>, vector<8x128xf32> -> vector<8x128xf32>
    %c56_165 = arith.constant 56 : index
    %c0_166 = arith.constant 0 : index
    %501 = vector.load %arg12[%c56_165, %c0_166] : memref<64x128xf32, #tpu.memory_space<vmem>>, vector<8x128xf32>
    %502 = arith.addf %501, %500 : vector<8x128xf32>
    %503 = arith.mulf %502, %9 : vector<8x128xf32>
    %504 = math.tanh %503 : vector<8x128xf32>
    %cst_167 = arith.constant 5.000000e-01 : f32
    %505 = vector.broadcast %cst_167 : f32 to vector<8x128xf32>
    %506 = arith.mulf %505, %504 : vector<8x128xf32>
    %cst_168 = arith.constant 5.000000e-01 : f32
    %507 = vector.broadcast %cst_168 : f32 to vector<8x128xf32>
    %508 = arith.addf %506, %507 : vector<8x128xf32>
    %509 = vector.extract_strided_slice %508 {offsets = [0, 0], sizes = [8, 32], strides = [1, 1]} : vector<8x128xf32> to vector<8x32xf32>
    %510 = vector.extract_strided_slice %508 {offsets = [0, 32], sizes = [8, 32], strides = [1, 1]} : vector<8x128xf32> to vector<8x32xf32>
    %511 = vector.extract_strided_slice %504 {offsets = [0, 64], sizes = [8, 32], strides = [1, 1]} : vector<8x128xf32> to vector<8x32xf32>
    %512 = vector.extract_strided_slice %508 {offsets = [0, 96], sizes = [8, 32], strides = [1, 1]} : vector<8x128xf32> to vector<8x32xf32>
    %513 = arith.mulf %510, %497 : vector<8x32xf32>
    %514 = arith.mulf %509, %511 : vector<8x32xf32>
    %515 = arith.addf %513, %514 : vector<8x32xf32>
    %516 = math.tanh %515 : vector<8x32xf32>
    %517 = arith.mulf %512, %516 : vector<8x32xf32>
    %c0_169 = arith.constant 0 : index
    %c0_170 = arith.constant 0 : index
    %518 = vector.load %arg8[%c0_169, %c0_170] : memref<32x8xf32, #tpu.memory_space<vmem>>, vector<32x8xf32>
    %cst_171 = arith.constant dense<0.000000e+00> : vector<8x8xf32>
    %519 = tpu.matmul %517, %518, %cst_171 {dimension_numbers = #tpu.dot_dimension_numbers<[1], [0], [0], [1], [0, 0, 1, 1], [], []>} : vector<8x32xf32>, vector<32x8xf32>, vector<8x8xf32> -> vector<8x8xf32>
    %c0_172 = arith.constant 0 : index
    %c0_173 = arith.constant 0 : index
    %520 = vector.load %arg9[%c0_172, %c0_173] : memref<1x8xf32, #tpu.memory_space<vmem>>, vector<1x8xf32>
    %521 = vector.broadcast %520 : vector<1x8xf32> to vector<8x8xf32>
    %522 = arith.addf %519, %521 : vector<8x8xf32>
    %c0_174 = arith.constant 0 : index
    %c0_175 = arith.constant 0 : index
    %523 = vector.load %arg11[%c0_174, %c0_175] : memref<8x8xf32, #tpu.memory_space<vmem>>, vector<8x8xf32>
    tpu.vector_store %arg11[%c0_174, %c0_175], %522 {strides = array<i32>} : memref<8x8xf32, #tpu.memory_space<vmem>>, vector<8x8xf32>,
    return
  }
}

</mosaic_0001>

<llo_original>
// kernel: tpu_custom_call.1
$region0: #{tpu_custom_call.1}
  #allocation0 [shape = 'u32[]', space=smem, size = 0x4, offset = 0x4, fixed_abs, tag = 'smem constant byte address 0x4 - core index']
  #allocation1 [shape = 'u32[144,128]{1,0:T(1,128)}', space=vmem, size = 0x12000, scoped, tag = 'internal scratch']
  #allocation2 [shape = 'f32[64,128]{1,0:T(8,128)}', space=vmem, size = 0x8000, scoped, tag = 'scratch operand']
  %s0 = inlined_call_operand.vmem [shape: f32[64,16], index: 0, kind: input, shape index: {}]
  %s1 = inlined_call_operand.hbm [shape: f32[16,128], index: 1, kind: input, shape index: {}]
  %s2 = inlined_call_operand.vmem [shape: f32[1,128], index: 2, kind: input, shape index: {}]
  %s3 = inlined_call_operand.vmem [shape: f32[32,256], index: 3, kind: input, shape index: {}]
  %s4 = inlined_call_operand.vmem [shape: f32[1,128], index: 4, kind: input, shape index: {}]
  %s5 = inlined_call_operand.vmem [shape: f32[32,256], index: 5, kind: input, shape index: {}]
  %s6 = inlined_call_operand.vmem [shape: f32[1,128], index: 6, kind: input, shape index: {}]
  %s7 = inlined_call_operand.hbm [shape: f32[32,128], index: 7, kind: input, shape index: {}]
  %s8 = inlined_call_operand.vmem [shape: f32[32,8], index: 8, kind: input, shape index: {}]
  %s9 = inlined_call_operand.vmem [shape: f32[1,8], index: 9, kind: input, shape index: {}]
  %s10 = inlined_call_operand.vmem [shape: f32[1,128], index: 10, kind: input, shape index: {}]
  %s11 = inlined_call_operand.hbm [shape: f32[8,8], index: 11, kind: output, shape index: {}]
  %s12 = sld [smem:[#allocation0]]
  $region62: #{tpu_custom_call.1} parent=0
    _
  %s14 = ssub.s32 1, %s12
  %s15 = scalar_select 0, %s14, %s12
  $region1: #{tpu_custom_call.1} parent=0
    #allocation3 [shape = 'u8[8192]{0}', space=vmem, size = 0x2000, scoped, tag = 'input window, operand 1, single buffered']
    #allocation4 [shape = 's32[1]{0}', space=sflag, size = 0x4, scoped, tag = 'scoped memory for tpu_custom_call.1']
    #allocation5 [shape = 's32[1]{0}', space=sflag, size = 0x4, scoped, tag = 'scoped memory for tpu_custom_call.1']
    #allocation6 [shape = 'u8[16384]{0}', space=vmem, size = 0x4000, scoped, tag = 'input window, operand 7, single buffered']
    #allocation7 [shape = 's32[1]{0}', space=sflag, size = 0x4, scoped, tag = 'scoped memory for tpu_custom_call.1']
    #allocation8 [shape = 'u8[4096]{0}', space=vmem, size = 0x1000, scoped, tag = 'output window, operand 0, single buffered']
    %16 = vsyncpa [#allocation4], 0
    %17 = vsyncpa [#allocation7], 0
    %18 = vsyncpa [#allocation5], 0
    // Predicated region
    $region2: #{tpu_custom_call.1} parent=1 // pred_check
      _
    $region3: #{tpu_custom_call.1} parent=1 // pred_check_branch
      %20 = sbr.rel (0) target = $region5
    $region4: #{tpu_custom_call.1} parent=1 // pred_region
      _
    $region5: #{tpu_custom_call.1} parent=1 // pred_fallthru
      _
    // Predicated region
    $region6: #{tpu_custom_call.1} parent=1 // pred_check
      _
    $region7: #{tpu_custom_call.1} parent=1 // pred_check_branch
      %22 = sbr.rel (0) target = $region9
    $region8: #{tpu_custom_call.1} parent=1 // pred_region
      %s24 = ssub.s32 256, 256
      %25 = vsyncadd [#allocation4], %s24
      %s26 = sshll.u32 [#allocation3], 4
      %s27 = int_to_ptr.vmem [resolvable:$true] %s26
      %32 = dma.hbm_to_vmem [thread:$0]  %s1, 256, %s27, [#allocation4], 128, 128, 8
    $region9: #{tpu_custom_call.1} parent=1 // pred_fallthru
      _
    // Predicated region
    $region10: #{tpu_custom_call.1} parent=1 // pred_check
      _
    $region11: #{tpu_custom_call.1} parent=1 // pred_check_branch
      %34 = sbr.rel (0) target = $region13
    $region12: #{tpu_custom_call.1} parent=1 // pred_region
      _
    $region13: #{tpu_custom_call.1} parent=1 // pred_fallthru
      _
    // Predicated region
    $region14: #{tpu_custom_call.1} parent=1 // pred_check
      _
    $region15: #{tpu_custom_call.1} parent=1 // pred_check_branch
      %36 = sbr.rel (0) target = $region17
    $region16: #{tpu_custom_call.1} parent=1 // pred_region
      _
    $region17: #{tpu_custom_call.1} parent=1 // pred_fallthru
      _
    // Predicated region
    $region18: #{tpu_custom_call.1} parent=1 // pred_check
      _
    $region19: #{tpu_custom_call.1} parent=1 // pred_check_branch
      %38 = sbr.rel (0) target = $region21
    $region20: #{tpu_custom_call.1} parent=1 // pred_region
      _
    $region21: #{tpu_custom_call.1} parent=1 // pred_fallthru
      _
    // Predicated region
    $region22: #{tpu_custom_call.1} parent=1 // pred_check
      _
    $region23: #{tpu_custom_call.1} parent=1 // pred_check_branch
      %40 = sbr.rel (0) target = $region25
    $region24: #{tpu_custom_call.1} parent=1 // pred_region
      _
    $region25: #{tpu_custom_call.1} parent=1 // pred_fallthru
      _
    // Predicated region
    $region26: #{tpu_custom_call.1} parent=1 // pred_check
      _
    $region27: #{tpu_custom_call.1} parent=1 // pred_check_branch
      %42 = sbr.rel (0) target = $region29
    $region28: #{tpu_custom_call.1} parent=1 // pred_region
      _
    $region29: #{tpu_custom_call.1} parent=1 // pred_fallthru
      _
    // Predicated region
    $region30: #{tpu_custom_call.1} parent=1 // pred_check
      _
    $region31: #{tpu_custom_call.1} parent=1 // pred_check_branch
      %44 = sbr.rel (0) target = $region33
    $region32: #{tpu_custom_call.1} parent=1 // pred_region
      %s46 = ssub.s32 512, 512
      %47 = vsyncadd [#allocation7], %s46
      %s48 = sshll.u32 [#allocation6], 4
      %s49 = int_to_ptr.vmem [resolvable:$true] %s48
      %54 = dma.hbm_to_vmem [thread:$0]  %s7, 512, %s49, [#allocation7], 128, 128, 8
    $region33: #{tpu_custom_call.1} parent=1 // pred_fallthru
      _
    // Predicated region
    $region34: #{tpu_custom_call.1} parent=1 // pred_check
      _
    $region35: #{tpu_custom_call.1} parent=1 // pred_check_branch
      %56 = sbr.rel (0) target = $region37
    $region36: #{tpu_custom_call.1} parent=1 // pred_region
      _
    $region37: #{tpu_custom_call.1} parent=1 // pred_fallthru
      _
    // Predicated region
    $region38: #{tpu_custom_call.1} parent=1 // pred_check
      _
    $region39: #{tpu_custom_call.1} parent=1 // pred_check_branch
      %58 = sbr.rel (0) target = $region41
    $region40: #{tpu_custom_call.1} parent=1 // pred_region
      _
    $region41: #{tpu_custom_call.1} parent=1 // pred_fallthru
      _
    // Predicated region
    $region42: #{tpu_custom_call.1} parent=1 // pred_check
      _
    $region43: #{tpu_custom_call.1} parent=1 // pred_check_branch
      %60 = sbr.rel (0) target = $region45
    $region44: #{tpu_custom_call.1} parent=1 // pred_region
      _
    $region45: #{tpu_custom_call.1} parent=1 // pred_fallthru
      _
    // Predicated region
    $region46: #{tpu_custom_call.1} parent=1 // pred_check
      _
    $region47: #{tpu_custom_call.1} parent=1 // pred_check_branch
      %62 = sbr.rel (0) target = $region49
    $region48: #{tpu_custom_call.1} parent=1 // pred_region
      %63 = dma.done [#allocation4], 256
    $region49: #{tpu_custom_call.1} parent=1 // pred_fallthru
      _
    // Predicated region
    $region50: #{tpu_custom_call.1} parent=1 // pred_check
      _
    $region51: #{tpu_custom_call.1} parent=1 // pred_check_branch
      %65 = sbr.rel (0) target = $region53
    $region52: #{tpu_custom_call.1} parent=1 // pred_region
      %66 = dma.done [#allocation7], 512
    $region53: #{tpu_custom_call.1} parent=1 // pred_fallthru
      _
    %v67 = vld [vmem:[%s0] sm:$0xff]
    %v68 = vld [vmem:[%s0 + $0x8] sm:$0xff]
    %v69 = vld [vmem:[%s0 + $0x10] sm:$0xff]
    %v70 = vld [vmem:[%s0 + $0x18] sm:$0xff]
    %v71 = vld [vmem:[%s0 + $0x20] sm:$0xff]
    %v72 = vld [vmem:[%s0 + $0x28] sm:$0xff]
    %v73 = vld [vmem:[%s0 + $0x30] sm:$0xff]
    %v74 = vld [vmem:[%s0 + $0x38] sm:$0xff]
    %v75 = vld [vmem:[#allocation3] sm:$0xff]
    %v76 = vld [vmem:[#allocation3 + $0x8] sm:$0xff]
    %v77 = vld [vmem:[%s2] sm:$0x1]
    %v79 = vlaneseq
    %v80 = vshrl.u32 %v79, 7
    %v81 = vsub.s32 0, %v80
    %v82 = vrot.slane %v77, %v81
    %vm84 = vcmask 130048
    %v86 = vsel %vm84, %v67, 0
    %v89 = vsel %vm84, %v68, 0
    %v92 = vsel %vm84, %v69, 0
    %v95 = vsel %vm84, %v70, 0
    %v98 = vsel %vm84, %v71, 0
    %v101 = vsel %vm84, %v72, 0
    %v104 = vsel %vm84, %v73, 0
    %v107 = vsel %vm84, %v74, 0
    %109 = vmatprep.subr.mxu0 0.0
    %110 = vmatpush1.msra.mxu0 %v75
    %111 = vmatprep.subr.mxu0 0.0
    %112 = vmatpush1.msra.mxu0 %v76
    %113 = vmatprep.subr.mxu0 0.0
    %114 = vmatpush1.msra.mxu0 0.0
    %115 = vmatprep.subr.mxu0 0.0
    %116 = vmatpush1.msra.mxu0 0.0
    %117 = vmatprep.subr.mxu0 0.0
    %118 = vmatpush1.msra.mxu0 0.0
    %119 = vmatprep.subr.mxu0 0.0
    %120 = vmatpush1.msra.mxu0 0.0
    %121 = vmatprep.subr.mxu0 0.0
    %122 = vmatpush1.msra.mxu0 0.0
    %123 = vmatprep.subr.mxu0 0.0
    %124 = vmatpush1.msra.mxu0 0.0
    %125 = vmatprep.subr.mxu0 0.0
    %126 = vmatpush1.msra.mxu0 0.0
    %127 = vmatprep.subr.mxu0 0.0
    %128 = vmatpush1.msra.mxu0 0.0
    %129 = vmatprep.subr.mxu0 0.0
    %130 = vmatpush1.msra.mxu0 0.0
    %131 = vmatprep.subr.mxu0 0.0
    %132 = vmatpush1.msra.mxu0 0.0
    %133 = vmatprep.subr.mxu0 0.0
    %134 = vmatpush1.msra.mxu0 0.0
    %135 = vmatprep.subr.mxu0 0.0
    %136 = vmatpush1.msra.mxu0 0.0
    %137 = vmatprep.subr.mxu0 0.0
    %138 = vmatpush1.msra.mxu0 0.0
    %139 = vmatprep.subr.mxu0 0.0
    %140 = vmatpush1.msra.mxu0 0.0
    %141 = vmatprep.subr.mxu0 0.0
    %142 = vmatpush1.msra.mxu0 0.0
    %143 = vmatprep.subr.mxu0 0.0
    %144 = vmatpush1.msra.mxu0 0.0
    %145 = vmatprep.subr.mxu0 0.0
    %146 = vmatpush1.msra.mxu0 0.0
    %147 = vmatprep.subr.mxu0 0.0
    %148 = vmatpush1.msra.mxu0 0.0
    %149 = vmatprep.subr.mxu0 0.0
    %150 = vmatpush1.msra.mxu0 0.0
    %151 = vmatprep.subr.mxu0 0.0
    %152 = vmatpush1.msra.mxu0 0.0
    %153 = vmatprep.subr.mxu0 0.0
    %154 = vmatpush1.msra.mxu0 0.0
    %155 = vmatprep.subr.mxu0 0.0
    %156 = vmatpush1.msra.mxu0 0.0
    %157 = vmatprep.subr.mxu0 0.0
    %158 = vmatpush1.msra.mxu0 0.0
    %159 = vmatprep.subr.mxu0 0.0
    %160 = vmatpush1.msra.mxu0 0.0
    %161 = vmatprep.subr.mxu0 0.0
    %162 = vmatpush1.msra.mxu0 0.0
    %163 = vmatprep.subr.mxu0 0.0
    %164 = vmatpush1.msra.mxu0 0.0
    %165 = vmatprep.subr.mxu0 0.0
    %166 = vmatpush1.msra.mxu0 0.0
    %167 = vmatprep.subr.mxu0 0.0
    %168 = vmatpush1.msra.mxu0 0.0
    %169 = vmatprep.subr.mxu0 0.0
    %170 = vmatpush1.msra.mxu0 0.0
    %171 = vmatprep.subr.mxu0 0.0
    %172 = vmatpush1.msra.mxu0 0.0
    %173 = vmatprep.mubr.f32.mxu0 0.0
    %174 = vmatmul.mubr.f32.gmra.mrb[0].mxu0 %v86
    %v175 = vpop.f32.mrb[0].mxu0
    %v176 = vadd.f32 %v82, %v175
    %v177 = vpop.f32.mrb[0].mxu0
    %178 = vmatprep.mubr.f32.mxu0 0.0
    %179 = vmatmul.mubr.f32.gmra.mrb[0].mxu0 %v89
    %v180 = vpop.f32.mrb[0].mxu0
    %v181 = vadd.f32 %v82, %v180
    %v182 = vpop.f32.mrb[0].mxu0
    %183 = vmatprep.mubr.f32.mxu0 0.0
    %184 = vmatmul.mubr.f32.gmra.mrb[0].mxu0 %v92
    %v185 = vpop.f32.mrb[0].mxu0
    %v186 = vadd.f32 %v82, %v185
    %v187 = vpop.f32.mrb[0].mxu0
    %188 = vmatprep.mubr.f32.mxu0 0.0
    %189 = vmatmul.mubr.f32.gmra.mrb[0].mxu0 %v95
    %v190 = vpop.f32.mrb[0].mxu0
    %v191 = vadd.f32 %v82, %v190
    %v192 = vpop.f32.mrb[0].mxu0
    %193 = vmatprep.mubr.f32.mxu0 0.0
    %194 = vmatmul.mubr.f32.gmra.mrb[0].mxu0 %v98
    %v195 = vpop.f32.mrb[0].mxu0
    %v196 = vadd.f32 %v82, %v195
    %v197 = vpop.f32.mrb[0].mxu0
    %198 = vmatprep.mubr.f32.mxu0 0.0
    %199 = vmatmul.mubr.f32.gmra.mrb[0].mxu0 %v101
    %v200 = vpop.f32.mrb[0].mxu0
    %v201 = vadd.f32 %v82, %v200
    %v202 = vpop.f32.mrb[0].mxu0
    %203 = vmatprep.mubr.f32.mxu0 0.0
    %204 = vmatmul.mubr.f32.gmra.mrb[0].mxu0 %v104
    %v205 = vpop.f32.mrb[0].mxu0
    %v206 = vadd.f32 %v82, %v205
    %v207 = vpop.f32.mrb[0].mxu0
    %208 = vmatprep.mubr.f32.mxu0 0.0
    %209 = vmatmul.mubr.f32.gmra.mrb[0].mxu0 %v107
    %v210 = vpop.f32.mrb[0].mxu0
    %v211 = vadd.f32 %v82, %v210
    %v212 = vpop.f32.mrb[0].mxu0
    %213 = vdwg.mxu0
    %214 = vst [vmem:[#allocation2] sm:$0xff] %v176
    %215 = vst [vmem:[#allocation2 + $0x8] sm:$0xff] %v181
    %216 = vst [vmem:[#allocation2 + $0x10] sm:$0xff] %v186
    %217 = vst [vmem:[#allocation2 + $0x18] sm:$0xff] %v191
    %218 = vst [vmem:[#allocation2 + $0x20] sm:$0xff] %v196
    %219 = vst [vmem:[#allocation2 + $0x28] sm:$0xff] %v201
    %220 = vst [vmem:[#allocation2 + $0x30] sm:$0xff] %v206
    %221 = vst [vmem:[#allocation2 + $0x38] sm:$0xff] %v211
    %v222 = vld [vmem:[%s10] sm:$0x1]
    %v224 = vlaneseq
    %v225 = vshrl.u32 %v224, 7
    %v226 = vsub.s32 0, %v225
    %v227 = vrot.slane %v222, %v226
    %v229 = vld [vmem:[%s3] sm:$0xff]
    %v230 = vld [vmem:[%s3 + $0x8] sm:$0xff]
    %v231 = vld [vmem:[%s3 + $0x10] sm:$0xff]
    %v232 = vld [vmem:[%s3 + $0x18] sm:$0xff]
    %v233 = vld [vmem:[%s3 + $0x20] sm:$0xff]
    %v234 = vld [vmem:[%s3 + $0x28] sm:$0xff]
    %v235 = vld [vmem:[%s3 + $0x30] sm:$0xff]
    %v236 = vld [vmem:[%s3 + $0x38] sm:$0xff]
    %v237 = vld [vmem:[%s4] sm:$0x1]
    %v239 = vlaneseq
    %v240 = vshrl.u32 %v239, 7
    %v241 = vsub.s32 0, %v240
    %v242 = vrot.slane %v237, %v241
    %v244 = vld [vmem:[#allocation2] sm:$0xff]
    %v245 = vadd.f32 %v244, 0.0
    %v246 = vmul.f32 %v245, %v227
    %v247 = vtanh.pop %v246
    %v248 = vmul.f32 %v247, 0.5
    %v249 = vadd.f32 %v248, 0.5
    %v250 = vmul.f32 %v249, 0.0
    %252 = vrot.lane.b32.xlu0 %v247, 64
    %v253 = vpop.permute.xlu0 %252
    %v255 = vmul.f32 %v249, %v253
    %257 = vrot.lane.b32.xlu0 %v255, 32
    %v258 = vpop.permute.xlu0 %257
    %v260 = vadd.f32 %v250, %v258
    %v261 = vtanh.pop %v260
    %263 = vrot.lane.b32.xlu0 %v261, 64
    %v264 = vpop.permute.xlu0 %263
    %v266 = vmul.f32 %v249, %v264
    %268 = vrot.lane.b32.xlu0 %v266, 32
    %v269 = vpop.permute.xlu0 %268
    %vm270 = vcmask 261120
    %v271 = vsel %vm270, %v269, 0
    %273 = vmatprep.subr.mxu0 %v230
    %274 = vmatpush1.msra.mxu0 %v229
    %275 = vmatprep.subr.mxu0 %v232
    %276 = vmatpush1.msra.mxu0 %v231
    %277 = vmatprep.subr.mxu0 %v234
    %278 = vmatpush1.msra.mxu0 %v233
    %279 = vmatprep.subr.mxu0 %v236
    %280 = vmatpush1.msra.mxu0 %v235
    %281 = vmatprep.subr.mxu0 0.0
    %282 = vmatpush1.msra.mxu0 0.0
    %283 = vmatprep.subr.mxu0 0.0
    %284 = vmatpush1.msra.mxu0 0.0
    %285 = vmatprep.subr.mxu0 0.0
    %286 = vmatpush1.msra.mxu0 0.0
    %287 = vmatprep.subr.mxu0 0.0
    %288 = vmatpush1.msra.mxu0 0.0
    %289 = vmatprep.subr.mxu0 0.0
    %290 = vmatpush1.msra.mxu0 0.0
    %291 = vmatprep.subr.mxu0 0.0
    %292 = vmatpush1.msra.mxu0 0.0
    %293 = vmatprep.subr.mxu0 0.0
    %294 = vmatpush1.msra.mxu0 0.0
    %295 = vmatprep.subr.mxu0 0.0
    %296 = vmatpush1.msra.mxu0 0.0
    %297 = vmatprep.subr.mxu0 0.0
    %298 = vmatpush1.msra.mxu0 0.0
    %299 = vmatprep.subr.mxu0 0.0
    %300 = vmatpush1.msra.mxu0 0.0
    %301 = vmatprep.subr.mxu0 0.0
    %302 = vmatpush1.msra.mxu0 0.0
    %303 = vmatprep.subr.mxu0 0.0
    %304 = vmatpush1.msra.mxu0 0.0
    %305 = vmatprep.subr.mxu0 0.0
    %306 = vmatpush1.msra.mxu0 0.0
    %307 = vmatprep.subr.mxu0 0.0
    %308 = vmatpush1.msra.mxu0 0.0
    %309 = vmatprep.subr.mxu0 0.0
    %310 = vmatpush1.msra.mxu0 0.0
    %311 = vmatprep.subr.mxu0 0.0
    %312 = vmatpush1.msra.mxu0 0.0
    %313 = vmatprep.subr.mxu0 0.0
    %314 = vmatpush1.msra.mxu0 0.0
    %315 = vmatprep.subr.mxu0 0.0
    %316 = vmatpush1.msra.mxu0 0.0
    %317 = vmatprep.subr.mxu0 0.0
    %318 = vmatpush1.msra.mxu0 0.0
    %319 = vmatprep.subr.mxu0 0.0
    %320 = vmatpush1.msra.mxu0 0.0
    %321 = vmatprep.subr.mxu0 0.0
    %322 = vmatpush1.msra.mxu0 0.0
    %323 = vmatprep.subr.mxu0 0.0
    %324 = vmatpush1.msra.mxu0 0.0
    %325 = vmatprep.subr.mxu0 0.0
    %326 = vmatpush1.msra.mxu0 0.0
    %327 = vmatprep.subr.mxu0 0.0
    %328 = vmatpush1.msra.mxu0 0.0
    %329 = vmatprep.subr.mxu0 0.0
    %330 = vmatpush1.msra.mxu0 0.0
    %331 = vmatprep.subr.mxu0 0.0
    %332 = vmatpush1.msra.mxu0 0.0
    %333 = vmatprep.subr.mxu0 0.0
    %334 = vmatpush1.msra.mxu0 0.0
    %335 = vmatprep.subr.mxu0 0.0
    %336 = vmatpush1.msra.mxu0 0.0
    %337 = vmatprep.mubr.f32.mxu0 0.0
    %338 = vmatmul.mubr.f32.gmra.mrb[0].mxu0 %v271
    %v339 = vpop.f32.mrb[0].mxu0
    %v340 = vadd.f32 0.0, %v339
    %v341 = vpop.f32.mrb[0].mxu0
    %v342 = vadd.f32 0.0, %v341
    %343 = vdwg.mxu0
    %v344 = vadd.f32 %v342, %v242
    %345 = vst [vmem:[#allocation2] sm:$0xff] %v344
    %v346 = vld [vmem:[#allocation2 + $0x8] sm:$0xff]
    %v347 = vadd.f32 %v346, %v340
    %v348 = vmul.f32 %v347, %v227
    %v349 = vtanh.pop %v348
    %v350 = vmul.f32 %v349, 0.5
    %v351 = vadd.f32 %v350, 0.5
    %v352 = vmul.f32 %v351, %v260
    %354 = vrot.lane.b32.xlu0 %v349, 64
    %v355 = vpop.permute.xlu0 %354
    %v357 = vmul.f32 %v351, %v355
    %359 = vrot.lane.b32.xlu0 %v357, 32
    %v360 = vpop.permute.xlu0 %359
    %v362 = vadd.f32 %v352, %v360
    %v363 = vtanh.pop %v362
    %365 = vrot.lane.b32.xlu0 %v363, 64
    %v366 = vpop.permute.xlu0 %365
    %v368 = vmul.f32 %v351, %v366
    %370 = vrot.lane.b32.xlu0 %v368, 32
    %v371 = vpop.permute.xlu0 %370
    %v372 = vsel %vm270, %v371, 0
    %374 = vmatprep.subr.mxu0 %v230
    %375 = vmatpush1.msra.mxu0 %v229
    %376 = vmatprep.subr.mxu0 %v232
    %377 = vmatpush1.msra.mxu0 %v231
    %378 = vmatprep.subr.mxu0 %v234
    %379 = vmatpush1.msra.mxu0 %v233
    %380 = vmatprep.subr.mxu0 %v236
    %381 = vmatpush1.msra.mxu0 %v235
    %382 = vmatprep.subr.mxu0 0.0
    %383 = vmatpush1.msra.mxu0 0.0
    %384 = vmatprep.subr.mxu0 0.0
    %385 = vmatpush1.msra.mxu0 0.0
    %386 = vmatprep.subr.mxu0 0.0
    %387 = vmatpush1.msra.mxu0 0.0
    %388 = vmatprep.subr.mxu0 0.0
    %389 = vmatpush1.msra.mxu0 0.0
    %390 = vmatprep.subr.mxu0 0.0
    %391 = vmatpush1.msra.mxu0 0.0
    %392 = vmatprep.subr.mxu0 0.0
    %393 = vmatpush1.msra.mxu0 0.0
    %394 = vmatprep.subr.mxu0 0.0
    %395 = vmatpush1.msra.mxu0 0.0
    %396 = vmatprep.subr.mxu0 0.0
    %397 = vmatpush1.msra.mxu0 0.0
    %398 = vmatprep.subr.mxu0 0.0
    %399 = vmatpush1.msra.mxu0 0.0
    %400 = vmatprep.subr.mxu0 0.0
    %401 = vmatpush1.msra.mxu0 0.0
    %402 = vmatprep.subr.mxu0 0.0
    %403 = vmatpush1.msra.mxu0 0.0
    %404 = vmatprep.subr.mxu0 0.0
    %405 = vmatpush1.msra.mxu0 0.0
    %406 = vmatprep.subr.mxu0 0.0
    %407 = vmatpush1.msra.mxu0 0.0
    %408 = vmatprep.subr.mxu0 0.0
    %409 = vmatpush1.msra.mxu0 0.0
    %410 = vmatprep.subr.mxu0 0.0
    %411 = vmatpush1.msra.mxu0 0.0
    %412 = vmatprep.subr.mxu0 0.0
    %413 = vmatpush1.msra.mxu0 0.0
    %414 = vmatprep.subr.mxu0 0.0
    %415 = vmatpush1.msra.mxu0 0.0
    %416 = vmatprep.subr.mxu0 0.0
    %417 = vmatpush1.msra.mxu0 0.0
    %418 = vmatprep.subr.mxu0 0.0
    %419 = vmatpush1.msra.mxu0 0.0
    %420 = vmatprep.subr.mxu0 0.0
    %421 = vmatpush1.msra.mxu0 0.0
    %422 = vmatprep.subr.mxu0 0.0
    %423 = vmatpush1.msra.mxu0 0.0
    %424 = vmatprep.subr.mxu0 0.0
    %425 = vmatpush1.msra.mxu0 0.0
    %426 = vmatprep.subr.mxu0 0.0
    %427 = vmatpush1.msra.mxu0 0.0
    %428 = vmatprep.subr.mxu0 0.0
    %429 = vmatpush1.msra.mxu0 0.0
    %430 = vmatprep.subr.mxu0 0.0
    %431 = vmatpush1.msra.mxu0 0.0
    %432 = vmatprep.subr.mxu0 0.0
    %433 = vmatpush1.msra.mxu0 0.0
    %434 = vmatprep.subr.mxu0 0.0
    %435 = vmatpush1.msra.mxu0 0.0
    %436 = vmatprep.subr.mxu0 0.0
    %437 = vmatpush1.msra.mxu0 0.0
    %438 = vmatprep.mubr.f32.mxu0 0.0
    %439 = vmatmul.mubr.f32.gmra.mrb[0].mxu0 %v372
    %v440 = vpop.f32.mrb[0].mxu0
    %v441 = vadd.f32 0.0, %v440
    %v442 = vpop.f32.mrb[0].mxu0
    %v443 = vadd.f32 0.0, %v442
    %444 = vdwg.mxu0
    %v445 = vadd.f32 %v443, %v242
    %446 = vst [vmem:[#allocation2 + $0x8] sm:$0xff] %v445
    %v447 = vld [vmem:[#allocation2 + $0x10] sm:$0xff]
    %v448 = vadd.f32 %v447, %v441
    %v449 = vmul.f32 %v448, %v227
    %v450 = vtanh.pop %v449
    %v451 = vmul.f32 %v450, 0.5
    %v452 = vadd.f32 %v451, 0.5
    %v453 = vmul.f32 %v452, %v362
    %455 = vrot.lane.b32.xlu0 %v450, 64
    %v456 = vpop.permute.xlu0 %455
    %v458 = vmul.f32 %v452, %v456
    %460 = vrot.lane.b32.xlu0 %v458, 32
    %v461 = vpop.permute.xlu0 %460
    %v463 = vadd.f32 %v453, %v461
    %v464 = vtanh.pop %v463
    %466 = vrot.lane.b32.xlu0 %v464, 64
    %v467 = vpop.permute.xlu0 %466
    %v469 = vmul.f32 %v452, %v467
    %471 = vrot.lane.b32.xlu0 %v469, 32
    %v472 = vpop.permute.xlu0 %471
    %v473 = vsel %vm270, %v472, 0
    %475 = vmatprep.subr.mxu0 %v230
    %476 = vmatpush1.msra.mxu0 %v229
    %477 = vmatprep.subr.mxu0 %v232
    %478 = vmatpush1.msra.mxu0 %v231
    %479 = vmatprep.subr.mxu0 %v234
    %480 = vmatpush1.msra.mxu0 %v233
    %481 = vmatprep.subr.mxu0 %v236
    %482 = vmatpush1.msra.mxu0 %v235
    %483 = vmatprep.subr.mxu0 0.0
    %484 = vmatpush1.msra.mxu0 0.0
    %485 = vmatprep.subr.mxu0 0.0
    %486 = vmatpush1.msra.mxu0 0.0
    %487 = vmatprep.subr.mxu0 0.0
    %488 = vmatpush1.msra.mxu0 0.0
    %489 = vmatprep.subr.mxu0 0.0
    %490 = vmatpush1.msra.mxu0 0.0
    %491 = vmatprep.subr.mxu0 0.0
    %492 = vmatpush1.msra.mxu0 0.0
    %493 = vmatprep.subr.mxu0 0.0
    %494 = vmatpush1.msra.mxu0 0.0
    %495 = vmatprep.subr.mxu0 0.0
    %496 = vmatpush1.msra.mxu0 0.0
    %497 = vmatprep.subr.mxu0 0.0
    %498 = vmatpush1.msra.mxu0 0.0
    %499 = vmatprep.subr.mxu0 0.0
    %500 = vmatpush1.msra.mxu0 0.0
    %501 = vmatprep.subr.mxu0 0.0
    %502 = vmatpush1.msra.mxu0 0.0
    %503 = vmatprep.subr.mxu0 0.0
    %504 = vmatpush1.msra.mxu0 0.0
    %505 = vmatprep.subr.mxu0 0.0
    %506 = vmatpush1.msra.mxu0 0.0
    %507 = vmatprep.subr.mxu0 0.0
    %508 = vmatpush1.msra.mxu0 0.0
    %509 = vmatprep.subr.mxu0 0.0
    %510 = vmatpush1.msra.mxu0 0.0
    %511 = vmatprep.subr.mxu0 0.0
    %512 = vmatpush1.msra.mxu0 0.0
    %513 = vmatprep.subr.mxu0 0.0
    %514 = vmatpush1.msra.mxu0 0.0
    %515 = vmatprep.subr.mxu0 0.0
    %516 = vmatpush1.msra.mxu0 0.0
    %517 = vmatprep.subr.mxu0 0.0
    %518 = vmatpush1.msra.mxu0 0.0
    %519 = vmatprep.subr.mxu0 0.0
    %520 = vmatpush1.msra.mxu0 0.0
    %521 = vmatprep.subr.mxu0 0.0
    %522 = vmatpush1.msra.mxu0 0.0
    %523 = vmatprep.subr.mxu0 0.0
    %524 = vmatpush1.msra.mxu0 0.0
    %525 = vmatprep.subr.mxu0 0.0
    %526 = vmatpush1.msra.mxu0 0.0
    %527 = vmatprep.subr.mxu0 0.0
    %528 = vmatpush1.msra.mxu0 0.0
    %529 = vmatprep.subr.mxu0 0.0
    %530 = vmatpush1.msra.mxu0 0.0
    %531 = vmatprep.subr.mxu0 0.0
    %532 = vmatpush1.msra.mxu0 0.0
    %533 = vmatprep.subr.mxu0 0.0
    %534 = vmatpush1.msra.mxu0 0.0
    %535 = vmatprep.subr.mxu0 0.0
    %536 = vmatpush1.msra.mxu0 0.0
    %537 = vmatprep.subr.mxu0 0.0
    %538 = vmatpush1.msra.mxu0 0.0
    %539 = vmatprep.mubr.f32.mxu0 0.0
    %540 = vmatmul.mubr.f32.gmra.mrb[0].mxu0 %v473
    %v541 = vpop.f32.mrb[0].mxu0
    %v542 = vadd.f32 0.0, %v541
    %v543 = vpop.f32.mrb[0].mxu0
    %v544 = vadd.f32 0.0, %v543
    %545 = vdwg.mxu0
    %v546 = vadd.f32 %v544, %v242
    %547 = vst [vmem:[#allocation2 + $0x10] sm:$0xff] %v546
    %v548 = vld [vmem:[#allocation2 + $0x18] sm:$0xff]
    %v549 = vadd.f32 %v548, %v542
    %v550 = vmul.f32 %v549, %v227
    %v551 = vtanh.pop %v550
    %v552 = vmul.f32 %v551, 0.5
    %v553 = vadd.f32 %v552, 0.5
    %v554 = vmul.f32 %v553, %v463
    %556 = vrot.lane.b32.xlu0 %v551, 64
    %v557 = vpop.permute.xlu0 %556
    %v559 = vmul.f32 %v553, %v557
    %561 = vrot.lane.b32.xlu0 %v559, 32
    %v562 = vpop.permute.xlu0 %561
    %v564 = vadd.f32 %v554, %v562
    %v565 = vtanh.pop %v564
    %567 = vrot.lane.b32.xlu0 %v565, 64
    %v568 = vpop.permute.xlu0 %567
    %v570 = vmul.f32 %v553, %v568
    %572 = vrot.lane.b32.xlu0 %v570, 32
    %v573 = vpop.permute.xlu0 %572
    %v574 = vsel %vm270, %v573, 0
    %576 = vmatprep.subr.mxu0 %v230
    %577 = vmatpush1.msra.mxu0 %v229
    %578 = vmatprep.subr.mxu0 %v232
    %579 = vmatpush1.msra.mxu0 %v231
    %580 = vmatprep.subr.mxu0 %v234
    %581 = vmatpush1.msra.mxu0 %v233
    %582 = vmatprep.subr.mxu0 %v236
    %583 = vmatpush1.msra.mxu0 %v235
    %584 = vmatprep.subr.mxu0 0.0
    %585 = vmatpush1.msra.mxu0 0.0
    %586 = vmatprep.subr.mxu0 0.0
    %587 = vmatpush1.msra.mxu0 0.0
    %588 = vmatprep.subr.mxu0 0.0
    %589 = vmatpush1.msra.mxu0 0.0
    %590 = vmatprep.subr.mxu0 0.0
    %591 = vmatpush1.msra.mxu0 0.0
    %592 = vmatprep.subr.mxu0 0.0
    %593 = vmatpush1.msra.mxu0 0.0
    %594 = vmatprep.subr.mxu0 0.0
    %595 = vmatpush1.msra.mxu0 0.0
    %596 = vmatprep.subr.mxu0 0.0
    %597 = vmatpush1.msra.mxu0 0.0
    %598 = vmatprep.subr.mxu0 0.0
    %599 = vmatpush1.msra.mxu0 0.0
    %600 = vmatprep.subr.mxu0 0.0
    %601 = vmatpush1.msra.mxu0 0.0
    %602 = vmatprep.subr.mxu0 0.0
    %603 = vmatpush1.msra.mxu0 0.0
    %604 = vmatprep.subr.mxu0 0.0
    %605 = vmatpush1.msra.mxu0 0.0
    %606 = vmatprep.subr.mxu0 0.0
    %607 = vmatpush1.msra.mxu0 0.0
    %608 = vmatprep.subr.mxu0 0.0
    %609 = vmatpush1.msra.mxu0 0.0
    %610 = vmatprep.subr.mxu0 0.0
    %611 = vmatpush1.msra.mxu0 0.0
    %612 = vmatprep.subr.mxu0 0.0
    %613 = vmatpush1.msra.mxu0 0.0
    %614 = vmatprep.subr.mxu0 0.0
    %615 = vmatpush1.msra.mxu0 0.0
    %616 = vmatprep.subr.mxu0 0.0
    %617 = vmatpush1.msra.mxu0 0.0
    %618 = vmatprep.subr.mxu0 0.0
    %619 = vmatpush1.msra.mxu0 0.0
    %620 = vmatprep.subr.mxu0 0.0
    %621 = vmatpush1.msra.mxu0 0.0
    %622 = vmatprep.subr.mxu0 0.0
    %623 = vmatpush1.msra.mxu0 0.0
    %624 = vmatprep.subr.mxu0 0.0
    %625 = vmatpush1.msra.mxu0 0.0
    %626 = vmatprep.subr.mxu0 0.0
    %627 = vmatpush1.msra.mxu0 0.0
    %628 = vmatprep.subr.mxu0 0.0
    %629 = vmatpush1.msra.mxu0 0.0
    %630 = vmatprep.subr.mxu0 0.0
    %631 = vmatpush1.msra.mxu0 0.0
    %632 = vmatprep.subr.mxu0 0.0
    %633 = vmatpush1.msra.mxu0 0.0
    %634 = vmatprep.subr.mxu0 0.0
    %635 = vmatpush1.msra.mxu0 0.0
    %636 = vmatprep.subr.mxu0 0.0
    %637 = vmatpush1.msra.mxu0 0.0
    %638 = vmatprep.subr.mxu0 0.0
    %639 = vmatpush1.msra.mxu0 0.0
    %640 = vmatprep.mubr.f32.mxu0 0.0
    %641 = vmatmul.mubr.f32.gmra.mrb[0].mxu0 %v574
    %v642 = vpop.f32.mrb[0].mxu0
    %v643 = vadd.f32 0.0, %v642
    %v644 = vpop.f32.mrb[0].mxu0
    %v645 = vadd.f32 0.0, %v644
    %646 = vdwg.mxu0
    %v647 = vadd.f32 %v645, %v242
    %648 = vst [vmem:[#allocation2 + $0x18] sm:$0xff] %v647
    %v649 = vld [vmem:[#allocation2 + $0x20] sm:$0xff]
    %v650 = vadd.f32 %v649, %v643
    %v651 = vmul.f32 %v650, %v227
    %v652 = vtanh.pop %v651
    %v653 = vmul.f32 %v652, 0.5
    %v654 = vadd.f32 %v653, 0.5
    %v655 = vmul.f32 %v654, %v564
    %657 = vrot.lane.b32.xlu0 %v652, 64
    %v658 = vpop.permute.xlu0 %657
    %v660 = vmul.f32 %v654, %v658
    %662 = vrot.lane.b32.xlu0 %v660, 32
    %v663 = vpop.permute.xlu0 %662
    %v665 = vadd.f32 %v655, %v663
    %v666 = vtanh.pop %v665
    %668 = vrot.lane.b32.xlu0 %v666, 64
    %v669 = vpop.permute.xlu0 %668
    %v671 = vmul.f32 %v654, %v669
    %673 = vrot.lane.b32.xlu0 %v671, 32
    %v674 = vpop.permute.xlu0 %673
    %v675 = vsel %vm270, %v674, 0
    %677 = vmatprep.subr.mxu0 %v230
    %678 = vmatpush1.msra.mxu0 %v229
    %679 = vmatprep.subr.mxu0 %v232
    %680 = vmatpush1.msra.mxu0 %v231
    %681 = vmatprep.subr.mxu0 %v234
    %682 = vmatpush1.msra.mxu0 %v233
    %683 = vmatprep.subr.mxu0 %v236
    %684 = vmatpush1.msra.mxu0 %v235
    %685 = vmatprep.subr.mxu0 0.0
    %686 = vmatpush1.msra.mxu0 0.0
    %687 = vmatprep.subr.mxu0 0.0
    %688 = vmatpush1.msra.mxu0 0.0
    %689 = vmatprep.subr.mxu0 0.0
    %690 = vmatpush1.msra.mxu0 0.0
    %691 = vmatprep.subr.mxu0 0.0
    %692 = vmatpush1.msra.mxu0 0.0
    %693 = vmatprep.subr.mxu0 0.0
    %694 = vmatpush1.msra.mxu0 0.0
    %695 = vmatprep.subr.mxu0 0.0
    %696 = vmatpush1.msra.mxu0 0.0
    %697 = vmatprep.subr.mxu0 0.0
    %698 = vmatpush1.msra.mxu0 0.0
    %699 = vmatprep.subr.mxu0 0.0
    %700 = vmatpush1.msra.mxu0 0.0
    %701 = vmatprep.subr.mxu0 0.0
    %702 = vmatpush1.msra.mxu0 0.0
    %703 = vmatprep.subr.mxu0 0.0
    %704 = vmatpush1.msra.mxu0 0.0
    %705 = vmatprep.subr.mxu0 0.0
    %706 = vmatpush1.msra.mxu0 0.0
    %707 = vmatprep.subr.mxu0 0.0
    %708 = vmatpush1.msra.mxu0 0.0
    %709 = vmatprep.subr.mxu0 0.0
    %710 = vmatpush1.msra.mxu0 0.0
    %711 = vmatprep.subr.mxu0 0.0
    %712 = vmatpush1.msra.mxu0 0.0
    %713 = vmatprep.subr.mxu0 0.0
    %714 = vmatpush1.msra.mxu0 0.0
    %715 = vmatprep.subr.mxu0 0.0
    %716 = vmatpush1.msra.mxu0 0.0
    %717 = vmatprep.subr.mxu0 0.0
    %718 = vmatpush1.msra.mxu0 0.0
    %719 = vmatprep.subr.mxu0 0.0
    %720 = vmatpush1.msra.mxu0 0.0
    %721 = vmatprep.subr.mxu0 0.0
    %722 = vmatpush1.msra.mxu0 0.0
    %723 = vmatprep.subr.mxu0 0.0
    %724 = vmatpush1.msra.mxu0 0.0
    %725 = vmatprep.subr.mxu0 0.0
    %726 = vmatpush1.msra.mxu0 0.0
    %727 = vmatprep.subr.mxu0 0.0
    %728 = vmatpush1.msra.mxu0 0.0
    %729 = vmatprep.subr.mxu0 0.0
    %730 = vmatpush1.msra.mxu0 0.0
    %731 = vmatprep.subr.mxu0 0.0
    %732 = vmatpush1.msra.mxu0 0.0
    %733 = vmatprep.subr.mxu0 0.0
    %734 = vmatpush1.msra.mxu0 0.0
    %735 = vmatprep.subr.mxu0 0.0
    %736 = vmatpush1.msra.mxu0 0.0
    %737 = vmatprep.subr.mxu0 0.0
    %738 = vmatpush1.msra.mxu0 0.0
    %739 = vmatprep.subr.mxu0 0.0
    %740 = vmatpush1.msra.mxu0 0.0
    %741 = vmatprep.mubr.f32.mxu0 0.0
    %742 = vmatmul.mubr.f32.gmra.mrb[0].mxu0 %v675
    %v743 = vpop.f32.mrb[0].mxu0
    %v744 = vadd.f32 0.0, %v743
    %v745 = vpop.f32.mrb[0].mxu0
    %v746 = vadd.f32 0.0, %v745
    %747 = vdwg.mxu0
    %v748 = vadd.f32 %v746, %v242
    %749 = vst [vmem:[#allocation2 + $0x20] sm:$0xff] %v748
    %v750 = vld [vmem:[#allocation2 + $0x28] sm:$0xff]
    %v751 = vadd.f32 %v750, %v744
    %v752 = vmul.f32 %v751, %v227
    %v753 = vtanh.pop %v752
    %v754 = vmul.f32 %v753, 0.5
    %v755 = vadd.f32 %v754, 0.5
    %v756 = vmul.f32 %v755, %v665
    %758 = vrot.lane.b32.xlu0 %v753, 64
    %v759 = vpop.permute.xlu0 %758
    %v761 = vmul.f32 %v755, %v759
    %763 = vrot.lane.b32.xlu0 %v761, 32
    %v764 = vpop.permute.xlu0 %763
    %v766 = vadd.f32 %v756, %v764
    %v767 = vtanh.pop %v766
    %769 = vrot.lane.b32.xlu0 %v767, 64
    %v770 = vpop.permute.xlu0 %769
    %v772 = vmul.f32 %v755, %v770
    %774 = vrot.lane.b32.xlu0 %v772, 32
    %v775 = vpop.permute.xlu0 %774
    %v776 = vsel %vm270, %v775, 0
    %778 = vmatprep.subr.mxu0 %v230
    %779 = vmatpush1.msra.mxu0 %v229
    %780 = vmatprep.subr.mxu0 %v232
    %781 = vmatpush1.msra.mxu0 %v231
    %782 = vmatprep.subr.mxu0 %v234
    %783 = vmatpush1.msra.mxu0 %v233
    %784 = vmatprep.subr.mxu0 %v236
    %785 = vmatpush1.msra.mxu0 %v235
    %786 = vmatprep.subr.mxu0 0.0
    %787 = vmatpush1.msra.mxu0 0.0
    %788 = vmatprep.subr.mxu0 0.0
    %789 = vmatpush1.msra.mxu0 0.0
    %790 = vmatprep.subr.mxu0 0.0
    %791 = vmatpush1.msra.mxu0 0.0
    %792 = vmatprep.subr.mxu0 0.0
    %793 = vmatpush1.msra.mxu0 0.0
    %794 = vmatprep.subr.mxu0 0.0
    %795 = vmatpush1.msra.mxu0 0.0
    %796 = vmatprep.subr.mxu0 0.0
    %797 = vmatpush1.msra.mxu0 0.0
    %798 = vmatprep.subr.mxu0 0.0
    %799 = vmatpush1.msra.mxu0 0.0
    %800 = vmatprep.subr.mxu0 0.0
    %801 = vmatpush1.msra.mxu0 0.0
    %802 = vmatprep.subr.mxu0 0.0
    %803 = vmatpush1.msra.mxu0 0.0
    %804 = vmatprep.subr.mxu0 0.0
    %805 = vmatpush1.msra.mxu0 0.0
    %806 = vmatprep.subr.mxu0 0.0
    %807 = vmatpush1.msra.mxu0 0.0
    %808 = vmatprep.subr.mxu0 0.0
    %809 = vmatpush1.msra.mxu0 0.0
    %810 = vmatprep.subr.mxu0 0.0
    %811 = vmatpush1.msra.mxu0 0.0
    %812 = vmatprep.subr.mxu0 0.0
    %813 = vmatpush1.msra.mxu0 0.0
    %814 = vmatprep.subr.mxu0 0.0
    %815 = vmatpush1.msra.mxu0 0.0
    %816 = vmatprep.subr.mxu0 0.0
    %817 = vmatpush1.msra.mxu0 0.0
    %818 = vmatprep.subr.mxu0 0.0
    %819 = vmatpush1.msra.mxu0 0.0
    %820 = vmatprep.subr.mxu0 0.0
    %821 = vmatpush1.msra.mxu0 0.0
    %822 = vmatprep.subr.mxu0 0.0
    %823 = vmatpush1.msra.mxu0 0.0
    %824 = vmatprep.subr.mxu0 0.0
    %825 = vmatpush1.msra.mxu0 0.0
    %826 = vmatprep.subr.mxu0 0.0
    %827 = vmatpush1.msra.mxu0 0.0
    %828 = vmatprep.subr.mxu0 0.0
    %829 = vmatpush1.msra.mxu0 0.0
    %830 = vmatprep.subr.mxu0 0.0
    %831 = vmatpush1.msra.mxu0 0.0
    %832 = vmatprep.subr.mxu0 0.0
    %833 = vmatpush1.msra.mxu0 0.0
    %834 = vmatprep.subr.mxu0 0.0
    %835 = vmatpush1.msra.mxu0 0.0
    %836 = vmatprep.subr.mxu0 0.0
    %837 = vmatpush1.msra.mxu0 0.0
    %838 = vmatprep.subr.mxu0 0.0
    %839 = vmatpush1.msra.mxu0 0.0
    %840 = vmatprep.subr.mxu0 0.0
    %841 = vmatpush1.msra.mxu0 0.0
    %842 = vmatprep.mubr.f32.mxu0 0.0
    %843 = vmatmul.mubr.f32.gmra.mrb[0].mxu0 %v776
    %v844 = vpop.f32.mrb[0].mxu0
    %v845 = vadd.f32 0.0, %v844
    %v846 = vpop.f32.mrb[0].mxu0
    %v847 = vadd.f32 0.0, %v846
    %848 = vdwg.mxu0
    %v849 = vadd.f32 %v847, %v242
    %850 = vst [vmem:[#allocation2 + $0x28] sm:$0xff] %v849
    %v851 = vld [vmem:[#allocation2 + $0x30] sm:$0xff]
    %v852 = vadd.f32 %v851, %v845
    %v853 = vmul.f32 %v852, %v227
    %v854 = vtanh.pop %v853
    %v855 = vmul.f32 %v854, 0.5
    %v856 = vadd.f32 %v855, 0.5
    %v857 = vmul.f32 %v856, %v766
    %859 = vrot.lane.b32.xlu0 %v854, 64
    %v860 = vpop.permute.xlu0 %859
    %v862 = vmul.f32 %v856, %v860
    %864 = vrot.lane.b32.xlu0 %v862, 32
    %v865 = vpop.permute.xlu0 %864
    %v867 = vadd.f32 %v857, %v865
    %v868 = vtanh.pop %v867
    %870 = vrot.lane.b32.xlu0 %v868, 64
    %v871 = vpop.permute.xlu0 %870
    %v873 = vmul.f32 %v856, %v871
    %875 = vrot.lane.b32.xlu0 %v873, 32
    %v876 = vpop.permute.xlu0 %875
    %v877 = vsel %vm270, %v876, 0
    %879 = vmatprep.subr.mxu0 %v230
    %880 = vmatpush1.msra.mxu0 %v229
    %881 = vmatprep.subr.mxu0 %v232
    %882 = vmatpush1.msra.mxu0 %v231
    %883 = vmatprep.subr.mxu0 %v234
    %884 = vmatpush1.msra.mxu0 %v233
    %885 = vmatprep.subr.mxu0 %v236
    %886 = vmatpush1.msra.mxu0 %v235
    %887 = vmatprep.subr.mxu0 0.0
    %888 = vmatpush1.msra.mxu0 0.0
    %889 = vmatprep.subr.mxu0 0.0
    %890 = vmatpush1.msra.mxu0 0.0
    %891 = vmatprep.subr.mxu0 0.0
    %892 = vmatpush1.msra.mxu0 0.0
    %893 = vmatprep.subr.mxu0 0.0
    %894 = vmatpush1.msra.mxu0 0.0
    %895 = vmatprep.subr.mxu0 0.0
    %896 = vmatpush1.msra.mxu0 0.0
    %897 = vmatprep.subr.mxu0 0.0
    %898 = vmatpush1.msra.mxu0 0.0
    %899 = vmatprep.subr.mxu0 0.0
    %900 = vmatpush1.msra.mxu0 0.0
    %901 = vmatprep.subr.mxu0 0.0
    %902 = vmatpush1.msra.mxu0 0.0
    %903 = vmatprep.subr.mxu0 0.0
    %904 = vmatpush1.msra.mxu0 0.0
    %905 = vmatprep.subr.mxu0 0.0
    %906 = vmatpush1.msra.mxu0 0.0
    %907 = vmatprep.subr.mxu0 0.0
    %908 = vmatpush1.msra.mxu0 0.0
    %909 = vmatprep.subr.mxu0 0.0
    %910 = vmatpush1.msra.mxu0 0.0
    %911 = vmatprep.subr.mxu0 0.0
    %912 = vmatpush1.msra.mxu0 0.0
    %913 = vmatprep.subr.mxu0 0.0
    %914 = vmatpush1.msra.mxu0 0.0
    %915 = vmatprep.subr.mxu0 0.0
    %916 = vmatpush1.msra.mxu0 0.0
    %917 = vmatprep.subr.mxu0 0.0
    %918 = vmatpush1.msra.mxu0 0.0
    %919 = vmatprep.subr.mxu0 0.0
    %920 = vmatpush1.msra.mxu0 0.0
    %921 = vmatprep.subr.mxu0 0.0
    %922 = vmatpush1.msra.mxu0 0.0
    %923 = vmatprep.subr.mxu0 0.0
    %924 = vmatpush1.msra.mxu0 0.0
    %925 = vmatprep.subr.mxu0 0.0
    %926 = vmatpush1.msra.mxu0 0.0
    %927 = vmatprep.subr.mxu0 0.0
    %928 = vmatpush1.msra.mxu0 0.0
    %929 = vmatprep.subr.mxu0 0.0
    %930 = vmatpush1.msra.mxu0 0.0
    %931 = vmatprep.subr.mxu0 0.0
    %932 = vmatpush1.msra.mxu0 0.0
    %933 = vmatprep.subr.mxu0 0.0
    %934 = vmatpush1.msra.mxu0 0.0
    %935 = vmatprep.subr.mxu0 0.0
    %936 = vmatpush1.msra.mxu0 0.0
    %937 = vmatprep.subr.mxu0 0.0
    %938 = vmatpush1.msra.mxu0 0.0
    %939 = vmatprep.subr.mxu0 0.0
    %940 = vmatpush1.msra.mxu0 0.0
    %941 = vmatprep.subr.mxu0 0.0
    %942 = vmatpush1.msra.mxu0 0.0
    %943 = vmatprep.mubr.f32.mxu0 0.0
    %944 = vmatmul.mubr.f32.gmra.mrb[0].mxu0 %v877
    %v945 = vpop.f32.mrb[0].mxu0
    %v946 = vadd.f32 0.0, %v945
    %v947 = vpop.f32.mrb[0].mxu0
    %v948 = vadd.f32 0.0, %v947
    %949 = vdwg.mxu0
    %v950 = vadd.f32 %v948, %v242
    %951 = vst [vmem:[#allocation2 + $0x30] sm:$0xff] %v950
    %v952 = vld [vmem:[#allocation2 + $0x38] sm:$0xff]
    %v953 = vadd.f32 %v952, %v946
    %v954 = vmul.f32 %v953, %v227
    %v955 = vtanh.pop %v954
    %v956 = vmul.f32 %v955, 0.5
    %v957 = vadd.f32 %v956, 0.5
    %v958 = vmul.f32 %v957, %v867
    %960 = vrot.lane.b32.xlu0 %v955, 64
    %v961 = vpop.permute.xlu0 %960
    %v963 = vmul.f32 %v957, %v961
    %965 = vrot.lane.b32.xlu0 %v963, 32
    %v966 = vpop.permute.xlu0 %965
    %v968 = vadd.f32 %v958, %v966
    %v969 = vtanh.pop %v968
    %971 = vrot.lane.b32.xlu0 %v969, 64
    %v972 = vpop.permute.xlu0 %971
    %v974 = vmul.f32 %v957, %v972
    %976 = vrot.lane.b32.xlu0 %v974, 32
    %v977 = vpop.permute.xlu0 %976
    %v978 = vsel %vm270, %v977, 0
    %980 = vmatprep.subr.mxu0 %v230
    %981 = vmatpush1.msra.mxu0 %v229
    %982 = vmatprep.subr.mxu0 %v232
    %983 = vmatpush1.msra.mxu0 %v231
    %984 = vmatprep.subr.mxu0 %v234
    %985 = vmatpush1.msra.mxu0 %v233
    %986 = vmatprep.subr.mxu0 %v236
    %987 = vmatpush1.msra.mxu0 %v235
    %988 = vmatprep.subr.mxu0 0.0
    %989 = vmatpush1.msra.mxu0 0.0
    %990 = vmatprep.subr.mxu0 0.0
    %991 = vmatpush1.msra.mxu0 0.0
    %992 = vmatprep.subr.mxu0 0.0
    %993 = vmatpush1.msra.mxu0 0.0
    %994 = vmatprep.subr.mxu0 0.0
    %995 = vmatpush1.msra.mxu0 0.0
    %996 = vmatprep.subr.mxu0 0.0
    %997 = vmatpush1.msra.mxu0 0.0
    %998 = vmatprep.subr.mxu0 0.0
    %999 = vmatpush1.msra.mxu0 0.0
    %1000 = vmatprep.subr.mxu0 0.0
    %1001 = vmatpush1.msra.mxu0 0.0
    %1002 = vmatprep.subr.mxu0 0.0
    %1003 = vmatpush1.msra.mxu0 0.0
    %1004 = vmatprep.subr.mxu0 0.0
    %1005 = vmatpush1.msra.mxu0 0.0
    %1006 = vmatprep.subr.mxu0 0.0
    %1007 = vmatpush1.msra.mxu0 0.0
    %1008 = vmatprep.subr.mxu0 0.0
    %1009 = vmatpush1.msra.mxu0 0.0
    %1010 = vmatprep.subr.mxu0 0.0
    %1011 = vmatpush1.msra.mxu0 0.0
    %1012 = vmatprep.subr.mxu0 0.0
    %1013 = vmatpush1.msra.mxu0 0.0
    %1014 = vmatprep.subr.mxu0 0.0
    %1015 = vmatpush1.msra.mxu0 0.0
    %1016 = vmatprep.subr.mxu0 0.0
    %1017 = vmatpush1.msra.mxu0 0.0
    %1018 = vmatprep.subr.mxu0 0.0
    %1019 = vmatpush1.msra.mxu0 0.0
    %1020 = vmatprep.subr.mxu0 0.0
    %1021 = vmatpush1.msra.mxu0 0.0
    %1022 = vmatprep.subr.mxu0 0.0
    %1023 = vmatpush1.msra.mxu0 0.0
    %1024 = vmatprep.subr.mxu0 0.0
    %1025 = vmatpush1.msra.mxu0 0.0
    %1026 = vmatprep.subr.mxu0 0.0
    %1027 = vmatpush1.msra.mxu0 0.0
    %1028 = vmatprep.subr.mxu0 0.0
    %1029 = vmatpush1.msra.mxu0 0.0
    %1030 = vmatprep.subr.mxu0 0.0
    %1031 = vmatpush1.msra.mxu0 0.0
    %1032 = vmatprep.subr.mxu0 0.0
    %1033 = vmatpush1.msra.mxu0 0.0
    %1034 = vmatprep.subr.mxu0 0.0
    %1035 = vmatpush1.msra.mxu0 0.0
    %1036 = vmatprep.subr.mxu0 0.0
    %1037 = vmatpush1.msra.mxu0 0.0
    %1038 = vmatprep.subr.mxu0 0.0
    %1039 = vmatpush1.msra.mxu0 0.0
    %1040 = vmatprep.subr.mxu0 0.0
    %1041 = vmatpush1.msra.mxu0 0.0
    %1042 = vmatprep.subr.mxu0 0.0
    %1043 = vmatpush1.msra.mxu0 0.0
    %1044 = vmatprep.mubr.f32.mxu0 0.0
    %1045 = vmatmul.mubr.f32.gmra.mrb[0].mxu0 %v978
    %v1046 = vpop.f32.mrb[0].mxu0
    %v1047 = vpop.f32.mrb[0].mxu0
    %v1048 = vadd.f32 0.0, %v1047
    %1049 = vdwg.mxu0
    %v1050 = vadd.f32 %v1048, %v242
    %1051 = vst [vmem:[#allocation2 + $0x38] sm:$0xff] %v1050
    %v1052 = vld [vmem:[%s5] sm:$0xff]
    %v1053 = vld [vmem:[%s5 + $0x8] sm:$0xff]
    %v1054 = vld [vmem:[%s5 + $0x10] sm:$0xff]
    %v1055 = vld [vmem:[%s5 + $0x18] sm:$0xff]
    %v1056 = vld [vmem:[%s5 + $0x20] sm:$0xff]
    %v1057 = vld [vmem:[%s5 + $0x28] sm:$0xff]
    %v1058 = vld [vmem:[%s5 + $0x30] sm:$0xff]
    %v1059 = vld [vmem:[%s5 + $0x38] sm:$0xff]
    %v1060 = vld [vmem:[%s6] sm:$0x1]
    %v1062 = vlaneseq
    %v1063 = vshrl.u32 %v1062, 7
    %v1064 = vsub.s32 0, %v1063
    %v1065 = vrot.slane %v1060, %v1064
    %v1067 = vld [vmem:[#allocation2] sm:$0xff]
    %v1068 = vadd.f32 %v1067, 0.0
    %v1069 = vmul.f32 %v1068, %v227
    %v1070 = vtanh.pop %v1069
    %v1071 = vmul.f32 %v1070, 0.5
    %v1072 = vadd.f32 %v1071, 0.5
    %v1073 = vmul.f32 %v1072, 0.0
    %1075 = vrot.lane.b32.xlu0 %v1070, 64
    %v1076 = vpop.permute.xlu0 %1075
    %v1078 = vmul.f32 %v1072, %v1076
    %1080 = vrot.lane.b32.xlu0 %v1078, 32
    %v1081 = vpop.permute.xlu0 %1080
    %v1083 = vadd.f32 %v1073, %v1081
    %v1084 = vtanh.pop %v1083
    %1086 = vrot.lane.b32.xlu0 %v1084, 64
    %v1087 = vpop.permute.xlu0 %1086
    %v1089 = vmul.f32 %v1072, %v1087
    %1091 = vrot.lane.b32.xlu0 %v1089, 32
    %v1092 = vpop.permute.xlu0 %1091
    %v1093 = vsel %vm270, %v1092, 0
    %1095 = vmatprep.subr.mxu0 %v1053
    %1096 = vmatpush1.msra.mxu0 %v1052
    %1097 = vmatprep.subr.mxu0 %v1055
    %1098 = vmatpush1.msra.mxu0 %v1054
    %1099 = vmatprep.subr.mxu0 %v1057
    %1100 = vmatpush1.msra.mxu0 %v1056
    %1101 = vmatprep.subr.mxu0 %v1059
    %1102 = vmatpush1.msra.mxu0 %v1058
    %1103 = vmatprep.subr.mxu0 0.0
    %1104 = vmatpush1.msra.mxu0 0.0
    %1105 = vmatprep.subr.mxu0 0.0
    %1106 = vmatpush1.msra.mxu0 0.0
    %1107 = vmatprep.subr.mxu0 0.0
    %1108 = vmatpush1.msra.mxu0 0.0
    %1109 = vmatprep.subr.mxu0 0.0
    %1110 = vmatpush1.msra.mxu0 0.0
    %1111 = vmatprep.subr.mxu0 0.0
    %1112 = vmatpush1.msra.mxu0 0.0
    %1113 = vmatprep.subr.mxu0 0.0
    %1114 = vmatpush1.msra.mxu0 0.0
    %1115 = vmatprep.subr.mxu0 0.0
    %1116 = vmatpush1.msra.mxu0 0.0
    %1117 = vmatprep.subr.mxu0 0.0
    %1118 = vmatpush1.msra.mxu0 0.0
    %1119 = vmatprep.subr.mxu0 0.0
    %1120 = vmatpush1.msra.mxu0 0.0
    %1121 = vmatprep.subr.mxu0 0.0
    %1122 = vmatpush1.msra.mxu0 0.0
    %1123 = vmatprep.subr.mxu0 0.0
    %1124 = vmatpush1.msra.mxu0 0.0
    %1125 = vmatprep.subr.mxu0 0.0
    %1126 = vmatpush1.msra.mxu0 0.0
    %1127 = vmatprep.subr.mxu0 0.0
    %1128 = vmatpush1.msra.mxu0 0.0
    %1129 = vmatprep.subr.mxu0 0.0
    %1130 = vmatpush1.msra.mxu0 0.0
    %1131 = vmatprep.subr.mxu0 0.0
    %1132 = vmatpush1.msra.mxu0 0.0
    %1133 = vmatprep.subr.mxu0 0.0
    %1134 = vmatpush1.msra.mxu0 0.0
    %1135 = vmatprep.subr.mxu0 0.0
    %1136 = vmatpush1.msra.mxu0 0.0
    %1137 = vmatprep.subr.mxu0 0.0
    %1138 = vmatpush1.msra.mxu0 0.0
    %1139 = vmatprep.subr.mxu0 0.0
    %1140 = vmatpush1.msra.mxu0 0.0
    %1141 = vmatprep.subr.mxu0 0.0
    %1142 = vmatpush1.msra.mxu0 0.0
    %1143 = vmatprep.subr.mxu0 0.0
    %1144 = vmatpush1.msra.mxu0 0.0
    %1145 = vmatprep.subr.mxu0 0.0
    %1146 = vmatpush1.msra.mxu0 0.0
    %1147 = vmatprep.subr.mxu0 0.0
    %1148 = vmatpush1.msra.mxu0 0.0
    %1149 = vmatprep.subr.mxu0 0.0
    %1150 = vmatpush1.msra.mxu0 0.0
    %1151 = vmatprep.subr.mxu0 0.0
    %1152 = vmatpush1.msra.mxu0 0.0
    %1153 = vmatprep.subr.mxu0 0.0
    %1154 = vmatpush1.msra.mxu0 0.0
    %1155 = vmatprep.subr.mxu0 0.0
    %1156 = vmatpush1.msra.mxu0 0.0
    %1157 = vmatprep.subr.mxu0 0.0
    %1158 = vmatpush1.msra.mxu0 0.0
    %1159 = vmatprep.mubr.f32.mxu0 0.0
    %1160 = vmatmul.mubr.f32.gmra.mrb[0].mxu0 %v1093
    %v1161 = vpop.f32.mrb[0].mxu0
    %v1162 = vadd.f32 0.0, %v1161
    %v1163 = vpop.f32.mrb[0].mxu0
    %v1164 = vadd.f32 0.0, %v1163
    %1165 = vdwg.mxu0
    %v1166 = vadd.f32 %v1164, %v1065
    %1167 = vst [vmem:[#allocation2] sm:$0xff] %v1166
    %v1168 = vld [vmem:[#allocation2 + $0x8] sm:$0xff]
    %v1169 = vadd.f32 %v1168, %v1162
    %v1170 = vmul.f32 %v1169, %v227
    %v1171 = vtanh.pop %v1170
    %v1172 = vmul.f32 %v1171, 0.5
    %v1173 = vadd.f32 %v1172, 0.5
    %v1174 = vmul.f32 %v1173, %v1083
    %1176 = vrot.lane.b32.xlu0 %v1171, 64
    %v1177 = vpop.permute.xlu0 %1176
    %v1179 = vmul.f32 %v1173, %v1177
    %1181 = vrot.lane.b32.xlu0 %v1179, 32
    %v1182 = vpop.permute.xlu0 %1181
    %v1184 = vadd.f32 %v1174, %v1182
    %v1185 = vtanh.pop %v1184
    %1187 = vrot.lane.b32.xlu0 %v1185, 64
    %v1188 = vpop.permute.xlu0 %1187
    %v1190 = vmul.f32 %v1173, %v1188
    %1192 = vrot.lane.b32.xlu0 %v1190, 32
    %v1193 = vpop.permute.xlu0 %1192
    %v1194 = vsel %vm270, %v1193, 0
    %1196 = vmatprep.subr.mxu0 %v1053
    %1197 = vmatpush1.msra.mxu0 %v1052
    %1198 = vmatprep.subr.mxu0 %v1055
    %1199 = vmatpush1.msra.mxu0 %v1054
    %1200 = vmatprep.subr.mxu0 %v1057
    %1201 = vmatpush1.msra.mxu0 %v1056
    %1202 = vmatprep.subr.mxu0 %v1059
    %1203 = vmatpush1.msra.mxu0 %v1058
    %1204 = vmatprep.subr.mxu0 0.0
    %1205 = vmatpush1.msra.mxu0 0.0
    %1206 = vmatprep.subr.mxu0 0.0
    %1207 = vmatpush1.msra.mxu0 0.0
    %1208 = vmatprep.subr.mxu0 0.0
    %1209 = vmatpush1.msra.mxu0 0.0
    %1210 = vmatprep.subr.mxu0 0.0
    %1211 = vmatpush1.msra.mxu0 0.0
    %1212 = vmatprep.subr.mxu0 0.0
    %1213 = vmatpush1.msra.mxu0 0.0
    %1214 = vmatprep.subr.mxu0 0.0
    %1215 = vmatpush1.msra.mxu0 0.0
    %1216 = vmatprep.subr.mxu0 0.0
    %1217 = vmatpush1.msra.mxu0 0.0
    %1218 = vmatprep.subr.mxu0 0.0
    %1219 = vmatpush1.msra.mxu0 0.0
    %1220 = vmatprep.subr.mxu0 0.0
    %1221 = vmatpush1.msra.mxu0 0.0
    %1222 = vmatprep.subr.mxu0 0.0
    %1223 = vmatpush1.msra.mxu0 0.0
    %1224 = vmatprep.subr.mxu0 0.0
    %1225 = vmatpush1.msra.mxu0 0.0
    %1226 = vmatprep.subr.mxu0 0.0
    %1227 = vmatpush1.msra.mxu0 0.0
    %1228 = vmatprep.subr.mxu0 0.0
    %1229 = vmatpush1.msra.mxu0 0.0
    %1230 = vmatprep.subr.mxu0 0.0
    %1231 = vmatpush1.msra.mxu0 0.0
    %1232 = vmatprep.subr.mxu0 0.0
    %1233 = vmatpush1.msra.mxu0 0.0
    %1234 = vmatprep.subr.mxu0 0.0
    %1235 = vmatpush1.msra.mxu0 0.0
    %1236 = vmatprep.subr.mxu0 0.0
    %1237 = vmatpush1.msra.mxu0 0.0
    %1238 = vmatprep.subr.mxu0 0.0
    %1239 = vmatpush1.msra.mxu0 0.0
    %1240 = vmatprep.subr.mxu0 0.0
    %1241 = vmatpush1.msra.mxu0 0.0
    %1242 = vmatprep.subr.mxu0 0.0
    %1243 = vmatpush1.msra.mxu0 0.0
    %1244 = vmatprep.subr.mxu0 0.0
    %1245 = vmatpush1.msra.mxu0 0.0
    %1246 = vmatprep.subr.mxu0 0.0
    %1247 = vmatpush1.msra.mxu0 0.0
    %1248 = vmatprep.subr.mxu0 0.0
    %1249 = vmatpush1.msra.mxu0 0.0
    %1250 = vmatprep.subr.mxu0 0.0
    %1251 = vmatpush1.msra.mxu0 0.0
    %1252 = vmatprep.subr.mxu0 0.0
    %1253 = vmatpush1.msra.mxu0 0.0
    %1254 = vmatprep.subr.mxu0 0.0
    %1255 = vmatpush1.msra.mxu0 0.0
    %1256 = vmatprep.subr.mxu0 0.0
    %1257 = vmatpush1.msra.mxu0 0.0
    %1258 = vmatprep.subr.mxu0 0.0
    %1259 = vmatpush1.msra.mxu0 0.0
    %1260 = vmatprep.mubr.f32.mxu0 0.0
    %1261 = vmatmul.mubr.f32.gmra.mrb[0].mxu0 %v1194
    %v1262 = vpop.f32.mrb[0].mxu0
    %v1263 = vadd.f32 0.0, %v1262
    %v1264 = vpop.f32.mrb[0].mxu0
    %v1265 = vadd.f32 0.0, %v1264
    %1266 = vdwg.mxu0
    %v1267 = vadd.f32 %v1265, %v1065
    %1268 = vst [vmem:[#allocation2 + $0x8] sm:$0xff] %v1267
    %v1269 = vld [vmem:[#allocation2 + $0x10] sm:$0xff]
    %v1270 = vadd.f32 %v1269, %v1263
    %v1271 = vmul.f32 %v1270, %v227
    %v1272 = vtanh.pop %v1271
    %v1273 = vmul.f32 %v1272, 0.5
    %v1274 = vadd.f32 %v1273, 0.5
    %v1275 = vmul.f32 %v1274, %v1184
    %1277 = vrot.lane.b32.xlu0 %v1272, 64
    %v1278 = vpop.permute.xlu0 %1277
    %v1280 = vmul.f32 %v1274, %v1278
    %1282 = vrot.lane.b32.xlu0 %v1280, 32
    %v1283 = vpop.permute.xlu0 %1282
    %v1285 = vadd.f32 %v1275, %v1283
    %v1286 = vtanh.pop %v1285
    %1288 = vrot.lane.b32.xlu0 %v1286, 64
    %v1289 = vpop.permute.xlu0 %1288
    %v1291 = vmul.f32 %v1274, %v1289
    %1293 = vrot.lane.b32.xlu0 %v1291, 32
    %v1294 = vpop.permute.xlu0 %1293
    %v1295 = vsel %vm270, %v1294, 0
    %1297 = vmatprep.subr.mxu0 %v1053
    %1298 = vmatpush1.msra.mxu0 %v1052
    %1299 = vmatprep.subr.mxu0 %v1055
    %1300 = vmatpush1.msra.mxu0 %v1054
    %1301 = vmatprep.subr.mxu0 %v1057
    %1302 = vmatpush1.msra.mxu0 %v1056
    %1303 = vmatprep.subr.mxu0 %v1059
    %1304 = vmatpush1.msra.mxu0 %v1058
    %1305 = vmatprep.subr.mxu0 0.0
    %1306 = vmatpush1.msra.mxu0 0.0
    %1307 = vmatprep.subr.mxu0 0.0
    %1308 = vmatpush1.msra.mxu0 0.0
    %1309 = vmatprep.subr.mxu0 0.0
    %1310 = vmatpush1.msra.mxu0 0.0
    %1311 = vmatprep.subr.mxu0 0.0
    %1312 = vmatpush1.msra.mxu0 0.0
    %1313 = vmatprep.subr.mxu0 0.0
    %1314 = vmatpush1.msra.mxu0 0.0
    %1315 = vmatprep.subr.mxu0 0.0
    %1316 = vmatpush1.msra.mxu0 0.0
    %1317 = vmatprep.subr.mxu0 0.0
    %1318 = vmatpush1.msra.mxu0 0.0
    %1319 = vmatprep.subr.mxu0 0.0
    %1320 = vmatpush1.msra.mxu0 0.0
    %1321 = vmatprep.subr.mxu0 0.0
    %1322 = vmatpush1.msra.mxu0 0.0
    %1323 = vmatprep.subr.mxu0 0.0
    %1324 = vmatpush1.msra.mxu0 0.0
    %1325 = vmatprep.subr.mxu0 0.0
    %1326 = vmatpush1.msra.mxu0 0.0
    %1327 = vmatprep.subr.mxu0 0.0
    %1328 = vmatpush1.msra.mxu0 0.0
    %1329 = vmatprep.subr.mxu0 0.0
    %1330 = vmatpush1.msra.mxu0 0.0
    %1331 = vmatprep.subr.mxu0 0.0
    %1332 = vmatpush1.msra.mxu0 0.0
    %1333 = vmatprep.subr.mxu0 0.0
    %1334 = vmatpush1.msra.mxu0 0.0
    %1335 = vmatprep.subr.mxu0 0.0
    %1336 = vmatpush1.msra.mxu0 0.0
    %1337 = vmatprep.subr.mxu0 0.0
    %1338 = vmatpush1.msra.mxu0 0.0
    %1339 = vmatprep.subr.mxu0 0.0
    %1340 = vmatpush1.msra.mxu0 0.0
    %1341 = vmatprep.subr.mxu0 0.0
    %1342 = vmatpush1.msra.mxu0 0.0
    %1343 = vmatprep.subr.mxu0 0.0
    %1344 = vmatpush1.msra.mxu0 0.0
    %1345 = vmatprep.subr.mxu0 0.0
    %1346 = vmatpush1.msra.mxu0 0.0
    %1347 = vmatprep.subr.mxu0 0.0
    %1348 = vmatpush1.msra.mxu0 0.0
    %1349 = vmatprep.subr.mxu0 0.0
    %1350 = vmatpush1.msra.mxu0 0.0
    %1351 = vmatprep.subr.mxu0 0.0
    %1352 = vmatpush1.msra.mxu0 0.0
    %1353 = vmatprep.subr.mxu0 0.0
    %1354 = vmatpush1.msra.mxu0 0.0
    %1355 = vmatprep.subr.mxu0 0.0
    %1356 = vmatpush1.msra.mxu0 0.0
    %1357 = vmatprep.subr.mxu0 0.0
    %1358 = vmatpush1.msra.mxu0 0.0
    %1359 = vmatprep.subr.mxu0 0.0
    %1360 = vmatpush1.msra.mxu0 0.0
    %1361 = vmatprep.mubr.f32.mxu0 0.0
    %1362 = vmatmul.mubr.f32.gmra.mrb[0].mxu0 %v1295
    %v1363 = vpop.f32.mrb[0].mxu0
    %v1364 = vadd.f32 0.0, %v1363
    %v1365 = vpop.f32.mrb[0].mxu0
    %v1366 = vadd.f32 0.0, %v1365
    %1367 = vdwg.mxu0
    %v1368 = vadd.f32 %v1366, %v1065
    %1369 = vst [vmem:[#allocation2 + $0x10] sm:$0xff] %v1368
    %v1370 = vld [vmem:[#allocation2 + $0x18] sm:$0xff]
    %v1371 = vadd.f32 %v1370, %v1364
    %v1372 = vmul.f32 %v1371, %v227
    %v1373 = vtanh.pop %v1372
    %v1374 = vmul.f32 %v1373, 0.5
    %v1375 = vadd.f32 %v1374, 0.5
    %v1376 = vmul.f32 %v1375, %v1285
    %1378 = vrot.lane.b32.xlu0 %v1373, 64
    %v1379 = vpop.permute.xlu0 %1378
    %v1381 = vmul.f32 %v1375, %v1379
    %1383 = vrot.lane.b32.xlu0 %v1381, 32
    %v1384 = vpop.permute.xlu0 %1383
    %v1386 = vadd.f32 %v1376, %v1384
    %v1387 = vtanh.pop %v1386
    %1389 = vrot.lane.b32.xlu0 %v1387, 64
    %v1390 = vpop.permute.xlu0 %1389
    %v1392 = vmul.f32 %v1375, %v1390
    %1394 = vrot.lane.b32.xlu0 %v1392, 32
    %v1395 = vpop.permute.xlu0 %1394
    %v1396 = vsel %vm270, %v1395, 0
    %1398 = vmatprep.subr.mxu0 %v1053
    %1399 = vmatpush1.msra.mxu0 %v1052
    %1400 = vmatprep.subr.mxu0 %v1055
    %1401 = vmatpush1.msra.mxu0 %v1054
    %1402 = vmatprep.subr.mxu0 %v1057
    %1403 = vmatpush1.msra.mxu0 %v1056
    %1404 = vmatprep.subr.mxu0 %v1059
    %1405 = vmatpush1.msra.mxu0 %v1058
    %1406 = vmatprep.subr.mxu0 0.0
    %1407 = vmatpush1.msra.mxu0 0.0
    %1408 = vmatprep.subr.mxu0 0.0
    %1409 = vmatpush1.msra.mxu0 0.0
    %1410 = vmatprep.subr.mxu0 0.0
    %1411 = vmatpush1.msra.mxu0 0.0
    %1412 = vmatprep.subr.mxu0 0.0
    %1413 = vmatpush1.msra.mxu0 0.0
    %1414 = vmatprep.subr.mxu0 0.0
    %1415 = vmatpush1.msra.mxu0 0.0
    %1416 = vmatprep.subr.mxu0 0.0
    %1417 = vmatpush1.msra.mxu0 0.0
    %1418 = vmatprep.subr.mxu0 0.0
    %1419 = vmatpush1.msra.mxu0 0.0
    %1420 = vmatprep.subr.mxu0 0.0
    %1421 = vmatpush1.msra.mxu0 0.0
    %1422 = vmatprep.subr.mxu0 0.0
    %1423 = vmatpush1.msra.mxu0 0.0
    %1424 = vmatprep.subr.mxu0 0.0
    %1425 = vmatpush1.msra.mxu0 0.0
    %1426 = vmatprep.subr.mxu0 0.0
    %1427 = vmatpush1.msra.mxu0 0.0
    %1428 = vmatprep.subr.mxu0 0.0
    %1429 = vmatpush1.msra.mxu0 0.0
    %1430 = vmatprep.subr.mxu0 0.0
    %1431 = vmatpush1.msra.mxu0 0.0
    %1432 = vmatprep.subr.mxu0 0.0
    %1433 = vmatpush1.msra.mxu0 0.0
    %1434 = vmatprep.subr.mxu0 0.0
    %1435 = vmatpush1.msra.mxu0 0.0
    %1436 = vmatprep.subr.mxu0 0.0
    %1437 = vmatpush1.msra.mxu0 0.0
    %1438 = vmatprep.subr.mxu0 0.0
    %1439 = vmatpush1.msra.mxu0 0.0
    %1440 = vmatprep.subr.mxu0 0.0
    %1441 = vmatpush1.msra.mxu0 0.0
    %1442 = vmatprep.subr.mxu0 0.0
    %1443 = vmatpush1.msra.mxu0 0.0
    %1444 = vmatprep.subr.mxu0 0.0
    %1445 = vmatpush1.msra.mxu0 0.0
    %1446 = vmatprep.subr.mxu0 0.0
    %1447 = vmatpush1.msra.mxu0 0.0
    %1448 = vmatprep.subr.mxu0 0.0
    %1449 = vmatpush1.msra.mxu0 0.0
    %1450 = vmatprep.subr.mxu0 0.0
    %1451 = vmatpush1.msra.mxu0 0.0
    %1452 = vmatprep.subr.mxu0 0.0
    %1453 = vmatpush1.msra.mxu0 0.0
    %1454 = vmatprep.subr.mxu0 0.0
    %1455 = vmatpush1.msra.mxu0 0.0
    %1456 = vmatprep.subr.mxu0 0.0
    %1457 = vmatpush1.msra.mxu0 0.0
    %1458 = vmatprep.subr.mxu0 0.0
    %1459 = vmatpush1.msra.mxu0 0.0
    %1460 = vmatprep.subr.mxu0 0.0
    %1461 = vmatpush1.msra.mxu0 0.0
    %1462 = vmatprep.mubr.f32.mxu0 0.0
    %1463 = vmatmul.mubr.f32.gmra.mrb[0].mxu0 %v1396
    %v1464 = vpop.f32.mrb[0].mxu0
    %v1465 = vadd.f32 0.0, %v1464
    %v1466 = vpop.f32.mrb[0].mxu0
    %v1467 = vadd.f32 0.0, %v1466
    %1468 = vdwg.mxu0
    %v1469 = vadd.f32 %v1467, %v1065
    %1470 = vst [vmem:[#allocation2 + $0x18] sm:$0xff] %v1469
    %v1471 = vld [vmem:[#allocation2 + $0x20] sm:$0xff]
    %v1472 = vadd.f32 %v1471, %v1465
    %v1473 = vmul.f32 %v1472, %v227
    %v1474 = vtanh.pop %v1473
    %v1475 = vmul.f32 %v1474, 0.5
    %v1476 = vadd.f32 %v1475, 0.5
    %v1477 = vmul.f32 %v1476, %v1386
    %1479 = vrot.lane.b32.xlu0 %v1474, 64
    %v1480 = vpop.permute.xlu0 %1479
    %v1482 = vmul.f32 %v1476, %v1480
    %1484 = vrot.lane.b32.xlu0 %v1482, 32
    %v1485 = vpop.permute.xlu0 %1484
    %v1487 = vadd.f32 %v1477, %v1485
    %v1488 = vtanh.pop %v1487
    %1490 = vrot.lane.b32.xlu0 %v1488, 64
    %v1491 = vpop.permute.xlu0 %1490
    %v1493 = vmul.f32 %v1476, %v1491
    %1495 = vrot.lane.b32.xlu0 %v1493, 32
    %v1496 = vpop.permute.xlu0 %1495
    %v1497 = vsel %vm270, %v1496, 0
    %1499 = vmatprep.subr.mxu0 %v1053
    %1500 = vmatpush1.msra.mxu0 %v1052
    %1501 = vmatprep.subr.mxu0 %v1055
    %1502 = vmatpush1.msra.mxu0 %v1054
    %1503 = vmatprep.subr.mxu0 %v1057
    %1504 = vmatpush1.msra.mxu0 %v1056
    %1505 = vmatprep.subr.mxu0 %v1059
    %1506 = vmatpush1.msra.mxu0 %v1058
    %1507 = vmatprep.subr.mxu0 0.0
    %1508 = vmatpush1.msra.mxu0 0.0
    %1509 = vmatprep.subr.mxu0 0.0
    %1510 = vmatpush1.msra.mxu0 0.0
    %1511 = vmatprep.subr.mxu0 0.0
    %1512 = vmatpush1.msra.mxu0 0.0
    %1513 = vmatprep.subr.mxu0 0.0
    %1514 = vmatpush1.msra.mxu0 0.0
    %1515 = vmatprep.subr.mxu0 0.0
    %1516 = vmatpush1.msra.mxu0 0.0
    %1517 = vmatprep.subr.mxu0 0.0
    %1518 = vmatpush1.msra.mxu0 0.0
    %1519 = vmatprep.subr.mxu0 0.0
    %1520 = vmatpush1.msra.mxu0 0.0
    %1521 = vmatprep.subr.mxu0 0.0
    %1522 = vmatpush1.msra.mxu0 0.0
    %1523 = vmatprep.subr.mxu0 0.0
    %1524 = vmatpush1.msra.mxu0 0.0
    %1525 = vmatprep.subr.mxu0 0.0
    %1526 = vmatpush1.msra.mxu0 0.0
    %1527 = vmatprep.subr.mxu0 0.0
    %1528 = vmatpush1.msra.mxu0 0.0
    %1529 = vmatprep.subr.mxu0 0.0
    %1530 = vmatpush1.msra.mxu0 0.0
    %1531 = vmatprep.subr.mxu0 0.0
    %1532 = vmatpush1.msra.mxu0 0.0
    %1533 = vmatprep.subr.mxu0 0.0
    %1534 = vmatpush1.msra.mxu0 0.0
    %1535 = vmatprep.subr.mxu0 0.0
    %1536 = vmatpush1.msra.mxu0 0.0
    %1537 = vmatprep.subr.mxu0 0.0
    %1538 = vmatpush1.msra.mxu0 0.0
    %1539 = vmatprep.subr.mxu0 0.0
    %1540 = vmatpush1.msra.mxu0 0.0
    %1541 = vmatprep.subr.mxu0 0.0
    %1542 = vmatpush1.msra.mxu0 0.0
    %1543 = vmatprep.subr.mxu0 0.0
    %1544 = vmatpush1.msra.mxu0 0.0
    %1545 = vmatprep.subr.mxu0 0.0
    %1546 = vmatpush1.msra.mxu0 0.0
    %1547 = vmatprep.subr.mxu0 0.0
    %1548 = vmatpush1.msra.mxu0 0.0
    %1549 = vmatprep.subr.mxu0 0.0
    %1550 = vmatpush1.msra.mxu0 0.0
    %1551 = vmatprep.subr.mxu0 0.0
    %1552 = vmatpush1.msra.mxu0 0.0
    %1553 = vmatprep.subr.mxu0 0.0
    %1554 = vmatpush1.msra.mxu0 0.0
    %1555 = vmatprep.subr.mxu0 0.0
    %1556 = vmatpush1.msra.mxu0 0.0
    %1557 = vmatprep.subr.mxu0 0.0
    %1558 = vmatpush1.msra.mxu0 0.0
    %1559 = vmatprep.subr.mxu0 0.0
    %1560 = vmatpush1.msra.mxu0 0.0
    %1561 = vmatprep.subr.mxu0 0.0
    %1562 = vmatpush1.msra.mxu0 0.0
    %1563 = vmatprep.mubr.f32.mxu0 0.0
    %1564 = vmatmul.mubr.f32.gmra.mrb[0].mxu0 %v1497
    %v1565 = vpop.f32.mrb[0].mxu0
    %v1566 = vadd.f32 0.0, %v1565
    %v1567 = vpop.f32.mrb[0].mxu0
    %v1568 = vadd.f32 0.0, %v1567
    %1569 = vdwg.mxu0
    %v1570 = vadd.f32 %v1568, %v1065
    %1571 = vst [vmem:[#allocation2 + $0x20] sm:$0xff] %v1570
    %v1572 = vld [vmem:[#allocation2 + $0x28] sm:$0xff]
    %v1573 = vadd.f32 %v1572, %v1566
    %v1574 = vmul.f32 %v1573, %v227
    %v1575 = vtanh.pop %v1574
    %v1576 = vmul.f32 %v1575, 0.5
    %v1577 = vadd.f32 %v1576, 0.5
    %v1578 = vmul.f32 %v1577, %v1487
    %1580 = vrot.lane.b32.xlu0 %v1575, 64
    %v1581 = vpop.permute.xlu0 %1580
    %v1583 = vmul.f32 %v1577, %v1581
    %1585 = vrot.lane.b32.xlu0 %v1583, 32
    %v1586 = vpop.permute.xlu0 %1585
    %v1588 = vadd.f32 %v1578, %v1586
    %v1589 = vtanh.pop %v1588
    %1591 = vrot.lane.b32.xlu0 %v1589, 64
    %v1592 = vpop.permute.xlu0 %1591
    %v1594 = vmul.f32 %v1577, %v1592
    %1596 = vrot.lane.b32.xlu0 %v1594, 32
    %v1597 = vpop.permute.xlu0 %1596
    %v1598 = vsel %vm270, %v1597, 0
    %1600 = vmatprep.subr.mxu0 %v1053
    %1601 = vmatpush1.msra.mxu0 %v1052
    %1602 = vmatprep.subr.mxu0 %v1055
    %1603 = vmatpush1.msra.mxu0 %v1054
    %1604 = vmatprep.subr.mxu0 %v1057
    %1605 = vmatpush1.msra.mxu0 %v1056
    %1606 = vmatprep.subr.mxu0 %v1059
    %1607 = vmatpush1.msra.mxu0 %v1058
    %1608 = vmatprep.subr.mxu0 0.0
    %1609 = vmatpush1.msra.mxu0 0.0
    %1610 = vmatprep.subr.mxu0 0.0
    %1611 = vmatpush1.msra.mxu0 0.0
    %1612 = vmatprep.subr.mxu0 0.0
    %1613 = vmatpush1.msra.mxu0 0.0
    %1614 = vmatprep.subr.mxu0 0.0
    %1615 = vmatpush1.msra.mxu0 0.0
    %1616 = vmatprep.subr.mxu0 0.0
    %1617 = vmatpush1.msra.mxu0 0.0
    %1618 = vmatprep.subr.mxu0 0.0
    %1619 = vmatpush1.msra.mxu0 0.0
    %1620 = vmatprep.subr.mxu0 0.0
    %1621 = vmatpush1.msra.mxu0 0.0
    %1622 = vmatprep.subr.mxu0 0.0
    %1623 = vmatpush1.msra.mxu0 0.0
    %1624 = vmatprep.subr.mxu0 0.0
    %1625 = vmatpush1.msra.mxu0 0.0
    %1626 = vmatprep.subr.mxu0 0.0
    %1627 = vmatpush1.msra.mxu0 0.0
    %1628 = vmatprep.subr.mxu0 0.0
    %1629 = vmatpush1.msra.mxu0 0.0
    %1630 = vmatprep.subr.mxu0 0.0
    %1631 = vmatpush1.msra.mxu0 0.0
    %1632 = vmatprep.subr.mxu0 0.0
    %1633 = vmatpush1.msra.mxu0 0.0
    %1634 = vmatprep.subr.mxu0 0.0
    %1635 = vmatpush1.msra.mxu0 0.0
    %1636 = vmatprep.subr.mxu0 0.0
    %1637 = vmatpush1.msra.mxu0 0.0
    %1638 = vmatprep.subr.mxu0 0.0
    %1639 = vmatpush1.msra.mxu0 0.0
    %1640 = vmatprep.subr.mxu0 0.0
    %1641 = vmatpush1.msra.mxu0 0.0
    %1642 = vmatprep.subr.mxu0 0.0
    %1643 = vmatpush1.msra.mxu0 0.0
    %1644 = vmatprep.subr.mxu0 0.0
    %1645 = vmatpush1.msra.mxu0 0.0
    %1646 = vmatprep.subr.mxu0 0.0
    %1647 = vmatpush1.msra.mxu0 0.0
    %1648 = vmatprep.subr.mxu0 0.0
    %1649 = vmatpush1.msra.mxu0 0.0
    %1650 = vmatprep.subr.mxu0 0.0
    %1651 = vmatpush1.msra.mxu0 0.0
    %1652 = vmatprep.subr.mxu0 0.0
    %1653 = vmatpush1.msra.mxu0 0.0
    %1654 = vmatprep.subr.mxu0 0.0
    %1655 = vmatpush1.msra.mxu0 0.0
    %1656 = vmatprep.subr.mxu0 0.0
    %1657 = vmatpush1.msra.mxu0 0.0
    %1658 = vmatprep.subr.mxu0 0.0
    %1659 = vmatpush1.msra.mxu0 0.0
    %1660 = vmatprep.subr.mxu0 0.0
    %1661 = vmatpush1.msra.mxu0 0.0
    %1662 = vmatprep.subr.mxu0 0.0
    %1663 = vmatpush1.msra.mxu0 0.0
    %1664 = vmatprep.mubr.f32.mxu0 0.0
    %1665 = vmatmul.mubr.f32.gmra.mrb[0].mxu0 %v1598
    %v1666 = vpop.f32.mrb[0].mxu0
    %v1667 = vadd.f32 0.0, %v1666
    %v1668 = vpop.f32.mrb[0].mxu0
    %v1669 = vadd.f32 0.0, %v1668
    %1670 = vdwg.mxu0
    %v1671 = vadd.f32 %v1669, %v1065
    %1672 = vst [vmem:[#allocation2 + $0x28] sm:$0xff] %v1671
    %v1673 = vld [vmem:[#allocation2 + $0x30] sm:$0xff]
    %v1674 = vadd.f32 %v1673, %v1667
    %v1675 = vmul.f32 %v1674, %v227
    %v1676 = vtanh.pop %v1675
    %v1677 = vmul.f32 %v1676, 0.5
    %v1678 = vadd.f32 %v1677, 0.5
    %v1679 = vmul.f32 %v1678, %v1588
    %1681 = vrot.lane.b32.xlu0 %v1676, 64
    %v1682 = vpop.permute.xlu0 %1681
    %v1684 = vmul.f32 %v1678, %v1682
    %1686 = vrot.lane.b32.xlu0 %v1684, 32
    %v1687 = vpop.permute.xlu0 %1686
    %v1689 = vadd.f32 %v1679, %v1687
    %v1690 = vtanh.pop %v1689
    %1692 = vrot.lane.b32.xlu0 %v1690, 64
    %v1693 = vpop.permute.xlu0 %1692
    %v1695 = vmul.f32 %v1678, %v1693
    %1697 = vrot.lane.b32.xlu0 %v1695, 32
    %v1698 = vpop.permute.xlu0 %1697
    %v1699 = vsel %vm270, %v1698, 0
    %1701 = vmatprep.subr.mxu0 %v1053
    %1702 = vmatpush1.msra.mxu0 %v1052
    %1703 = vmatprep.subr.mxu0 %v1055
    %1704 = vmatpush1.msra.mxu0 %v1054
    %1705 = vmatprep.subr.mxu0 %v1057
    %1706 = vmatpush1.msra.mxu0 %v1056
    %1707 = vmatprep.subr.mxu0 %v1059
    %1708 = vmatpush1.msra.mxu0 %v1058
    %1709 = vmatprep.subr.mxu0 0.0
    %1710 = vmatpush1.msra.mxu0 0.0
    %1711 = vmatprep.subr.mxu0 0.0
    %1712 = vmatpush1.msra.mxu0 0.0
    %1713 = vmatprep.subr.mxu0 0.0
    %1714 = vmatpush1.msra.mxu0 0.0
    %1715 = vmatprep.subr.mxu0 0.0
    %1716 = vmatpush1.msra.mxu0 0.0
    %1717 = vmatprep.subr.mxu0 0.0
    %1718 = vmatpush1.msra.mxu0 0.0
    %1719 = vmatprep.subr.mxu0 0.0
    %1720 = vmatpush1.msra.mxu0 0.0
    %1721 = vmatprep.subr.mxu0 0.0
    %1722 = vmatpush1.msra.mxu0 0.0
    %1723 = vmatprep.subr.mxu0 0.0
    %1724 = vmatpush1.msra.mxu0 0.0
    %1725 = vmatprep.subr.mxu0 0.0
    %1726 = vmatpush1.msra.mxu0 0.0
    %1727 = vmatprep.subr.mxu0 0.0
    %1728 = vmatpush1.msra.mxu0 0.0
    %1729 = vmatprep.subr.mxu0 0.0
    %1730 = vmatpush1.msra.mxu0 0.0
    %1731 = vmatprep.subr.mxu0 0.0
    %1732 = vmatpush1.msra.mxu0 0.0
    %1733 = vmatprep.subr.mxu0 0.0
    %1734 = vmatpush1.msra.mxu0 0.0
    %1735 = vmatprep.subr.mxu0 0.0
    %1736 = vmatpush1.msra.mxu0 0.0
    %1737 = vmatprep.subr.mxu0 0.0
    %1738 = vmatpush1.msra.mxu0 0.0
    %1739 = vmatprep.subr.mxu0 0.0
    %1740 = vmatpush1.msra.mxu0 0.0
    %1741 = vmatprep.subr.mxu0 0.0
    %1742 = vmatpush1.msra.mxu0 0.0
    %1743 = vmatprep.subr.mxu0 0.0
    %1744 = vmatpush1.msra.mxu0 0.0
    %1745 = vmatprep.subr.mxu0 0.0
    %1746 = vmatpush1.msra.mxu0 0.0
    %1747 = vmatprep.subr.mxu0 0.0
    %1748 = vmatpush1.msra.mxu0 0.0
    %1749 = vmatprep.subr.mxu0 0.0
    %1750 = vmatpush1.msra.mxu0 0.0
    %1751 = vmatprep.subr.mxu0 0.0
    %1752 = vmatpush1.msra.mxu0 0.0
    %1753 = vmatprep.subr.mxu0 0.0
    %1754 = vmatpush1.msra.mxu0 0.0
    %1755 = vmatprep.subr.mxu0 0.0
    %1756 = vmatpush1.msra.mxu0 0.0
    %1757 = vmatprep.subr.mxu0 0.0
    %1758 = vmatpush1.msra.mxu0 0.0
    %1759 = vmatprep.subr.mxu0 0.0
    %1760 = vmatpush1.msra.mxu0 0.0
    %1761 = vmatprep.subr.mxu0 0.0
    %1762 = vmatpush1.msra.mxu0 0.0
    %1763 = vmatprep.subr.mxu0 0.0
    %1764 = vmatpush1.msra.mxu0 0.0
    %1765 = vmatprep.mubr.f32.mxu0 0.0
    %1766 = vmatmul.mubr.f32.gmra.mrb[0].mxu0 %v1699
    %v1767 = vpop.f32.mrb[0].mxu0
    %v1768 = vadd.f32 0.0, %v1767
    %v1769 = vpop.f32.mrb[0].mxu0
    %v1770 = vadd.f32 0.0, %v1769
    %1771 = vdwg.mxu0
    %v1772 = vadd.f32 %v1770, %v1065
    %1773 = vst [vmem:[#allocation2 + $0x30] sm:$0xff] %v1772
    %v1774 = vld [vmem:[#allocation2 + $0x38] sm:$0xff]
    %v1775 = vadd.f32 %v1774, %v1768
    %v1776 = vmul.f32 %v1775, %v227
    %v1777 = vtanh.pop %v1776
    %v1778 = vmul.f32 %v1777, 0.5
    %v1779 = vadd.f32 %v1778, 0.5
    %v1780 = vmul.f32 %v1779, %v1689
    %1782 = vrot.lane.b32.xlu0 %v1777, 64
    %v1783 = vpop.permute.xlu0 %1782
    %v1785 = vmul.f32 %v1779, %v1783
    %1787 = vrot.lane.b32.xlu0 %v1785, 32
    %v1788 = vpop.permute.xlu0 %1787
    %v1790 = vadd.f32 %v1780, %v1788
    %v1791 = vtanh.pop %v1790
    %1793 = vrot.lane.b32.xlu0 %v1791, 64
    %v1794 = vpop.permute.xlu0 %1793
    %v1796 = vmul.f32 %v1779, %v1794
    %1798 = vrot.lane.b32.xlu0 %v1796, 32
    %v1799 = vpop.permute.xlu0 %1798
    %v1800 = vsel %vm270, %v1799, 0
    %1802 = vmatprep.subr.mxu0 %v1053
    %1803 = vmatpush1.msra.mxu0 %v1052
    %1804 = vmatprep.subr.mxu0 %v1055
    %1805 = vmatpush1.msra.mxu0 %v1054
    %1806 = vmatprep.subr.mxu0 %v1057
    %1807 = vmatpush1.msra.mxu0 %v1056
    %1808 = vmatprep.subr.mxu0 %v1059
    %1809 = vmatpush1.msra.mxu0 %v1058
    %1810 = vmatprep.subr.mxu0 0.0
    %1811 = vmatpush1.msra.mxu0 0.0
    %1812 = vmatprep.subr.mxu0 0.0
    %1813 = vmatpush1.msra.mxu0 0.0
    %1814 = vmatprep.subr.mxu0 0.0
    %1815 = vmatpush1.msra.mxu0 0.0
    %1816 = vmatprep.subr.mxu0 0.0
    %1817 = vmatpush1.msra.mxu0 0.0
    %1818 = vmatprep.subr.mxu0 0.0
    %1819 = vmatpush1.msra.mxu0 0.0
    %1820 = vmatprep.subr.mxu0 0.0
    %1821 = vmatpush1.msra.mxu0 0.0
    %1822 = vmatprep.subr.mxu0 0.0
    %1823 = vmatpush1.msra.mxu0 0.0
    %1824 = vmatprep.subr.mxu0 0.0
    %1825 = vmatpush1.msra.mxu0 0.0
    %1826 = vmatprep.subr.mxu0 0.0
    %1827 = vmatpush1.msra.mxu0 0.0
    %1828 = vmatprep.subr.mxu0 0.0
    %1829 = vmatpush1.msra.mxu0 0.0
    %1830 = vmatprep.subr.mxu0 0.0
    %1831 = vmatpush1.msra.mxu0 0.0
    %1832 = vmatprep.subr.mxu0 0.0
    %1833 = vmatpush1.msra.mxu0 0.0
    %1834 = vmatprep.subr.mxu0 0.0
    %1835 = vmatpush1.msra.mxu0 0.0
    %1836 = vmatprep.subr.mxu0 0.0
    %1837 = vmatpush1.msra.mxu0 0.0
    %1838 = vmatprep.subr.mxu0 0.0
    %1839 = vmatpush1.msra.mxu0 0.0
    %1840 = vmatprep.subr.mxu0 0.0
    %1841 = vmatpush1.msra.mxu0 0.0
    %1842 = vmatprep.subr.mxu0 0.0
    %1843 = vmatpush1.msra.mxu0 0.0
    %1844 = vmatprep.subr.mxu0 0.0
    %1845 = vmatpush1.msra.mxu0 0.0
    %1846 = vmatprep.subr.mxu0 0.0
    %1847 = vmatpush1.msra.mxu0 0.0
    %1848 = vmatprep.subr.mxu0 0.0
    %1849 = vmatpush1.msra.mxu0 0.0
    %1850 = vmatprep.subr.mxu0 0.0
    %1851 = vmatpush1.msra.mxu0 0.0
    %1852 = vmatprep.subr.mxu0 0.0
    %1853 = vmatpush1.msra.mxu0 0.0
    %1854 = vmatprep.subr.mxu0 0.0
    %1855 = vmatpush1.msra.mxu0 0.0
    %1856 = vmatprep.subr.mxu0 0.0
    %1857 = vmatpush1.msra.mxu0 0.0
    %1858 = vmatprep.subr.mxu0 0.0
    %1859 = vmatpush1.msra.mxu0 0.0
    %1860 = vmatprep.subr.mxu0 0.0
    %1861 = vmatpush1.msra.mxu0 0.0
    %1862 = vmatprep.subr.mxu0 0.0
    %1863 = vmatpush1.msra.mxu0 0.0
    %1864 = vmatprep.subr.mxu0 0.0
    %1865 = vmatpush1.msra.mxu0 0.0
    %1866 = vmatprep.mubr.f32.mxu0 0.0
    %1867 = vmatmul.mubr.f32.gmra.mrb[0].mxu0 %v1800
    %v1868 = vpop.f32.mrb[0].mxu0
    %v1869 = vpop.f32.mrb[0].mxu0
    %v1870 = vadd.f32 0.0, %v1869
    %1871 = vdwg.mxu0
    %v1872 = vadd.f32 %v1870, %v1065
    %1873 = vst [vmem:[#allocation2 + $0x38] sm:$0xff] %v1872
    %v1874 = vld [vmem:[#allocation6] sm:$0xff]
    %v1875 = vld [vmem:[#allocation6 + $0x8] sm:$0xff]
    %v1876 = vld [vmem:[#allocation6 + $0x10] sm:$0xff]
    %v1877 = vld [vmem:[#allocation6 + $0x18] sm:$0xff]
    %v1878 = vld [vmem:[#allocation2] sm:$0xff]
    %v1879 = vadd.f32 %v1878, 0.0
    %v1880 = vmul.f32 %v1879, %v227
    %v1881 = vtanh.pop %v1880
    %v1882 = vmul.f32 %v1881, 0.5
    %v1883 = vadd.f32 %v1882, 0.5
    %v1884 = vmul.f32 %v1883, 0.0
    %1886 = vrot.lane.b32.xlu0 %v1881, 64
    %v1887 = vpop.permute.xlu0 %1886
    %v1889 = vmul.f32 %v1883, %v1887
    %1891 = vrot.lane.b32.xlu0 %v1889, 32
    %v1892 = vpop.permute.xlu0 %1891
    %v1894 = vadd.f32 %v1884, %v1892
    %v1895 = vtanh.pop %v1894
    %1897 = vrot.lane.b32.xlu0 %v1895, 64
    %v1898 = vpop.permute.xlu0 %1897
    %v1900 = vmul.f32 %v1883, %v1898
    %1902 = vrot.lane.b32.xlu0 %v1900, 32
    %v1903 = vpop.permute.xlu0 %1902
    %v1904 = vsel %vm270, %v1903, 0
    %1906 = vmatprep.subr.mxu0 0.0
    %1907 = vmatpush1.msra.mxu0 %v1874
    %1908 = vmatprep.subr.mxu0 0.0
    %1909 = vmatpush1.msra.mxu0 %v1875
    %1910 = vmatprep.subr.mxu0 0.0
    %1911 = vmatpush1.msra.mxu0 %v1876
    %1912 = vmatprep.subr.mxu0 0.0
    %1913 = vmatpush1.msra.mxu0 %v1877
    %1914 = vmatprep.subr.mxu0 0.0
    %1915 = vmatpush1.msra.mxu0 0.0
    %1916 = vmatprep.subr.mxu0 0.0
    %1917 = vmatpush1.msra.mxu0 0.0
    %1918 = vmatprep.subr.mxu0 0.0
    %1919 = vmatpush1.msra.mxu0 0.0
    %1920 = vmatprep.subr.mxu0 0.0
    %1921 = vmatpush1.msra.mxu0 0.0
    %1922 = vmatprep.subr.mxu0 0.0
    %1923 = vmatpush1.msra.mxu0 0.0
    %1924 = vmatprep.subr.mxu0 0.0
    %1925 = vmatpush1.msra.mxu0 0.0
    %1926 = vmatprep.subr.mxu0 0.0
    %1927 = vmatpush1.msra.mxu0 0.0
    %1928 = vmatprep.subr.mxu0 0.0
    %1929 = vmatpush1.msra.mxu0 0.0
    %1930 = vmatprep.subr.mxu0 0.0
    %1931 = vmatpush1.msra.mxu0 0.0
    %1932 = vmatprep.subr.mxu0 0.0
    %1933 = vmatpush1.msra.mxu0 0.0
    %1934 = vmatprep.subr.mxu0 0.0
    %1935 = vmatpush1.msra.mxu0 0.0
    %1936 = vmatprep.subr.mxu0 0.0
    %1937 = vmatpush1.msra.mxu0 0.0
    %1938 = vmatprep.subr.mxu0 0.0
    %1939 = vmatpush1.msra.mxu0 0.0
    %1940 = vmatprep.subr.mxu0 0.0
    %1941 = vmatpush1.msra.mxu0 0.0
    %1942 = vmatprep.subr.mxu0 0.0
    %1943 = vmatpush1.msra.mxu0 0.0
    %1944 = vmatprep.subr.mxu0 0.0
    %1945 = vmatpush1.msra.mxu0 0.0
    %1946 = vmatprep.subr.mxu0 0.0
    %1947 = vmatpush1.msra.mxu0 0.0
    %1948 = vmatprep.subr.mxu0 0.0
    %1949 = vmatpush1.msra.mxu0 0.0
    %1950 = vmatprep.subr.mxu0 0.0
    %1951 = vmatpush1.msra.mxu0 0.0
    %1952 = vmatprep.subr.mxu0 0.0
    %1953 = vmatpush1.msra.mxu0 0.0
    %1954 = vmatprep.subr.mxu0 0.0
    %1955 = vmatpush1.msra.mxu0 0.0
    %1956 = vmatprep.subr.mxu0 0.0
    %1957 = vmatpush1.msra.mxu0 0.0
    %1958 = vmatprep.subr.mxu0 0.0
    %1959 = vmatpush1.msra.mxu0 0.0
    %1960 = vmatprep.subr.mxu0 0.0
    %1961 = vmatpush1.msra.mxu0 0.0
    %1962 = vmatprep.subr.mxu0 0.0
    %1963 = vmatpush1.msra.mxu0 0.0
    %1964 = vmatprep.subr.mxu0 0.0
    %1965 = vmatpush1.msra.mxu0 0.0
    %1966 = vmatprep.subr.mxu0 0.0
    %1967 = vmatpush1.msra.mxu0 0.0
    %1968 = vmatprep.subr.mxu0 0.0
    %1969 = vmatpush1.msra.mxu0 0.0
    %1970 = vmatprep.mubr.f32.mxu0 0.0
    %1971 = vmatmul.mubr.f32.gmra.mrb[0].mxu0 %v1904
    %v1972 = vpop.f32.mrb[0].mxu0
    %v1973 = vadd.f32 0.0, %v1972
    %v1974 = vpop.f32.mrb[0].mxu0
    %1975 = vdwg.mxu0
    %v1976 = vld [vmem:[#allocation2 + $0x8] sm:$0xff]
    %v1977 = vadd.f32 %v1976, %v1973
    %v1978 = vmul.f32 %v1977, %v227
    %v1979 = vtanh.pop %v1978
    %v1980 = vmul.f32 %v1979, 0.5
    %v1981 = vadd.f32 %v1980, 0.5
    %v1982 = vmul.f32 %v1981, %v1894
    %1984 = vrot.lane.b32.xlu0 %v1979, 64
    %v1985 = vpop.permute.xlu0 %1984
    %v1987 = vmul.f32 %v1981, %v1985
    %1989 = vrot.lane.b32.xlu0 %v1987, 32
    %v1990 = vpop.permute.xlu0 %1989
    %v1992 = vadd.f32 %v1982, %v1990
    %v1993 = vtanh.pop %v1992
    %1995 = vrot.lane.b32.xlu0 %v1993, 64
    %v1996 = vpop.permute.xlu0 %1995
    %v1998 = vmul.f32 %v1981, %v1996
    %2000 = vrot.lane.b32.xlu0 %v1998, 32
    %v2001 = vpop.permute.xlu0 %2000
    %v2002 = vsel %vm270, %v2001, 0
    %2004 = vmatprep.subr.mxu0 0.0
    %2005 = vmatpush1.msra.mxu0 %v1874
    %2006 = vmatprep.subr.mxu0 0.0
    %2007 = vmatpush1.msra.mxu0 %v1875
    %2008 = vmatprep.subr.mxu0 0.0
    %2009 = vmatpush1.msra.mxu0 %v1876
    %2010 = vmatprep.subr.mxu0 0.0
    %2011 = vmatpush1.msra.mxu0 %v1877
    %2012 = vmatprep.subr.mxu0 0.0
    %2013 = vmatpush1.msra.mxu0 0.0
    %2014 = vmatprep.subr.mxu0 0.0
    %2015 = vmatpush1.msra.mxu0 0.0
    %2016 = vmatprep.subr.mxu0 0.0
    %2017 = vmatpush1.msra.mxu0 0.0
    %2018 = vmatprep.subr.mxu0 0.0
    %2019 = vmatpush1.msra.mxu0 0.0
    %2020 = vmatprep.subr.mxu0 0.0
    %2021 = vmatpush1.msra.mxu0 0.0
    %2022 = vmatprep.subr.mxu0 0.0
    %2023 = vmatpush1.msra.mxu0 0.0
    %2024 = vmatprep.subr.mxu0 0.0
    %2025 = vmatpush1.msra.mxu0 0.0
    %2026 = vmatprep.subr.mxu0 0.0
    %2027 = vmatpush1.msra.mxu0 0.0
    %2028 = vmatprep.subr.mxu0 0.0
    %2029 = vmatpush1.msra.mxu0 0.0
    %2030 = vmatprep.subr.mxu0 0.0
    %2031 = vmatpush1.msra.mxu0 0.0
    %2032 = vmatprep.subr.mxu0 0.0
    %2033 = vmatpush1.msra.mxu0 0.0
    %2034 = vmatprep.subr.mxu0 0.0
    %2035 = vmatpush1.msra.mxu0 0.0
    %2036 = vmatprep.subr.mxu0 0.0
    %2037 = vmatpush1.msra.mxu0 0.0
    %2038 = vmatprep.subr.mxu0 0.0
    %2039 = vmatpush1.msra.mxu0 0.0
    %2040 = vmatprep.subr.mxu0 0.0
    %2041 = vmatpush1.msra.mxu0 0.0
    %2042 = vmatprep.subr.mxu0 0.0
    %2043 = vmatpush1.msra.mxu0 0.0
    %2044 = vmatprep.subr.mxu0 0.0
    %2045 = vmatpush1.msra.mxu0 0.0
    %2046 = vmatprep.subr.mxu0 0.0
    %2047 = vmatpush1.msra.mxu0 0.0
    %2048 = vmatprep.subr.mxu0 0.0
    %2049 = vmatpush1.msra.mxu0 0.0
    %2050 = vmatprep.subr.mxu0 0.0
    %2051 = vmatpush1.msra.mxu0 0.0
    %2052 = vmatprep.subr.mxu0 0.0
    %2053 = vmatpush1.msra.mxu0 0.0
    %2054 = vmatprep.subr.mxu0 0.0
    %2055 = vmatpush1.msra.mxu0 0.0
    %2056 = vmatprep.subr.mxu0 0.0
    %2057 = vmatpush1.msra.mxu0 0.0
    %2058 = vmatprep.subr.mxu0 0.0
    %2059 = vmatpush1.msra.mxu0 0.0
    %2060 = vmatprep.subr.mxu0 0.0
    %2061 = vmatpush1.msra.mxu0 0.0
    %2062 = vmatprep.subr.mxu0 0.0
    %2063 = vmatpush1.msra.mxu0 0.0
    %2064 = vmatprep.subr.mxu0 0.0
    %2065 = vmatpush1.msra.mxu0 0.0
    %2066 = vmatprep.subr.mxu0 0.0
    %2067 = vmatpush1.msra.mxu0 0.0
    %2068 = vmatprep.mubr.f32.mxu0 0.0
    %2069 = vmatmul.mubr.f32.gmra.mrb[0].mxu0 %v2002
    %v2070 = vpop.f32.mrb[0].mxu0
    %v2071 = vadd.f32 0.0, %v2070
    %v2072 = vpop.f32.mrb[0].mxu0
    %2073 = vdwg.mxu0
    %v2074 = vld [vmem:[#allocation2 + $0x10] sm:$0xff]
    %v2075 = vadd.f32 %v2074, %v2071
    %v2076 = vmul.f32 %v2075, %v227
    %v2077 = vtanh.pop %v2076
    %v2078 = vmul.f32 %v2077, 0.5
    %v2079 = vadd.f32 %v2078, 0.5
    %v2080 = vmul.f32 %v2079, %v1992
    %2082 = vrot.lane.b32.xlu0 %v2077, 64
    %v2083 = vpop.permute.xlu0 %2082
    %v2085 = vmul.f32 %v2079, %v2083
    %2087 = vrot.lane.b32.xlu0 %v2085, 32
    %v2088 = vpop.permute.xlu0 %2087
    %v2090 = vadd.f32 %v2080, %v2088
    %v2091 = vtanh.pop %v2090
    %2093 = vrot.lane.b32.xlu0 %v2091, 64
    %v2094 = vpop.permute.xlu0 %2093
    %v2096 = vmul.f32 %v2079, %v2094
    %2098 = vrot.lane.b32.xlu0 %v2096, 32
    %v2099 = vpop.permute.xlu0 %2098
    %v2100 = vsel %vm270, %v2099, 0
    %2102 = vmatprep.subr.mxu0 0.0
    %2103 = vmatpush1.msra.mxu0 %v1874
    %2104 = vmatprep.subr.mxu0 0.0
    %2105 = vmatpush1.msra.mxu0 %v1875
    %2106 = vmatprep.subr.mxu0 0.0
    %2107 = vmatpush1.msra.mxu0 %v1876
    %2108 = vmatprep.subr.mxu0 0.0
    %2109 = vmatpush1.msra.mxu0 %v1877
    %2110 = vmatprep.subr.mxu0 0.0
    %2111 = vmatpush1.msra.mxu0 0.0
    %2112 = vmatprep.subr.mxu0 0.0
    %2113 = vmatpush1.msra.mxu0 0.0
    %2114 = vmatprep.subr.mxu0 0.0
    %2115 = vmatpush1.msra.mxu0 0.0
    %2116 = vmatprep.subr.mxu0 0.0
    %2117 = vmatpush1.msra.mxu0 0.0
    %2118 = vmatprep.subr.mxu0 0.0
    %2119 = vmatpush1.msra.mxu0 0.0
    %2120 = vmatprep.subr.mxu0 0.0
    %2121 = vmatpush1.msra.mxu0 0.0
    %2122 = vmatprep.subr.mxu0 0.0
    %2123 = vmatpush1.msra.mxu0 0.0
    %2124 = vmatprep.subr.mxu0 0.0
    %2125 = vmatpush1.msra.mxu0 0.0
    %2126 = vmatprep.subr.mxu0 0.0
    %2127 = vmatpush1.msra.mxu0 0.0
    %2128 = vmatprep.subr.mxu0 0.0
    %2129 = vmatpush1.msra.mxu0 0.0
    %2130 = vmatprep.subr.mxu0 0.0
    %2131 = vmatpush1.msra.mxu0 0.0
    %2132 = vmatprep.subr.mxu0 0.0
    %2133 = vmatpush1.msra.mxu0 0.0
    %2134 = vmatprep.subr.mxu0 0.0
    %2135 = vmatpush1.msra.mxu0 0.0
    %2136 = vmatprep.subr.mxu0 0.0
    %2137 = vmatpush1.msra.mxu0 0.0
    %2138 = vmatprep.subr.mxu0 0.0
    %2139 = vmatpush1.msra.mxu0 0.0
    %2140 = vmatprep.subr.mxu0 0.0
    %2141 = vmatpush1.msra.mxu0 0.0
    %2142 = vmatprep.subr.mxu0 0.0
    %2143 = vmatpush1.msra.mxu0 0.0
    %2144 = vmatprep.subr.mxu0 0.0
    %2145 = vmatpush1.msra.mxu0 0.0
    %2146 = vmatprep.subr.mxu0 0.0
    %2147 = vmatpush1.msra.mxu0 0.0
    %2148 = vmatprep.subr.mxu0 0.0
    %2149 = vmatpush1.msra.mxu0 0.0
    %2150 = vmatprep.subr.mxu0 0.0
    %2151 = vmatpush1.msra.mxu0 0.0
    %2152 = vmatprep.subr.mxu0 0.0
    %2153 = vmatpush1.msra.mxu0 0.0
    %2154 = vmatprep.subr.mxu0 0.0
    %2155 = vmatpush1.msra.mxu0 0.0
    %2156 = vmatprep.subr.mxu0 0.0
    %2157 = vmatpush1.msra.mxu0 0.0
    %2158 = vmatprep.subr.mxu0 0.0
    %2159 = vmatpush1.msra.mxu0 0.0
    %2160 = vmatprep.subr.mxu0 0.0
    %2161 = vmatpush1.msra.mxu0 0.0
    %2162 = vmatprep.subr.mxu0 0.0
    %2163 = vmatpush1.msra.mxu0 0.0
    %2164 = vmatprep.subr.mxu0 0.0
    %2165 = vmatpush1.msra.mxu0 0.0
    %2166 = vmatprep.mubr.f32.mxu0 0.0
    %2167 = vmatmul.mubr.f32.gmra.mrb[0].mxu0 %v2100
    %v2168 = vpop.f32.mrb[0].mxu0
    %v2169 = vadd.f32 0.0, %v2168
    %v2170 = vpop.f32.mrb[0].mxu0
    %2171 = vdwg.mxu0
    %v2172 = vld [vmem:[#allocation2 + $0x18] sm:$0xff]
    %v2173 = vadd.f32 %v2172, %v2169
    %v2174 = vmul.f32 %v2173, %v227
    %v2175 = vtanh.pop %v2174
    %v2176 = vmul.f32 %v2175, 0.5
    %v2177 = vadd.f32 %v2176, 0.5
    %v2178 = vmul.f32 %v2177, %v2090
    %2180 = vrot.lane.b32.xlu0 %v2175, 64
    %v2181 = vpop.permute.xlu0 %2180
    %v2183 = vmul.f32 %v2177, %v2181
    %2185 = vrot.lane.b32.xlu0 %v2183, 32
    %v2186 = vpop.permute.xlu0 %2185
    %v2188 = vadd.f32 %v2178, %v2186
    %v2189 = vtanh.pop %v2188
    %2191 = vrot.lane.b32.xlu0 %v2189, 64
    %v2192 = vpop.permute.xlu0 %2191
    %v2194 = vmul.f32 %v2177, %v2192
    %2196 = vrot.lane.b32.xlu0 %v2194, 32
    %v2197 = vpop.permute.xlu0 %2196
    %v2198 = vsel %vm270, %v2197, 0
    %2200 = vmatprep.subr.mxu0 0.0
    %2201 = vmatpush1.msra.mxu0 %v1874
    %2202 = vmatprep.subr.mxu0 0.0
    %2203 = vmatpush1.msra.mxu0 %v1875
    %2204 = vmatprep.subr.mxu0 0.0
    %2205 = vmatpush1.msra.mxu0 %v1876
    %2206 = vmatprep.subr.mxu0 0.0
    %2207 = vmatpush1.msra.mxu0 %v1877
    %2208 = vmatprep.subr.mxu0 0.0
    %2209 = vmatpush1.msra.mxu0 0.0
    %2210 = vmatprep.subr.mxu0 0.0
    %2211 = vmatpush1.msra.mxu0 0.0
    %2212 = vmatprep.subr.mxu0 0.0
    %2213 = vmatpush1.msra.mxu0 0.0
    %2214 = vmatprep.subr.mxu0 0.0
    %2215 = vmatpush1.msra.mxu0 0.0
    %2216 = vmatprep.subr.mxu0 0.0
    %2217 = vmatpush1.msra.mxu0 0.0
    %2218 = vmatprep.subr.mxu0 0.0
    %2219 = vmatpush1.msra.mxu0 0.0
    %2220 = vmatprep.subr.mxu0 0.0
    %2221 = vmatpush1.msra.mxu0 0.0
    %2222 = vmatprep.subr.mxu0 0.0
    %2223 = vmatpush1.msra.mxu0 0.0
    %2224 = vmatprep.subr.mxu0 0.0
    %2225 = vmatpush1.msra.mxu0 0.0
    %2226 = vmatprep.subr.mxu0 0.0
    %2227 = vmatpush1.msra.mxu0 0.0
    %2228 = vmatprep.subr.mxu0 0.0
    %2229 = vmatpush1.msra.mxu0 0.0
    %2230 = vmatprep.subr.mxu0 0.0
    %2231 = vmatpush1.msra.mxu0 0.0
    %2232 = vmatprep.subr.mxu0 0.0
    %2233 = vmatpush1.msra.mxu0 0.0
    %2234 = vmatprep.subr.mxu0 0.0
    %2235 = vmatpush1.msra.mxu0 0.0
    %2236 = vmatprep.subr.mxu0 0.0
    %2237 = vmatpush1.msra.mxu0 0.0
    %2238 = vmatprep.subr.mxu0 0.0
    %2239 = vmatpush1.msra.mxu0 0.0
    %2240 = vmatprep.subr.mxu0 0.0
    %2241 = vmatpush1.msra.mxu0 0.0
    %2242 = vmatprep.subr.mxu0 0.0
    %2243 = vmatpush1.msra.mxu0 0.0
    %2244 = vmatprep.subr.mxu0 0.0
    %2245 = vmatpush1.msra.mxu0 0.0
    %2246 = vmatprep.subr.mxu0 0.0
    %2247 = vmatpush1.msra.mxu0 0.0
    %2248 = vmatprep.subr.mxu0 0.0
    %2249 = vmatpush1.msra.mxu0 0.0
    %2250 = vmatprep.subr.mxu0 0.0
    %2251 = vmatpush1.msra.mxu0 0.0
    %2252 = vmatprep.subr.mxu0 0.0
    %2253 = vmatpush1.msra.mxu0 0.0
    %2254 = vmatprep.subr.mxu0 0.0
    %2255 = vmatpush1.msra.mxu0 0.0
    %2256 = vmatprep.subr.mxu0 0.0
    %2257 = vmatpush1.msra.mxu0 0.0
    %2258 = vmatprep.subr.mxu0 0.0
    %2259 = vmatpush1.msra.mxu0 0.0
    %2260 = vmatprep.subr.mxu0 0.0
    %2261 = vmatpush1.msra.mxu0 0.0
    %2262 = vmatprep.subr.mxu0 0.0
    %2263 = vmatpush1.msra.mxu0 0.0
    %2264 = vmatprep.mubr.f32.mxu0 0.0
    %2265 = vmatmul.mubr.f32.gmra.mrb[0].mxu0 %v2198
    %v2266 = vpop.f32.mrb[0].mxu0
    %v2267 = vadd.f32 0.0, %v2266
    %v2268 = vpop.f32.mrb[0].mxu0
    %2269 = vdwg.mxu0
    %v2270 = vld [vmem:[#allocation2 + $0x20] sm:$0xff]
    %v2271 = vadd.f32 %v2270, %v2267
    %v2272 = vmul.f32 %v2271, %v227
    %v2273 = vtanh.pop %v2272
    %v2274 = vmul.f32 %v2273, 0.5
    %v2275 = vadd.f32 %v2274, 0.5
    %v2276 = vmul.f32 %v2275, %v2188
    %2278 = vrot.lane.b32.xlu0 %v2273, 64
    %v2279 = vpop.permute.xlu0 %2278
    %v2281 = vmul.f32 %v2275, %v2279
    %2283 = vrot.lane.b32.xlu0 %v2281, 32
    %v2284 = vpop.permute.xlu0 %2283
    %v2286 = vadd.f32 %v2276, %v2284
    %v2287 = vtanh.pop %v2286
    %2289 = vrot.lane.b32.xlu0 %v2287, 64
    %v2290 = vpop.permute.xlu0 %2289
    %v2292 = vmul.f32 %v2275, %v2290
    %2294 = vrot.lane.b32.xlu0 %v2292, 32
    %v2295 = vpop.permute.xlu0 %2294
    %v2296 = vsel %vm270, %v2295, 0
    %2298 = vmatprep.subr.mxu0 0.0
    %2299 = vmatpush1.msra.mxu0 %v1874
    %2300 = vmatprep.subr.mxu0 0.0
    %2301 = vmatpush1.msra.mxu0 %v1875
    %2302 = vmatprep.subr.mxu0 0.0
    %2303 = vmatpush1.msra.mxu0 %v1876
    %2304 = vmatprep.subr.mxu0 0.0
    %2305 = vmatpush1.msra.mxu0 %v1877
    %2306 = vmatprep.subr.mxu0 0.0
    %2307 = vmatpush1.msra.mxu0 0.0
    %2308 = vmatprep.subr.mxu0 0.0
    %2309 = vmatpush1.msra.mxu0 0.0
    %2310 = vmatprep.subr.mxu0 0.0
    %2311 = vmatpush1.msra.mxu0 0.0
    %2312 = vmatprep.subr.mxu0 0.0
    %2313 = vmatpush1.msra.mxu0 0.0
    %2314 = vmatprep.subr.mxu0 0.0
    %2315 = vmatpush1.msra.mxu0 0.0
    %2316 = vmatprep.subr.mxu0 0.0
    %2317 = vmatpush1.msra.mxu0 0.0
    %2318 = vmatprep.subr.mxu0 0.0
    %2319 = vmatpush1.msra.mxu0 0.0
    %2320 = vmatprep.subr.mxu0 0.0
    %2321 = vmatpush1.msra.mxu0 0.0
    %2322 = vmatprep.subr.mxu0 0.0
    %2323 = vmatpush1.msra.mxu0 0.0
    %2324 = vmatprep.subr.mxu0 0.0
    %2325 = vmatpush1.msra.mxu0 0.0
    %2326 = vmatprep.subr.mxu0 0.0
    %2327 = vmatpush1.msra.mxu0 0.0
    %2328 = vmatprep.subr.mxu0 0.0
    %2329 = vmatpush1.msra.mxu0 0.0
    %2330 = vmatprep.subr.mxu0 0.0
    %2331 = vmatpush1.msra.mxu0 0.0
    %2332 = vmatprep.subr.mxu0 0.0
    %2333 = vmatpush1.msra.mxu0 0.0
    %2334 = vmatprep.subr.mxu0 0.0
    %2335 = vmatpush1.msra.mxu0 0.0
    %2336 = vmatprep.subr.mxu0 0.0
    %2337 = vmatpush1.msra.mxu0 0.0
    %2338 = vmatprep.subr.mxu0 0.0
    %2339 = vmatpush1.msra.mxu0 0.0
    %2340 = vmatprep.subr.mxu0 0.0
    %2341 = vmatpush1.msra.mxu0 0.0
    %2342 = vmatprep.subr.mxu0 0.0
    %2343 = vmatpush1.msra.mxu0 0.0
    %2344 = vmatprep.subr.mxu0 0.0
    %2345 = vmatpush1.msra.mxu0 0.0
    %2346 = vmatprep.subr.mxu0 0.0
    %2347 = vmatpush1.msra.mxu0 0.0
    %2348 = vmatprep.subr.mxu0 0.0
    %2349 = vmatpush1.msra.mxu0 0.0
    %2350 = vmatprep.subr.mxu0 0.0
    %2351 = vmatpush1.msra.mxu0 0.0
    %2352 = vmatprep.subr.mxu0 0.0
    %2353 = vmatpush1.msra.mxu0 0.0
    %2354 = vmatprep.subr.mxu0 0.0
    %2355 = vmatpush1.msra.mxu0 0.0
    %2356 = vmatprep.subr.mxu0 0.0
    %2357 = vmatpush1.msra.mxu0 0.0
    %2358 = vmatprep.subr.mxu0 0.0
    %2359 = vmatpush1.msra.mxu0 0.0
    %2360 = vmatprep.subr.mxu0 0.0
    %2361 = vmatpush1.msra.mxu0 0.0
    %2362 = vmatprep.mubr.f32.mxu0 0.0
    %2363 = vmatmul.mubr.f32.gmra.mrb[0].mxu0 %v2296
    %v2364 = vpop.f32.mrb[0].mxu0
    %v2365 = vadd.f32 0.0, %v2364
    %v2366 = vpop.f32.mrb[0].mxu0
    %2367 = vdwg.mxu0
    %v2368 = vld [vmem:[#allocation2 + $0x28] sm:$0xff]
    %v2369 = vadd.f32 %v2368, %v2365
    %v2370 = vmul.f32 %v2369, %v227
    %v2371 = vtanh.pop %v2370
    %v2372 = vmul.f32 %v2371, 0.5
    %v2373 = vadd.f32 %v2372, 0.5
    %v2374 = vmul.f32 %v2373, %v2286
    %2376 = vrot.lane.b32.xlu0 %v2371, 64
    %v2377 = vpop.permute.xlu0 %2376
    %v2379 = vmul.f32 %v2373, %v2377
    %2381 = vrot.lane.b32.xlu0 %v2379, 32
    %v2382 = vpop.permute.xlu0 %2381
    %v2384 = vadd.f32 %v2374, %v2382
    %v2385 = vtanh.pop %v2384
    %2387 = vrot.lane.b32.xlu0 %v2385, 64
    %v2388 = vpop.permute.xlu0 %2387
    %v2390 = vmul.f32 %v2373, %v2388
    %2392 = vrot.lane.b32.xlu0 %v2390, 32
    %v2393 = vpop.permute.xlu0 %2392
    %v2394 = vsel %vm270, %v2393, 0
    %2396 = vmatprep.subr.mxu0 0.0
    %2397 = vmatpush1.msra.mxu0 %v1874
    %2398 = vmatprep.subr.mxu0 0.0
    %2399 = vmatpush1.msra.mxu0 %v1875
    %2400 = vmatprep.subr.mxu0 0.0
    %2401 = vmatpush1.msra.mxu0 %v1876
    %2402 = vmatprep.subr.mxu0 0.0
    %2403 = vmatpush1.msra.mxu0 %v1877
    %2404 = vmatprep.subr.mxu0 0.0
    %2405 = vmatpush1.msra.mxu0 0.0
    %2406 = vmatprep.subr.mxu0 0.0
    %2407 = vmatpush1.msra.mxu0 0.0
    %2408 = vmatprep.subr.mxu0 0.0
    %2409 = vmatpush1.msra.mxu0 0.0
    %2410 = vmatprep.subr.mxu0 0.0
    %2411 = vmatpush1.msra.mxu0 0.0
    %2412 = vmatprep.subr.mxu0 0.0
    %2413 = vmatpush1.msra.mxu0 0.0
    %2414 = vmatprep.subr.mxu0 0.0
    %2415 = vmatpush1.msra.mxu0 0.0
    %2416 = vmatprep.subr.mxu0 0.0
    %2417 = vmatpush1.msra.mxu0 0.0
    %2418 = vmatprep.subr.mxu0 0.0
    %2419 = vmatpush1.msra.mxu0 0.0
    %2420 = vmatprep.subr.mxu0 0.0
    %2421 = vmatpush1.msra.mxu0 0.0
    %2422 = vmatprep.subr.mxu0 0.0
    %2423 = vmatpush1.msra.mxu0 0.0
    %2424 = vmatprep.subr.mxu0 0.0
    %2425 = vmatpush1.msra.mxu0 0.0
    %2426 = vmatprep.subr.mxu0 0.0
    %2427 = vmatpush1.msra.mxu0 0.0
    %2428 = vmatprep.subr.mxu0 0.0
    %2429 = vmatpush1.msra.mxu0 0.0
    %2430 = vmatprep.subr.mxu0 0.0
    %2431 = vmatpush1.msra.mxu0 0.0
    %2432 = vmatprep.subr.mxu0 0.0
    %2433 = vmatpush1.msra.mxu0 0.0
    %2434 = vmatprep.subr.mxu0 0.0
    %2435 = vmatpush1.msra.mxu0 0.0
    %2436 = vmatprep.subr.mxu0 0.0
    %2437 = vmatpush1.msra.mxu0 0.0
    %2438 = vmatprep.subr.mxu0 0.0
    %2439 = vmatpush1.msra.mxu0 0.0
    %2440 = vmatprep.subr.mxu0 0.0
    %2441 = vmatpush1.msra.mxu0 0.0
    %2442 = vmatprep.subr.mxu0 0.0
    %2443 = vmatpush1.msra.mxu0 0.0
    %2444 = vmatprep.subr.mxu0 0.0
    %2445 = vmatpush1.msra.mxu0 0.0
    %2446 = vmatprep.subr.mxu0 0.0
    %2447 = vmatpush1.msra.mxu0 0.0
    %2448 = vmatprep.subr.mxu0 0.0
    %2449 = vmatpush1.msra.mxu0 0.0
    %2450 = vmatprep.subr.mxu0 0.0
    %2451 = vmatpush1.msra.mxu0 0.0
    %2452 = vmatprep.subr.mxu0 0.0
    %2453 = vmatpush1.msra.mxu0 0.0
    %2454 = vmatprep.subr.mxu0 0.0
    %2455 = vmatpush1.msra.mxu0 0.0
    %2456 = vmatprep.subr.mxu0 0.0
    %2457 = vmatpush1.msra.mxu0 0.0
    %2458 = vmatprep.subr.mxu0 0.0
    %2459 = vmatpush1.msra.mxu0 0.0
    %2460 = vmatprep.mubr.f32.mxu0 0.0
    %2461 = vmatmul.mubr.f32.gmra.mrb[0].mxu0 %v2394
    %v2462 = vpop.f32.mrb[0].mxu0
    %v2463 = vadd.f32 0.0, %v2462
    %v2464 = vpop.f32.mrb[0].mxu0
    %2465 = vdwg.mxu0
    %v2466 = vld [vmem:[#allocation2 + $0x30] sm:$0xff]
    %v2467 = vadd.f32 %v2466, %v2463
    %v2468 = vmul.f32 %v2467, %v227
    %v2469 = vtanh.pop %v2468
    %v2470 = vmul.f32 %v2469, 0.5
    %v2471 = vadd.f32 %v2470, 0.5
    %v2472 = vmul.f32 %v2471, %v2384
    %2474 = vrot.lane.b32.xlu0 %v2469, 64
    %v2475 = vpop.permute.xlu0 %2474
    %v2477 = vmul.f32 %v2471, %v2475
    %2479 = vrot.lane.b32.xlu0 %v2477, 32
    %v2480 = vpop.permute.xlu0 %2479
    %v2482 = vadd.f32 %v2472, %v2480
    %v2483 = vtanh.pop %v2482
    %2485 = vrot.lane.b32.xlu0 %v2483, 64
    %v2486 = vpop.permute.xlu0 %2485
    %v2488 = vmul.f32 %v2471, %v2486
    %2490 = vrot.lane.b32.xlu0 %v2488, 32
    %v2491 = vpop.permute.xlu0 %2490
    %v2492 = vsel %vm270, %v2491, 0
    %2494 = vmatprep.subr.mxu0 0.0
    %2495 = vmatpush1.msra.mxu0 %v1874
    %2496 = vmatprep.subr.mxu0 0.0
    %2497 = vmatpush1.msra.mxu0 %v1875
    %2498 = vmatprep.subr.mxu0 0.0
    %2499 = vmatpush1.msra.mxu0 %v1876
    %2500 = vmatprep.subr.mxu0 0.0
    %2501 = vmatpush1.msra.mxu0 %v1877
    %2502 = vmatprep.subr.mxu0 0.0
    %2503 = vmatpush1.msra.mxu0 0.0
    %2504 = vmatprep.subr.mxu0 0.0
    %2505 = vmatpush1.msra.mxu0 0.0
    %2506 = vmatprep.subr.mxu0 0.0
    %2507 = vmatpush1.msra.mxu0 0.0
    %2508 = vmatprep.subr.mxu0 0.0
    %2509 = vmatpush1.msra.mxu0 0.0
    %2510 = vmatprep.subr.mxu0 0.0
    %2511 = vmatpush1.msra.mxu0 0.0
    %2512 = vmatprep.subr.mxu0 0.0
    %2513 = vmatpush1.msra.mxu0 0.0
    %2514 = vmatprep.subr.mxu0 0.0
    %2515 = vmatpush1.msra.mxu0 0.0
    %2516 = vmatprep.subr.mxu0 0.0
    %2517 = vmatpush1.msra.mxu0 0.0
    %2518 = vmatprep.subr.mxu0 0.0
    %2519 = vmatpush1.msra.mxu0 0.0
    %2520 = vmatprep.subr.mxu0 0.0
    %2521 = vmatpush1.msra.mxu0 0.0
    %2522 = vmatprep.subr.mxu0 0.0
    %2523 = vmatpush1.msra.mxu0 0.0
    %2524 = vmatprep.subr.mxu0 0.0
    %2525 = vmatpush1.msra.mxu0 0.0
    %2526 = vmatprep.subr.mxu0 0.0
    %2527 = vmatpush1.msra.mxu0 0.0
    %2528 = vmatprep.subr.mxu0 0.0
    %2529 = vmatpush1.msra.mxu0 0.0
    %2530 = vmatprep.subr.mxu0 0.0
    %2531 = vmatpush1.msra.mxu0 0.0
    %2532 = vmatprep.subr.mxu0 0.0
    %2533 = vmatpush1.msra.mxu0 0.0
    %2534 = vmatprep.subr.mxu0 0.0
    %2535 = vmatpush1.msra.mxu0 0.0
    %2536 = vmatprep.subr.mxu0 0.0
    %2537 = vmatpush1.msra.mxu0 0.0
    %2538 = vmatprep.subr.mxu0 0.0
    %2539 = vmatpush1.msra.mxu0 0.0
    %2540 = vmatprep.subr.mxu0 0.0
    %2541 = vmatpush1.msra.mxu0 0.0
    %2542 = vmatprep.subr.mxu0 0.0
    %2543 = vmatpush1.msra.mxu0 0.0
    %2544 = vmatprep.subr.mxu0 0.0
    %2545 = vmatpush1.msra.mxu0 0.0
    %2546 = vmatprep.subr.mxu0 0.0
    %2547 = vmatpush1.msra.mxu0 0.0
    %2548 = vmatprep.subr.mxu0 0.0
    %2549 = vmatpush1.msra.mxu0 0.0
    %2550 = vmatprep.subr.mxu0 0.0
    %2551 = vmatpush1.msra.mxu0 0.0
    %2552 = vmatprep.subr.mxu0 0.0
    %2553 = vmatpush1.msra.mxu0 0.0
    %2554 = vmatprep.subr.mxu0 0.0
    %2555 = vmatpush1.msra.mxu0 0.0
    %2556 = vmatprep.subr.mxu0 0.0
    %2557 = vmatpush1.msra.mxu0 0.0
    %2558 = vmatprep.mubr.f32.mxu0 0.0
    %2559 = vmatmul.mubr.f32.gmra.mrb[0].mxu0 %v2492
    %v2560 = vpop.f32.mrb[0].mxu0
    %v2561 = vadd.f32 0.0, %v2560
    %v2562 = vpop.f32.mrb[0].mxu0
    %2563 = vdwg.mxu0
    %v2564 = vld [vmem:[#allocation2 + $0x38] sm:$0xff]
    %v2565 = vadd.f32 %v2564, %v2561
    %v2566 = vmul.f32 %v2565, %v227
    %v2567 = vtanh.pop %v2566
    %v2568 = vmul.f32 %v2567, 0.5
    %v2569 = vadd.f32 %v2568, 0.5
    %v2570 = vmul.f32 %v2569, %v2482
    %2572 = vrot.lane.b32.xlu0 %v2567, 64
    %v2573 = vpop.permute.xlu0 %2572
    %v2575 = vmul.f32 %v2569, %v2573
    %2577 = vrot.lane.b32.xlu0 %v2575, 32
    %v2578 = vpop.permute.xlu0 %2577
    %v2580 = vadd.f32 %v2570, %v2578
    %v2581 = vtanh.pop %v2580
    %2583 = vrot.lane.b32.xlu0 %v2581, 64
    %v2584 = vpop.permute.xlu0 %2583
    %v2586 = vmul.f32 %v2569, %v2584
    %v2587 = vld [vmem:[%s8] sm:$0xff]
    %v2588 = vld [vmem:[%s8 + $0x8] sm:$0xff]
    %v2589 = vld [vmem:[%s8 + $0x10] sm:$0xff]
    %v2590 = vld [vmem:[%s8 + $0x18] sm:$0xff]
    %v2591 = vld [vmem:[%s9] sm:$0x1]
    %v2593 = vlaneseq
    %v2594 = vshrl.u32 %v2593, 7
    %v2595 = vsub.s32 0, %v2594
    %v2596 = vrot.slane %v2591, %v2595
    %2599 = vrot.lane.b32.xlu0 %v2586, 32
    %v2600 = vpop.permute.xlu0 %2599
    %v2601 = vsel %vm270, %v2600, 0
    %2603 = vmatprep.subr.mxu0 0.0
    %2604 = vmatpush1.msra.mxu0 %v2587
    %2605 = vmatprep.subr.mxu0 0.0
    %2606 = vmatpush1.msra.mxu0 %v2588
    %2607 = vmatprep.subr.mxu0 0.0
    %2608 = vmatpush1.msra.mxu0 %v2589
    %2609 = vmatprep.subr.mxu0 0.0
    %2610 = vmatpush1.msra.mxu0 %v2590
    %2611 = vmatprep.subr.mxu0 0.0
    %2612 = vmatpush1.msra.mxu0 0.0
    %2613 = vmatprep.subr.mxu0 0.0
    %2614 = vmatpush1.msra.mxu0 0.0
    %2615 = vmatprep.subr.mxu0 0.0
    %2616 = vmatpush1.msra.mxu0 0.0
    %2617 = vmatprep.subr.mxu0 0.0
    %2618 = vmatpush1.msra.mxu0 0.0
    %2619 = vmatprep.subr.mxu0 0.0
    %2620 = vmatpush1.msra.mxu0 0.0
    %2621 = vmatprep.subr.mxu0 0.0
    %2622 = vmatpush1.msra.mxu0 0.0
    %2623 = vmatprep.subr.mxu0 0.0
    %2624 = vmatpush1.msra.mxu0 0.0
    %2625 = vmatprep.subr.mxu0 0.0
    %2626 = vmatpush1.msra.mxu0 0.0
    %2627 = vmatprep.subr.mxu0 0.0
    %2628 = vmatpush1.msra.mxu0 0.0
    %2629 = vmatprep.subr.mxu0 0.0
    %2630 = vmatpush1.msra.mxu0 0.0
    %2631 = vmatprep.subr.mxu0 0.0
    %2632 = vmatpush1.msra.mxu0 0.0
    %2633 = vmatprep.subr.mxu0 0.0
    %2634 = vmatpush1.msra.mxu0 0.0
    %2635 = vmatprep.subr.mxu0 0.0
    %2636 = vmatpush1.msra.mxu0 0.0
    %2637 = vmatprep.subr.mxu0 0.0
    %2638 = vmatpush1.msra.mxu0 0.0
    %2639 = vmatprep.subr.mxu0 0.0
    %2640 = vmatpush1.msra.mxu0 0.0
    %2641 = vmatprep.subr.mxu0 0.0
    %2642 = vmatpush1.msra.mxu0 0.0
    %2643 = vmatprep.subr.mxu0 0.0
    %2644 = vmatpush1.msra.mxu0 0.0
    %2645 = vmatprep.subr.mxu0 0.0
    %2646 = vmatpush1.msra.mxu0 0.0
    %2647 = vmatprep.subr.mxu0 0.0
    %2648 = vmatpush1.msra.mxu0 0.0
    %2649 = vmatprep.subr.mxu0 0.0
    %2650 = vmatpush1.msra.mxu0 0.0
    %2651 = vmatprep.subr.mxu0 0.0
    %2652 = vmatpush1.msra.mxu0 0.0
    %2653 = vmatprep.subr.mxu0 0.0
    %2654 = vmatpush1.msra.mxu0 0.0
    %2655 = vmatprep.subr.mxu0 0.0
    %2656 = vmatpush1.msra.mxu0 0.0
    %2657 = vmatprep.subr.mxu0 0.0
    %2658 = vmatpush1.msra.mxu0 0.0
    %2659 = vmatprep.subr.mxu0 0.0
    %2660 = vmatpush1.msra.mxu0 0.0
    %2661 = vmatprep.subr.mxu0 0.0
    %2662 = vmatpush1.msra.mxu0 0.0
    %2663 = vmatprep.subr.mxu0 0.0
    %2664 = vmatpush1.msra.mxu0 0.0
    %2665 = vmatprep.subr.mxu0 0.0
    %2666 = vmatpush1.msra.mxu0 0.0
    %2667 = vmatprep.mubr.f32.mxu0 0.0
    %2668 = vmatmul.mubr.f32.gmra.mrb[0].mxu0 %v2601
    %v2669 = vpop.f32.mrb[0].mxu0
    %v2670 = vadd.f32 %v2596, %v2669
    %v2671 = vpop.f32.mrb[0].mxu0
    %2672 = vdwg.mxu0
    %vm2673 = vcmask 64512
    %2674 = vst.msk [vmem:[#allocation8] sm:$0xff] %vm2673, %v2670
    // Predicated region
    $region54: #{tpu_custom_call.1} parent=1 // pred_check
      _
    $region55: #{tpu_custom_call.1} parent=1 // pred_check_branch
      %2676 = sbr.rel (0) target = $region57
    $region56: #{tpu_custom_call.1} parent=1 // pred_region
      %s2678 = ssub.s32 128, 128
      %2679 = vsyncadd [#allocation5], %s2678
      %s2681 = sshll.u32 [#allocation8], 4
      %s2682 = int_to_ptr.vmem [resolvable:$true] %s2681
      %2684 = dma.vmem_to_hbm [thread:$0]  %s2682, 128, %s11, [#allocation5]
    $region57: #{tpu_custom_call.1} parent=1 // pred_fallthru
      _
    // Predicated region
    $region58: #{tpu_custom_call.1} parent=1 // pred_check
      _
    $region59: #{tpu_custom_call.1} parent=1 // pred_check_branch
      %2686 = sbr.rel (0) target = $region61
    $region60: #{tpu_custom_call.1} parent=1 // pred_region
      %2687 = dma.done [#allocation5], 128
    $region61: #{tpu_custom_call.1} parent=1 // pred_fallthru
      _
    %2688 = vsyncpa [#allocation4], 1
    %2689 = vsyncpa [#allocation7], 1
    %2690 = vsyncpa [#allocation5], 1

</llo_original>
